<compile_context>
chip_gen: v5e
topology: v5e:2x2
jax: 0.10.0
libtpu: 0.0.40
codegen_flags: <defaults>
</compile_context>

<pallas_src>
from functools import partial

import jax
import jax.numpy as jnp
from jax import lax
from jax.experimental import pallas as pl
from jax.experimental.pallas import tpu as pltpu

_GROUP = 8  # embedding-gather rows per sublane-dense store


def mutil_kernel(ids_ref, emb_ref, wih_ref, whh_ref, b_ref, fcw_ref, fcb_ref,
                 out_ref, x_buf, xp_buf, h_buf):
    bb, T = out_ref.shape                 # batch block, sequence length
    V, H = emb_ref.shape
    L = whh_ref.shape[0]
    O = fcw_ref.shape[1]
    n_rows = bb * T
    prog = pl.program_id(0)

    # ---- Embedding lookup: batched row gather from the VMEM table (ids in SMEM) ----
    # Assemble 8 gathered rows into one (8, H) block, then issue a single dense store.
    ids_base = prog * n_rows
    n_groups = n_rows // _GROUP
    sub_iota = lax.broadcasted_iota(jnp.int32, (_GROUP, H), 0)   # hoisted out of the loop

    def gather_group(g, carry):
        row0 = pl.multiple_of(g * _GROUP, _GROUP)
        blk = jnp.zeros((_GROUP, H), jnp.float32)
        for r in range(_GROUP):
            tok = ids_ref[ids_base + row0 + r]                   # scalar read from SMEM
            row = jnp.broadcast_to(emb_ref[pl.ds(tok, 1), :], (_GROUP, H))
            blk = jnp.where(sub_iota == r, row, blk)
        x_buf[pl.ds(row0, _GROUP), :] = blk                      # one sublane-dense store
        return carry

    lax.fori_loop(0, n_groups, gather_group, 0, unroll=min(n_groups, 4))

    # ---- num_layers x bidirectional LSTM ----
    for l in range(L):
        in_dim = H if l == 0 else 2 * H
        if l == 0:
            in2d = x_buf[...]                                    # (bb*T, H)  f32
        else:
            in2d = h_buf[...].reshape(n_rows, 2 * H)             # (bb*T, 2H) f32

        # Hoisted, direction-fused input projection + fused (b_ih + b_hh) bias:
        #   (bb*T, in_dim) @ (in_dim, 8H) -> (bb*T, 8H), once per layer.
        # Columns = [dir0: i,f,g,o | dir1: i,f,g,o].
        w_in = wih_ref[l, 0:in_dim, :]                           # (in_dim, 8H) bf16
        xp = jnp.dot(in2d.astype(jnp.bfloat16), w_in,
                     preferred_element_type=jnp.float32) + b_ref[l]
        xp_buf[...] = xp.reshape(bb, T, 8 * H)

        w_hh = whh_ref[l]                                        # (2H, 8H) bf16, block-diag

        def step(s, carry):
            h_f, c_f, h_r, c_r = carry
            t_f = s                                              # forward timestep
            t_r = T - 1 - s                                      # reverse timestep
            xp_f = xp_buf[:, pl.ds(t_f, 1), 0:4 * H].reshape(bb, 4 * H)
            xp_r = xp_buf[:, pl.ds(t_r, 1), 4 * H:8 * H].reshape(bb, 4 * H)
            xp_cat = jnp.concatenate([xp_f, xp_r], axis=-1)      # (bb, 8H)
            h_cat = jnp.concatenate([h_f, h_r], axis=-1)         # (bb, 2H)
            # One fused MXU push for both directions (block-diagonal recurrent weight).
            gates = xp_cat + jnp.dot(h_cat.astype(jnp.bfloat16), w_hh,
                                     preferred_element_type=jnp.float32)
            # Full-width activations: one sigmoid + one tanh over the whole gate block.
            sig = jax.nn.sigmoid(gates)
            th = jnp.tanh(gates)
            # PyTorch LSTM gate order per direction: i, f, g, o.
            i_f, f_f = sig[:, 0 * H:1 * H], sig[:, 1 * H:2 * H]
            g_f, o_f = th[:, 2 * H:3 * H], sig[:, 3 * H:4 * H]
            i_r, f_r = sig[:, 4 * H:5 * H], sig[:, 5 * H:6 * H]
            g_r, o_r = th[:, 6 * H:7 * H], sig[:, 7 * H:8 * H]
            c_f = f_f * c_f + i_f * g_f
            c_r = f_r * c_r + i_r * g_r
            tc = jnp.tanh(jnp.concatenate([c_f, c_r], axis=-1))  # one EUP push, both dirs
            h_f = o_f * tc[:, 0:H]
            h_r = o_r * tc[:, H:2 * H]
            h_buf[:, pl.ds(t_f, 1), 0:H] = h_f.reshape(bb, 1, H)
            h_buf[:, pl.ds(t_r, 1), H:2 * H] = h_r.reshape(bb, 1, H)
            return (h_f, c_f, h_r, c_r)

        z = jnp.zeros((bb, H), jnp.float32)
        lax.fori_loop(0, T, step, (z, z, z, z), unroll=min(T, 8))

    # ---- Final linear (fc) + argmax over tags ----
    feats = h_buf[...].reshape(n_rows, 2 * H)
    logits = jnp.dot(feats.astype(jnp.bfloat16), fcw_ref[...],
                     preferred_element_type=jnp.float32) + fcb_ref[...]      # (bb*T, O)
    max_val = jnp.max(logits, axis=-1, keepdims=True)
    idx = lax.broadcasted_iota(jnp.int32, logits.shape, 1)
    amax = jnp.min(jnp.where(logits == max_val, idx, O), axis=-1)            # first-max idx
    out_ref[...] = amax.reshape(bb, T).astype(jnp.int32)


@partial(jax.jit, static_argnames=("bb",))
def mutil_model_forward(ids, emb, wih, whh, b, fcw, fcb, bb=None):
    """biLstm / no-CRF / argmax forward of MutilModel.

    bb = batch rows per grid step. Default bb=B (single grid step; best on v5e/v6e which
    have one TensorCore). On v7x pass bb=B//2 so the two grid steps shard across the two
    TensorCores via the "parallel" grid axis.
    """
    B, T = ids.shape
    V, H = emb.shape
    if bb is None:
        bb = B
    assert B % bb == 0, "batch must divide into batch blocks"
    assert (bb * T) % _GROUP == 0, "bb*T must be a multiple of 8 for the batched gather"

    grid_spec = pltpu.PrefetchScalarGridSpec(
        num_scalar_prefetch=1,                    # flattened input_ids -> SMEM
        grid=(B // bb,),
        in_specs=[
            pl.BlockSpec(emb.shape, lambda i, ids_r: (0, 0)),          # full, resident
            pl.BlockSpec(wih.shape, lambda i, ids_r: (0, 0, 0)),
            pl.BlockSpec(whh.shape, lambda i, ids_r: (0, 0, 0)),
            pl.BlockSpec(b.shape,   lambda i, ids_r: (0, 0, 0)),
            pl.BlockSpec(fcw.shape, lambda i, ids_r: (0, 0)),
            pl.BlockSpec(fcb.shape, lambda i, ids_r: (0, 0)),
        ],
        out_specs=pl.BlockSpec((bb, T), lambda i, ids_r: (i, 0)),
        scratch_shapes=[
            pltpu.VMEM((bb * T, H), jnp.float32),        # embedded inputs
            pltpu.VMEM((bb, T, 8 * H), jnp.float32),     # direction-fused input projection
            pltpu.VMEM((bb, T, 2 * H), jnp.float32),     # per-layer bidirectional hiddens
        ],
    )
    return pl.pallas_call(
        mutil_kernel,
        out_shape=jax.ShapeDtypeStruct((B, T), jnp.int32),
        grid_spec=grid_spec,
        compiler_params=pltpu.CompilerParams(
            dimension_semantics=("parallel",),           # batch blocks -> 2 TCs on v7x
            vmem_limit_bytes=48 * 1024 * 1024,           # within v7x's 64 MiB physical VMEM
        ),
    )(ids.reshape(-1), emb, wih, whh, b, fcw, fcb)


def make_params(key, V, H, L, O, scale=0.1):
    """Deterministic synthetic parameters, shaped/fused for the kernel.

    Fused layouts (from PyTorch nn.LSTM weights):
      wih[l]    : (2H, 8H)  columns = [dir0: i,f,g,o | dir1: i,f,g,o], W_ih transposed;
                  layer 0 only reads the first H rows.
      whh[l]    : (2H, 8H)  block-diagonal: rows 0:H -> dir0 columns, rows H:2H -> dir1
                  columns, each block = W_hh.T (enables one fused recurrent matmul/step).
      b[l]      : (1, 8H)   b_ih + b_hh, directions concatenated.
      fcw / fcb : (2H, O) / (1, O).
    Matmul weights are stored in bf16 (f32 accumulation inside the kernel).
    """
    n_keys = L * 2 * 4 + 3
    keys = iter(jax.random.split(key, n_keys))
    nxt = lambda: next(keys)

    emb = jax.random.normal(nxt(), (V, H), jnp.float32) * scale          # nn.Embedding(V, H)

    wih = jnp.zeros((L, 2 * H, 8 * H), jnp.float32)
    whh = jnp.zeros((L, 2 * H, 8 * H), jnp.float32)
    b = jnp.zeros((L, 1, 8 * H), jnp.float32)
    for l in range(L):
        in_dim = H if l == 0 else 2 * H
        for d in range(2):
            w_ih = jax.random.normal(nxt(), (4 * H, in_dim), jnp.float32) * scale
            w_hh = jax.random.normal(nxt(), (4 * H, H), jnp.float32) * scale
            b_ih = jax.random.normal(nxt(), (4 * H,), jnp.float32) * scale
            b_hh = jax.random.normal(nxt(), (4 * H,), jnp.float32) * scale
            wih = wih.at[l, :in_dim, d * 4 * H:(d + 1) * 4 * H].set(w_ih.T)
            whh = whh.at[l, d * H:(d + 1) * H, d * 4 * H:(d + 1) * 4 * H].set(w_hh.T)
            b = b.at[l, 0, d * 4 * H:(d + 1) * 4 * H].set(b_ih + b_hh)

    fc_w = jax.random.normal(nxt(), (O, 2 * H), jnp.float32) * scale     # nn.Linear(2H, O)
    fc_b = jax.random.normal(nxt(), (O,), jnp.float32) * scale
    return dict(
        emb=emb,
        wih=wih.astype(jnp.bfloat16),
        whh=whh.astype(jnp.bfloat16),
        b=b,
        fcw=fc_w.T.astype(jnp.bfloat16),
        fcb=fc_b.reshape(1, O),
    )


if __name__ == "__main__":
    # config = {'model': 'biLstm', 'CRF': False, 'vocab_size': 50, 'input_size': 32,
    #           'hidden_size': 32, 'num_layers': 2, 'dropout_prob': 0.0,
    #           'output_size': 5, 'num_tags': 5}
    B, T = 2, 8
    V, H, L, O = 50, 32, 2, 5

    key = jax.random.PRNGKey(0)
    k_ids, k_params = jax.random.split(key)
    input_ids = jax.random.randint(k_ids, (B, T), 1, V, dtype=jnp.int32)
    p = make_params(k_params, V, H, L, O)

    pred = mutil_model_forward(input_ids, p["emb"], p["wih"], p["whh"],
                               p["b"], p["fcw"], p["fcb"])
    jax.block_until_ready(pred)
    assert pred.shape == (B, T) and pred.dtype == jnp.int32
    print("KERNEL_OK")
</pallas_src>

<mosaic_0001>
module attributes {stable_mosaic.version = 11 : i64} {
  func.func @mutil_kernel(%arg0: i32, %arg1: memref<16xi32, #tpu.memory_space<smem>>, %arg2: memref<50x32xf32, #tpu.memory_space<vmem>>, %arg3: memref<2x64x256xbf16, #tpu.memory_space<vmem>>, %arg4: memref<2x64x256xbf16, #tpu.memory_space<vmem>>, %arg5: memref<2x1x256xf32, #tpu.memory_space<vmem>>, %arg6: memref<64x5xbf16, #tpu.memory_space<vmem>>, %arg7: memref<1x5xf32, #tpu.memory_space<vmem>>, %arg8: memref<2x8xi32, #tpu.memory_space<vmem>>, %arg9: memref<16x32xf32, #tpu.memory_space<vmem>>, %arg10: memref<2x8x256xf32, #tpu.memory_space<vmem>>, %arg11: memref<2x8x64xf32, #tpu.memory_space<vmem>>) attributes {dimension_semantics = [#tpu.dimension_semantics<parallel>], iteration_bounds = array<i64: 1>, scalar_prefetch = 1 : i64, scratch_operands = 3 : i64, tpu.core_type = #tpu.core_type<tc>, window_params = [{pipeline_mode = #tpu.pipeline_mode<synchronous>, transform_indices = @transform_0, window_bounds = array<i64: 50, 32>}, {pipeline_mode = #tpu.pipeline_mode<synchronous>, transform_indices = @transform_1, window_bounds = array<i64: 2, 64, 256>}, {pipeline_mode = #tpu.pipeline_mode<synchronous>, transform_indices = @transform_2, window_bounds = array<i64: 2, 64, 256>}, {pipeline_mode = #tpu.pipeline_mode<synchronous>, transform_indices = @transform_3, window_bounds = array<i64: 2, 1, 256>}, {pipeline_mode = #tpu.pipeline_mode<synchronous>, transform_indices = @transform_4, window_bounds = array<i64: 64, 5>}, {pipeline_mode = #tpu.pipeline_mode<synchronous>, transform_indices = @transform_5, window_bounds = array<i64: 1, 5>}, {transform_indices = @transform_6, window_bounds = array<i64: 2, 8>}]} {
    %c16_i32 = arith.constant 16 : i32
    %0 = arith.muli %arg0, %c16_i32 : i32
    %1 = tpu.iota {dimensions = array<i32: 0>} : vector<8x32xi32>
    %c0_i32 = arith.constant 0 : i32
    %c8_i32 = arith.constant 8 : i32
    %2 = arith.muli %c0_i32, %c8_i32 : i32
    %3 = tpu.assume_multiple %2, 8 : i32
    %cst = arith.constant 0.000000e+00 : f32
    %4 = vector.broadcast %cst : f32 to vector<8x32xf32>
    %5 = arith.addi %0, %3 : i32
    %c0_i32_0 = arith.constant 0 : i32
    %6 = arith.addi %5, %c0_i32_0 : i32
    %7 = arith.index_cast %6 : i32 to index
    %8 = memref.load %arg1[%7] : memref<16xi32, #tpu.memory_space<smem>>
    %9 = arith.index_cast %8 : i32 to index
    %c0 = arith.constant 0 : index
    %10 = vector.load %arg2[%9, %c0] : memref<50x32xf32, #tpu.memory_space<vmem>>, vector<1x32xf32>
    %11 = vector.shape_cast %10 : vector<1x32xf32> to vector<1x32xf32>
    %12 = vector.broadcast %11 : vector<1x32xf32> to vector<8x32xf32>
    %c0_i32_1 = arith.constant 0 : i32
    %13 = vector.broadcast %c0_i32_1 : i32 to vector<8x32xi32>
    %14 = arith.cmpi eq, %1, %13 : vector<8x32xi32>
    %15 = arith.select %14, %12, %4 : vector<8x32xi1>, vector<8x32xf32>
    %16 = arith.addi %0, %3 : i32
    %c1_i32 = arith.constant 1 : i32
    %17 = arith.addi %16, %c1_i32 : i32
    %18 = arith.index_cast %17 : i32 to index
    %19 = memref.load %arg1[%18] : memref<16xi32, #tpu.memory_space<smem>>
    %20 = arith.index_cast %19 : i32 to index
    %c0_2 = arith.constant 0 : index
    %21 = vector.load %arg2[%20, %c0_2] : memref<50x32xf32, #tpu.memory_space<vmem>>, vector<1x32xf32>
    %22 = vector.shape_cast %21 : vector<1x32xf32> to vector<1x32xf32>
    %23 = vector.broadcast %22 : vector<1x32xf32> to vector<8x32xf32>
    %c1_i32_3 = arith.constant 1 : i32
    %24 = vector.broadcast %c1_i32_3 : i32 to vector<8x32xi32>
    %25 = arith.cmpi eq, %1, %24 : vector<8x32xi32>
    %26 = arith.select %25, %23, %15 : vector<8x32xi1>, vector<8x32xf32>
    %27 = arith.addi %0, %3 : i32
    %c2_i32 = arith.constant 2 : i32
    %28 = arith.addi %27, %c2_i32 : i32
    %29 = arith.index_cast %28 : i32 to index
    %30 = memref.load %arg1[%29] : memref<16xi32, #tpu.memory_space<smem>>
    %31 = arith.index_cast %30 : i32 to index
    %c0_4 = arith.constant 0 : index
    %32 = vector.load %arg2[%31, %c0_4] : memref<50x32xf32, #tpu.memory_space<vmem>>, vector<1x32xf32>
    %33 = vector.shape_cast %32 : vector<1x32xf32> to vector<1x32xf32>
    %34 = vector.broadcast %33 : vector<1x32xf32> to vector<8x32xf32>
    %c2_i32_5 = arith.constant 2 : i32
    %35 = vector.broadcast %c2_i32_5 : i32 to vector<8x32xi32>
    %36 = arith.cmpi eq, %1, %35 : vector<8x32xi32>
    %37 = arith.select %36, %34, %26 : vector<8x32xi1>, vector<8x32xf32>
    %38 = arith.addi %0, %3 : i32
    %c3_i32 = arith.constant 3 : i32
    %39 = arith.addi %38, %c3_i32 : i32
    %40 = arith.index_cast %39 : i32 to index
    %41 = memref.load %arg1[%40] : memref<16xi32, #tpu.memory_space<smem>>
    %42 = arith.index_cast %41 : i32 to index
    %c0_6 = arith.constant 0 : index
    %43 = vector.load %arg2[%42, %c0_6] : memref<50x32xf32, #tpu.memory_space<vmem>>, vector<1x32xf32>
    %44 = vector.shape_cast %43 : vector<1x32xf32> to vector<1x32xf32>
    %45 = vector.broadcast %44 : vector<1x32xf32> to vector<8x32xf32>
    %c3_i32_7 = arith.constant 3 : i32
    %46 = vector.broadcast %c3_i32_7 : i32 to vector<8x32xi32>
    %47 = arith.cmpi eq, %1, %46 : vector<8x32xi32>
    %48 = arith.select %47, %45, %37 : vector<8x32xi1>, vector<8x32xf32>
    %49 = arith.addi %0, %3 : i32
    %c4_i32 = arith.constant 4 : i32
    %50 = arith.addi %49, %c4_i32 : i32
    %51 = arith.index_cast %50 : i32 to index
    %52 = memref.load %arg1[%51] : memref<16xi32, #tpu.memory_space<smem>>
    %53 = arith.index_cast %52 : i32 to index
    %c0_8 = arith.constant 0 : index
    %54 = vector.load %arg2[%53, %c0_8] : memref<50x32xf32, #tpu.memory_space<vmem>>, vector<1x32xf32>
    %55 = vector.shape_cast %54 : vector<1x32xf32> to vector<1x32xf32>
    %56 = vector.broadcast %55 : vector<1x32xf32> to vector<8x32xf32>
    %c4_i32_9 = arith.constant 4 : i32
    %57 = vector.broadcast %c4_i32_9 : i32 to vector<8x32xi32>
    %58 = arith.cmpi eq, %1, %57 : vector<8x32xi32>
    %59 = arith.select %58, %56, %48 : vector<8x32xi1>, vector<8x32xf32>
    %60 = arith.addi %0, %3 : i32
    %c5_i32 = arith.constant 5 : i32
    %61 = arith.addi %60, %c5_i32 : i32
    %62 = arith.index_cast %61 : i32 to index
    %63 = memref.load %arg1[%62] : memref<16xi32, #tpu.memory_space<smem>>
    %64 = arith.index_cast %63 : i32 to index
    %c0_10 = arith.constant 0 : index
    %65 = vector.load %arg2[%64, %c0_10] : memref<50x32xf32, #tpu.memory_space<vmem>>, vector<1x32xf32>
    %66 = vector.shape_cast %65 : vector<1x32xf32> to vector<1x32xf32>
    %67 = vector.broadcast %66 : vector<1x32xf32> to vector<8x32xf32>
    %c5_i32_11 = arith.constant 5 : i32
    %68 = vector.broadcast %c5_i32_11 : i32 to vector<8x32xi32>
    %69 = arith.cmpi eq, %1, %68 : vector<8x32xi32>
    %70 = arith.select %69, %67, %59 : vector<8x32xi1>, vector<8x32xf32>
    %71 = arith.addi %0, %3 : i32
    %c6_i32 = arith.constant 6 : i32
    %72 = arith.addi %71, %c6_i32 : i32
    %73 = arith.index_cast %72 : i32 to index
    %74 = memref.load %arg1[%73] : memref<16xi32, #tpu.memory_space<smem>>
    %75 = arith.index_cast %74 : i32 to index
    %c0_12 = arith.constant 0 : index
    %76 = vector.load %arg2[%75, %c0_12] : memref<50x32xf32, #tpu.memory_space<vmem>>, vector<1x32xf32>
    %77 = vector.shape_cast %76 : vector<1x32xf32> to vector<1x32xf32>
    %78 = vector.broadcast %77 : vector<1x32xf32> to vector<8x32xf32>
    %c6_i32_13 = arith.constant 6 : i32
    %79 = vector.broadcast %c6_i32_13 : i32 to vector<8x32xi32>
    %80 = arith.cmpi eq, %1, %79 : vector<8x32xi32>
    %81 = arith.select %80, %78, %70 : vector<8x32xi1>, vector<8x32xf32>
    %82 = arith.addi %0, %3 : i32
    %c7_i32 = arith.constant 7 : i32
    %83 = arith.addi %82, %c7_i32 : i32
    %84 = arith.index_cast %83 : i32 to index
    %85 = memref.load %arg1[%84] : memref<16xi32, #tpu.memory_space<smem>>
    %86 = arith.index_cast %85 : i32 to index
    %c0_14 = arith.constant 0 : index
    %87 = vector.load %arg2[%86, %c0_14] : memref<50x32xf32, #tpu.memory_space<vmem>>, vector<1x32xf32>
    %88 = vector.shape_cast %87 : vector<1x32xf32> to vector<1x32xf32>
    %89 = vector.broadcast %88 : vector<1x32xf32> to vector<8x32xf32>
    %c7_i32_15 = arith.constant 7 : i32
    %90 = vector.broadcast %c7_i32_15 : i32 to vector<8x32xi32>
    %91 = arith.cmpi eq, %1, %90 : vector<8x32xi32>
    %92 = arith.select %91, %89, %81 : vector<8x32xi1>, vector<8x32xf32>
    %93 = arith.index_cast %3 : i32 to index
    %c0_16 = arith.constant 0 : index
    %94 = vector.load %arg9[%93, %c0_16] : memref<16x32xf32, #tpu.memory_space<vmem>>, vector<8x32xf32>
    tpu.vector_store %arg9[%93, %c0_16], %92 {strides = array<i32>} : memref<16x32xf32, #tpu.memory_space<vmem>>, vector<8x32xf32>,
    %c1_i32_17 = arith.constant 1 : i32
    %c8_i32_18 = arith.constant 8 : i32
    %95 = arith.muli %c1_i32_17, %c8_i32_18 : i32
    %96 = tpu.assume_multiple %95, 8 : i32
    %cst_19 = arith.constant 0.000000e+00 : f32
    %97 = vector.broadcast %cst_19 : f32 to vector<8x32xf32>
    %98 = arith.addi %0, %96 : i32
    %c0_i32_20 = arith.constant 0 : i32
    %99 = arith.addi %98, %c0_i32_20 : i32
    %100 = arith.index_cast %99 : i32 to index
    %101 = memref.load %arg1[%100] : memref<16xi32, #tpu.memory_space<smem>>
    %102 = arith.index_cast %101 : i32 to index
    %c0_21 = arith.constant 0 : index
    %103 = vector.load %arg2[%102, %c0_21] : memref<50x32xf32, #tpu.memory_space<vmem>>, vector<1x32xf32>
    %104 = vector.shape_cast %103 : vector<1x32xf32> to vector<1x32xf32>
    %105 = vector.broadcast %104 : vector<1x32xf32> to vector<8x32xf32>
    %c0_i32_22 = arith.constant 0 : i32
    %106 = vector.broadcast %c0_i32_22 : i32 to vector<8x32xi32>
    %107 = arith.cmpi eq, %1, %106 : vector<8x32xi32>
    %108 = arith.select %107, %105, %97 : vector<8x32xi1>, vector<8x32xf32>
    %109 = arith.addi %0, %96 : i32
    %c1_i32_23 = arith.constant 1 : i32
    %110 = arith.addi %109, %c1_i32_23 : i32
    %111 = arith.index_cast %110 : i32 to index
    %112 = memref.load %arg1[%111] : memref<16xi32, #tpu.memory_space<smem>>
    %113 = arith.index_cast %112 : i32 to index
    %c0_24 = arith.constant 0 : index
    %114 = vector.load %arg2[%113, %c0_24] : memref<50x32xf32, #tpu.memory_space<vmem>>, vector<1x32xf32>
    %115 = vector.shape_cast %114 : vector<1x32xf32> to vector<1x32xf32>
    %116 = vector.broadcast %115 : vector<1x32xf32> to vector<8x32xf32>
    %c1_i32_25 = arith.constant 1 : i32
    %117 = vector.broadcast %c1_i32_25 : i32 to vector<8x32xi32>
    %118 = arith.cmpi eq, %1, %117 : vector<8x32xi32>
    %119 = arith.select %118, %116, %108 : vector<8x32xi1>, vector<8x32xf32>
    %120 = arith.addi %0, %96 : i32
    %c2_i32_26 = arith.constant 2 : i32
    %121 = arith.addi %120, %c2_i32_26 : i32
    %122 = arith.index_cast %121 : i32 to index
    %123 = memref.load %arg1[%122] : memref<16xi32, #tpu.memory_space<smem>>
    %124 = arith.index_cast %123 : i32 to index
    %c0_27 = arith.constant 0 : index
    %125 = vector.load %arg2[%124, %c0_27] : memref<50x32xf32, #tpu.memory_space<vmem>>, vector<1x32xf32>
    %126 = vector.shape_cast %125 : vector<1x32xf32> to vector<1x32xf32>
    %127 = vector.broadcast %126 : vector<1x32xf32> to vector<8x32xf32>
    %c2_i32_28 = arith.constant 2 : i32
    %128 = vector.broadcast %c2_i32_28 : i32 to vector<8x32xi32>
    %129 = arith.cmpi eq, %1, %128 : vector<8x32xi32>
    %130 = arith.select %129, %127, %119 : vector<8x32xi1>, vector<8x32xf32>
    %131 = arith.addi %0, %96 : i32
    %c3_i32_29 = arith.constant 3 : i32
    %132 = arith.addi %131, %c3_i32_29 : i32
    %133 = arith.index_cast %132 : i32 to index
    %134 = memref.load %arg1[%133] : memref<16xi32, #tpu.memory_space<smem>>
    %135 = arith.index_cast %134 : i32 to index
    %c0_30 = arith.constant 0 : index
    %136 = vector.load %arg2[%135, %c0_30] : memref<50x32xf32, #tpu.memory_space<vmem>>, vector<1x32xf32>
    %137 = vector.shape_cast %136 : vector<1x32xf32> to vector<1x32xf32>
    %138 = vector.broadcast %137 : vector<1x32xf32> to vector<8x32xf32>
    %c3_i32_31 = arith.constant 3 : i32
    %139 = vector.broadcast %c3_i32_31 : i32 to vector<8x32xi32>
    %140 = arith.cmpi eq, %1, %139 : vector<8x32xi32>
    %141 = arith.select %140, %138, %130 : vector<8x32xi1>, vector<8x32xf32>
    %142 = arith.addi %0, %96 : i32
    %c4_i32_32 = arith.constant 4 : i32
    %143 = arith.addi %142, %c4_i32_32 : i32
    %144 = arith.index_cast %143 : i32 to index
    %145 = memref.load %arg1[%144] : memref<16xi32, #tpu.memory_space<smem>>
    %146 = arith.index_cast %145 : i32 to index
    %c0_33 = arith.constant 0 : index
    %147 = vector.load %arg2[%146, %c0_33] : memref<50x32xf32, #tpu.memory_space<vmem>>, vector<1x32xf32>
    %148 = vector.shape_cast %147 : vector<1x32xf32> to vector<1x32xf32>
    %149 = vector.broadcast %148 : vector<1x32xf32> to vector<8x32xf32>
    %c4_i32_34 = arith.constant 4 : i32
    %150 = vector.broadcast %c4_i32_34 : i32 to vector<8x32xi32>
    %151 = arith.cmpi eq, %1, %150 : vector<8x32xi32>
    %152 = arith.select %151, %149, %141 : vector<8x32xi1>, vector<8x32xf32>
    %153 = arith.addi %0, %96 : i32
    %c5_i32_35 = arith.constant 5 : i32
    %154 = arith.addi %153, %c5_i32_35 : i32
    %155 = arith.index_cast %154 : i32 to index
    %156 = memref.load %arg1[%155] : memref<16xi32, #tpu.memory_space<smem>>
    %157 = arith.index_cast %156 : i32 to index
    %c0_36 = arith.constant 0 : index
    %158 = vector.load %arg2[%157, %c0_36] : memref<50x32xf32, #tpu.memory_space<vmem>>, vector<1x32xf32>
    %159 = vector.shape_cast %158 : vector<1x32xf32> to vector<1x32xf32>
    %160 = vector.broadcast %159 : vector<1x32xf32> to vector<8x32xf32>
    %c5_i32_37 = arith.constant 5 : i32
    %161 = vector.broadcast %c5_i32_37 : i32 to vector<8x32xi32>
    %162 = arith.cmpi eq, %1, %161 : vector<8x32xi32>
    %163 = arith.select %162, %160, %152 : vector<8x32xi1>, vector<8x32xf32>
    %164 = arith.addi %0, %96 : i32
    %c6_i32_38 = arith.constant 6 : i32
    %165 = arith.addi %164, %c6_i32_38 : i32
    %166 = arith.index_cast %165 : i32 to index
    %167 = memref.load %arg1[%166] : memref<16xi32, #tpu.memory_space<smem>>
    %168 = arith.index_cast %167 : i32 to index
    %c0_39 = arith.constant 0 : index
    %169 = vector.load %arg2[%168, %c0_39] : memref<50x32xf32, #tpu.memory_space<vmem>>, vector<1x32xf32>
    %170 = vector.shape_cast %169 : vector<1x32xf32> to vector<1x32xf32>
    %171 = vector.broadcast %170 : vector<1x32xf32> to vector<8x32xf32>
    %c6_i32_40 = arith.constant 6 : i32
    %172 = vector.broadcast %c6_i32_40 : i32 to vector<8x32xi32>
    %173 = arith.cmpi eq, %1, %172 : vector<8x32xi32>
    %174 = arith.select %173, %171, %163 : vector<8x32xi1>, vector<8x32xf32>
    %175 = arith.addi %0, %96 : i32
    %c7_i32_41 = arith.constant 7 : i32
    %176 = arith.addi %175, %c7_i32_41 : i32
    %177 = arith.index_cast %176 : i32 to index
    %178 = memref.load %arg1[%177] : memref<16xi32, #tpu.memory_space<smem>>
    %179 = arith.index_cast %178 : i32 to index
    %c0_42 = arith.constant 0 : index
    %180 = vector.load %arg2[%179, %c0_42] : memref<50x32xf32, #tpu.memory_space<vmem>>, vector<1x32xf32>
    %181 = vector.shape_cast %180 : vector<1x32xf32> to vector<1x32xf32>
    %182 = vector.broadcast %181 : vector<1x32xf32> to vector<8x32xf32>
    %c7_i32_43 = arith.constant 7 : i32
    %183 = vector.broadcast %c7_i32_43 : i32 to vector<8x32xi32>
    %184 = arith.cmpi eq, %1, %183 : vector<8x32xi32>
    %185 = arith.select %184, %182, %174 : vector<8x32xi1>, vector<8x32xf32>
    %186 = arith.index_cast %96 : i32 to index
    %c0_44 = arith.constant 0 : index
    %187 = vector.load %arg9[%186, %c0_44] : memref<16x32xf32, #tpu.memory_space<vmem>>, vector<8x32xf32>
    tpu.vector_store %arg9[%186, %c0_44], %185 {strides = array<i32>} : memref<16x32xf32, #tpu.memory_space<vmem>>, vector<8x32xf32>,
    %c2_i32_45 = arith.constant 2 : i32
    %c0_46 = arith.constant 0 : index
    %c0_47 = arith.constant 0 : index
    %188 = vector.load %arg9[%c0_46, %c0_47] : memref<16x32xf32, #tpu.memory_space<vmem>>, vector<16x32xf32>
    %c0_48 = arith.constant 0 : index
    %c0_49 = arith.constant 0 : index
    %c0_50 = arith.constant 0 : index
    %189 = vector.load %arg3[%c0_48, %c0_49, %c0_50] : memref<2x64x256xbf16, #tpu.memory_space<vmem>>, vector<1x32x256xbf16>
    %190 = vector.shape_cast %189 : vector<1x32x256xbf16> to vector<32x256xbf16>
    %191 = arith.truncf %188 : vector<16x32xf32> to vector<16x32xbf16>
    %cst_51 = arith.constant dense<0.000000e+00> : vector<16x256xf32>
    %192 = tpu.matmul %191, %190, %cst_51 {dimension_numbers = #tpu.dot_dimension_numbers<[1], [0], [0], [1], [0, 0, 1, 1], [], []>} : vector<16x32xbf16>, vector<32x256xbf16>, vector<16x256xf32> -> vector<16x256xf32>
    %c0_52 = arith.constant 0 : index
    %c0_53 = arith.constant 0 : index
    %c0_54 = arith.constant 0 : index
    %193 = vector.load %arg5[%c0_52, %c0_53, %c0_54] : memref<2x1x256xf32, #tpu.memory_space<vmem>>, vector<1x1x256xf32>
    %194 = vector.shape_cast %193 : vector<1x1x256xf32> to vector<1x256xf32>
    %195 = vector.broadcast %194 : vector<1x256xf32> to vector<16x256xf32>
    %196 = arith.addf %192, %195 : vector<16x256xf32>
    %197 = vector.shape_cast %196 : vector<16x256xf32> to vector<2x8x256xf32>
    %c0_55 = arith.constant 0 : index
    %c0_56 = arith.constant 0 : index
    %c0_57 = arith.constant 0 : index
    %198 = vector.load %arg10[%c0_55, %c0_56, %c0_57] : memref<2x8x256xf32, #tpu.memory_space<vmem>>, vector<2x8x256xf32>
    tpu.vector_store %arg10[%c0_55, %c0_56, %c0_57], %197 {strides = array<i32>} : memref<2x8x256xf32, #tpu.memory_space<vmem>>, vector<2x8x256xf32>,
    %c0_58 = arith.constant 0 : index
    %c0_59 = arith.constant 0 : index
    %c0_60 = arith.constant 0 : index
    %199 = vector.load %arg4[%c0_58, %c0_59, %c0_60] : memref<2x64x256xbf16, #tpu.memory_space<vmem>>, vector<1x64x256xbf16>
    %200 = vector.shape_cast %199 : vector<1x64x256xbf16> to vector<64x256xbf16>
    %cst_61 = arith.constant 0.000000e+00 : f32
    %201 = vector.broadcast %cst_61 : f32 to vector<2x32xf32>
    %c0_i32_62 = arith.constant 0 : i32
    %c7_i32_63 = arith.constant 7 : i32
    %202 = arith.subi %c7_i32_63, %c0_i32_62 : i32
    %c0_64 = arith.constant 0 : index
    %203 = arith.index_cast %c0_i32_62 : i32 to index
    %c0_65 = arith.constant 0 : index
    %204 = vector.load %arg10[%c0_64, %203, %c0_65] : memref<2x8x256xf32, #tpu.memory_space<vmem>>, vector<2x1x128xf32>
    %205 = vector.shape_cast %204 : vector<2x1x128xf32> to vector<2x128xf32>
    %c0_66 = arith.constant 0 : index
    %206 = arith.index_cast %202 : i32 to index
    %c128 = arith.constant 128 : index
    %207 = vector.load %arg10[%c0_66, %206, %c128] : memref<2x8x256xf32, #tpu.memory_space<vmem>>, vector<2x1x128xf32>
    %208 = vector.shape_cast %207 : vector<2x1x128xf32> to vector<2x128xf32>
    %209 = tpu.concatenate %205, %208 in 1 : vector<2x128xf32>, vector<2x128xf32> -> vector<2x256xf32>
    %210 = tpu.concatenate %201, %201 in 1 : vector<2x32xf32>, vector<2x32xf32> -> vector<2x64xf32>
    %211 = arith.truncf %210 : vector<2x64xf32> to vector<2x64xbf16>
    %cst_67 = arith.constant dense<0.000000e+00> : vector<2x256xf32>
    %212 = tpu.matmul %211, %200, %cst_67 {dimension_numbers = #tpu.dot_dimension_numbers<[1], [0], [0], [1], [0, 0, 1, 1], [], []>} : vector<2x64xbf16>, vector<64x256xbf16>, vector<2x256xf32> -> vector<2x256xf32>
    %213 = arith.addf %209, %212 : vector<2x256xf32>
    %214 = arith.negf %213 : vector<2x256xf32>
    %215 = math.exp %214 : vector<2x256xf32>
    %cst_68 = arith.constant 1.000000e+00 : f32
    %216 = vector.broadcast %cst_68 : f32 to vector<2x256xf32>
    %217 = arith.addf %216, %215 : vector<2x256xf32>
    %218 = arith.divf %216, %217 : vector<2x256xf32>
    %219 = math.tanh %213 : vector<2x256xf32>
    %220 = vector.extract_strided_slice %218 {offsets = [0, 0], sizes = [2, 32], strides = [1, 1]} : vector<2x256xf32> to vector<2x32xf32>
    %221 = vector.extract_strided_slice %218 {offsets = [0, 32], sizes = [2, 32], strides = [1, 1]} : vector<2x256xf32> to vector<2x32xf32>
    %222 = vector.extract_strided_slice %219 {offsets = [0, 64], sizes = [2, 32], strides = [1, 1]} : vector<2x256xf32> to vector<2x32xf32>
    %223 = vector.extract_strided_slice %218 {offsets = [0, 96], sizes = [2, 32], strides = [1, 1]} : vector<2x256xf32> to vector<2x32xf32>
    %224 = vector.extract_strided_slice %218 {offsets = [0, 128], sizes = [2, 32], strides = [1, 1]} : vector<2x256xf32> to vector<2x32xf32>
    %225 = vector.extract_strided_slice %218 {offsets = [0, 160], sizes = [2, 32], strides = [1, 1]} : vector<2x256xf32> to vector<2x32xf32>
    %226 = vector.extract_strided_slice %219 {offsets = [0, 192], sizes = [2, 32], strides = [1, 1]} : vector<2x256xf32> to vector<2x32xf32>
    %227 = vector.extract_strided_slice %218 {offsets = [0, 224], sizes = [2, 32], strides = [1, 1]} : vector<2x256xf32> to vector<2x32xf32>
    %228 = arith.mulf %221, %201 : vector<2x32xf32>
    %229 = arith.mulf %220, %222 : vector<2x32xf32>
    %230 = arith.addf %228, %229 : vector<2x32xf32>
    %231 = arith.mulf %225, %201 : vector<2x32xf32>
    %232 = arith.mulf %224, %226 : vector<2x32xf32>
    %233 = arith.addf %231, %232 : vector<2x32xf32>
    %234 = tpu.concatenate %230, %233 in 1 : vector<2x32xf32>, vector<2x32xf32> -> vector<2x64xf32>
    %235 = math.tanh %234 : vector<2x64xf32>
    %236 = vector.extract_strided_slice %235 {offsets = [0, 0], sizes = [2, 32], strides = [1, 1]} : vector<2x64xf32> to vector<2x32xf32>
    %237 = arith.mulf %223, %236 : vector<2x32xf32>
    %238 = vector.extract_strided_slice %235 {offsets = [0, 32], sizes = [2, 32], strides = [1, 1]} : vector<2x64xf32> to vector<2x32xf32>
    %239 = arith.mulf %227, %238 : vector<2x32xf32>
    %240 = vector.shape_cast %237 : vector<2x32xf32> to vector<2x1x32xf32>
    %c0_69 = arith.constant 0 : index
    %241 = arith.index_cast %c0_i32_62 : i32 to index
    %c0_70 = arith.constant 0 : index
    %242 = vector.load %arg11[%c0_69, %241, %c0_70] : memref<2x8x64xf32, #tpu.memory_space<vmem>>, vector<2x1x32xf32>
    tpu.vector_store %arg11[%c0_69, %241, %c0_70], %240 {strides = array<i32>} : memref<2x8x64xf32, #tpu.memory_space<vmem>>, vector<2x1x32xf32>,
    %243 = vector.shape_cast %239 : vector<2x32xf32> to vector<2x1x32xf32>
    %c0_71 = arith.constant 0 : index
    %244 = arith.index_cast %202 : i32 to index
    %c32 = arith.constant 32 : index
    %245 = vector.load %arg11[%c0_71, %244, %c32] : memref<2x8x64xf32, #tpu.memory_space<vmem>>, vector<2x1x32xf32>
    tpu.vector_store %arg11[%c0_71, %244, %c32], %243 {strides = array<i32>} : memref<2x8x64xf32, #tpu.memory_space<vmem>>, vector<2x1x32xf32>,
    %c1_i32_72 = arith.constant 1 : i32
    %c7_i32_73 = arith.constant 7 : i32
    %246 = arith.subi %c7_i32_73, %c1_i32_72 : i32
    %c0_74 = arith.constant 0 : index
    %247 = arith.index_cast %c1_i32_72 : i32 to index
    %c0_75 = arith.constant 0 : index
    %248 = vector.load %arg10[%c0_74, %247, %c0_75] : memref<2x8x256xf32, #tpu.memory_space<vmem>>, vector<2x1x128xf32>
    %249 = vector.shape_cast %248 : vector<2x1x128xf32> to vector<2x128xf32>
    %c0_76 = arith.constant 0 : index
    %250 = arith.index_cast %246 : i32 to index
    %c128_77 = arith.constant 128 : index
    %251 = vector.load %arg10[%c0_76, %250, %c128_77] : memref<2x8x256xf32, #tpu.memory_space<vmem>>, vector<2x1x128xf32>
    %252 = vector.shape_cast %251 : vector<2x1x128xf32> to vector<2x128xf32>
    %253 = tpu.concatenate %249, %252 in 1 : vector<2x128xf32>, vector<2x128xf32> -> vector<2x256xf32>
    %254 = tpu.concatenate %237, %239 in 1 : vector<2x32xf32>, vector<2x32xf32> -> vector<2x64xf32>
    %255 = arith.truncf %254 : vector<2x64xf32> to vector<2x64xbf16>
    %cst_78 = arith.constant dense<0.000000e+00> : vector<2x256xf32>
    %256 = tpu.matmul %255, %200, %cst_78 {dimension_numbers = #tpu.dot_dimension_numbers<[1], [0], [0], [1], [0, 0, 1, 1], [], []>} : vector<2x64xbf16>, vector<64x256xbf16>, vector<2x256xf32> -> vector<2x256xf32>
    %257 = arith.addf %253, %256 : vector<2x256xf32>
    %258 = arith.negf %257 : vector<2x256xf32>
    %259 = math.exp %258 : vector<2x256xf32>
    %cst_79 = arith.constant 1.000000e+00 : f32
    %260 = vector.broadcast %cst_79 : f32 to vector<2x256xf32>
    %261 = arith.addf %260, %259 : vector<2x256xf32>
    %262 = arith.divf %260, %261 : vector<2x256xf32>
    %263 = math.tanh %257 : vector<2x256xf32>
    %264 = vector.extract_strided_slice %262 {offsets = [0, 0], sizes = [2, 32], strides = [1, 1]} : vector<2x256xf32> to vector<2x32xf32>
    %265 = vector.extract_strided_slice %262 {offsets = [0, 32], sizes = [2, 32], strides = [1, 1]} : vector<2x256xf32> to vector<2x32xf32>
    %266 = vector.extract_strided_slice %263 {offsets = [0, 64], sizes = [2, 32], strides = [1, 1]} : vector<2x256xf32> to vector<2x32xf32>
    %267 = vector.extract_strided_slice %262 {offsets = [0, 96], sizes = [2, 32], strides = [1, 1]} : vector<2x256xf32> to vector<2x32xf32>
    %268 = vector.extract_strided_slice %262 {offsets = [0, 128], sizes = [2, 32], strides = [1, 1]} : vector<2x256xf32> to vector<2x32xf32>
    %269 = vector.extract_strided_slice %262 {offsets = [0, 160], sizes = [2, 32], strides = [1, 1]} : vector<2x256xf32> to vector<2x32xf32>
    %270 = vector.extract_strided_slice %263 {offsets = [0, 192], sizes = [2, 32], strides = [1, 1]} : vector<2x256xf32> to vector<2x32xf32>
    %271 = vector.extract_strided_slice %262 {offsets = [0, 224], sizes = [2, 32], strides = [1, 1]} : vector<2x256xf32> to vector<2x32xf32>
    %272 = arith.mulf %265, %230 : vector<2x32xf32>
    %273 = arith.mulf %264, %266 : vector<2x32xf32>
    %274 = arith.addf %272, %273 : vector<2x32xf32>
    %275 = arith.mulf %269, %233 : vector<2x32xf32>
    %276 = arith.mulf %268, %270 : vector<2x32xf32>
    %277 = arith.addf %275, %276 : vector<2x32xf32>
    %278 = tpu.concatenate %274, %277 in 1 : vector<2x32xf32>, vector<2x32xf32> -> vector<2x64xf32>
    %279 = math.tanh %278 : vector<2x64xf32>
    %280 = vector.extract_strided_slice %279 {offsets = [0, 0], sizes = [2, 32], strides = [1, 1]} : vector<2x64xf32> to vector<2x32xf32>
    %281 = arith.mulf %267, %280 : vector<2x32xf32>
    %282 = vector.extract_strided_slice %279 {offsets = [0, 32], sizes = [2, 32], strides = [1, 1]} : vector<2x64xf32> to vector<2x32xf32>
    %283 = arith.mulf %271, %282 : vector<2x32xf32>
    %284 = vector.shape_cast %281 : vector<2x32xf32> to vector<2x1x32xf32>
    %c0_80 = arith.constant 0 : index
    %285 = arith.index_cast %c1_i32_72 : i32 to index
    %c0_81 = arith.constant 0 : index
    %286 = vector.load %arg11[%c0_80, %285, %c0_81] : memref<2x8x64xf32, #tpu.memory_space<vmem>>, vector<2x1x32xf32>
    tpu.vector_store %arg11[%c0_80, %285, %c0_81], %284 {strides = array<i32>} : memref<2x8x64xf32, #tpu.memory_space<vmem>>, vector<2x1x32xf32>,
    %287 = vector.shape_cast %283 : vector<2x32xf32> to vector<2x1x32xf32>
    %c0_82 = arith.constant 0 : index
    %288 = arith.index_cast %246 : i32 to index
    %c32_83 = arith.constant 32 : index
    %289 = vector.load %arg11[%c0_82, %288, %c32_83] : memref<2x8x64xf32, #tpu.memory_space<vmem>>, vector<2x1x32xf32>
    tpu.vector_store %arg11[%c0_82, %288, %c32_83], %287 {strides = array<i32>} : memref<2x8x64xf32, #tpu.memory_space<vmem>>, vector<2x1x32xf32>,
    %c2_i32_84 = arith.constant 2 : i32
    %c7_i32_85 = arith.constant 7 : i32
    %290 = arith.subi %c7_i32_85, %c2_i32_84 : i32
    %c0_86 = arith.constant 0 : index
    %291 = arith.index_cast %c2_i32_84 : i32 to index
    %c0_87 = arith.constant 0 : index
    %292 = vector.load %arg10[%c0_86, %291, %c0_87] : memref<2x8x256xf32, #tpu.memory_space<vmem>>, vector<2x1x128xf32>
    %293 = vector.shape_cast %292 : vector<2x1x128xf32> to vector<2x128xf32>
    %c0_88 = arith.constant 0 : index
    %294 = arith.index_cast %290 : i32 to index
    %c128_89 = arith.constant 128 : index
    %295 = vector.load %arg10[%c0_88, %294, %c128_89] : memref<2x8x256xf32, #tpu.memory_space<vmem>>, vector<2x1x128xf32>
    %296 = vector.shape_cast %295 : vector<2x1x128xf32> to vector<2x128xf32>
    %297 = tpu.concatenate %293, %296 in 1 : vector<2x128xf32>, vector<2x128xf32> -> vector<2x256xf32>
    %298 = tpu.concatenate %281, %283 in 1 : vector<2x32xf32>, vector<2x32xf32> -> vector<2x64xf32>
    %299 = arith.truncf %298 : vector<2x64xf32> to vector<2x64xbf16>
    %cst_90 = arith.constant dense<0.000000e+00> : vector<2x256xf32>
    %300 = tpu.matmul %299, %200, %cst_90 {dimension_numbers = #tpu.dot_dimension_numbers<[1], [0], [0], [1], [0, 0, 1, 1], [], []>} : vector<2x64xbf16>, vector<64x256xbf16>, vector<2x256xf32> -> vector<2x256xf32>
    %301 = arith.addf %297, %300 : vector<2x256xf32>
    %302 = arith.negf %301 : vector<2x256xf32>
    %303 = math.exp %302 : vector<2x256xf32>
    %cst_91 = arith.constant 1.000000e+00 : f32
    %304 = vector.broadcast %cst_91 : f32 to vector<2x256xf32>
    %305 = arith.addf %304, %303 : vector<2x256xf32>
    %306 = arith.divf %304, %305 : vector<2x256xf32>
    %307 = math.tanh %301 : vector<2x256xf32>
    %308 = vector.extract_strided_slice %306 {offsets = [0, 0], sizes = [2, 32], strides = [1, 1]} : vector<2x256xf32> to vector<2x32xf32>
    %309 = vector.extract_strided_slice %306 {offsets = [0, 32], sizes = [2, 32], strides = [1, 1]} : vector<2x256xf32> to vector<2x32xf32>
    %310 = vector.extract_strided_slice %307 {offsets = [0, 64], sizes = [2, 32], strides = [1, 1]} : vector<2x256xf32> to vector<2x32xf32>
    %311 = vector.extract_strided_slice %306 {offsets = [0, 96], sizes = [2, 32], strides = [1, 1]} : vector<2x256xf32> to vector<2x32xf32>
    %312 = vector.extract_strided_slice %306 {offsets = [0, 128], sizes = [2, 32], strides = [1, 1]} : vector<2x256xf32> to vector<2x32xf32>
    %313 = vector.extract_strided_slice %306 {offsets = [0, 160], sizes = [2, 32], strides = [1, 1]} : vector<2x256xf32> to vector<2x32xf32>
    %314 = vector.extract_strided_slice %307 {offsets = [0, 192], sizes = [2, 32], strides = [1, 1]} : vector<2x256xf32> to vector<2x32xf32>
    %315 = vector.extract_strided_slice %306 {offsets = [0, 224], sizes = [2, 32], strides = [1, 1]} : vector<2x256xf32> to vector<2x32xf32>
    %316 = arith.mulf %309, %274 : vector<2x32xf32>
    %317 = arith.mulf %308, %310 : vector<2x32xf32>
    %318 = arith.addf %316, %317 : vector<2x32xf32>
    %319 = arith.mulf %313, %277 : vector<2x32xf32>
    %320 = arith.mulf %312, %314 : vector<2x32xf32>
    %321 = arith.addf %319, %320 : vector<2x32xf32>
    %322 = tpu.concatenate %318, %321 in 1 : vector<2x32xf32>, vector<2x32xf32> -> vector<2x64xf32>
    %323 = math.tanh %322 : vector<2x64xf32>
    %324 = vector.extract_strided_slice %323 {offsets = [0, 0], sizes = [2, 32], strides = [1, 1]} : vector<2x64xf32> to vector<2x32xf32>
    %325 = arith.mulf %311, %324 : vector<2x32xf32>
    %326 = vector.extract_strided_slice %323 {offsets = [0, 32], sizes = [2, 32], strides = [1, 1]} : vector<2x64xf32> to vector<2x32xf32>
    %327 = arith.mulf %315, %326 : vector<2x32xf32>
    %328 = vector.shape_cast %325 : vector<2x32xf32> to vector<2x1x32xf32>
    %c0_92 = arith.constant 0 : index
    %329 = arith.index_cast %c2_i32_84 : i32 to index
    %c0_93 = arith.constant 0 : index
    %330 = vector.load %arg11[%c0_92, %329, %c0_93] : memref<2x8x64xf32, #tpu.memory_space<vmem>>, vector<2x1x32xf32>
    tpu.vector_store %arg11[%c0_92, %329, %c0_93], %328 {strides = array<i32>} : memref<2x8x64xf32, #tpu.memory_space<vmem>>, vector<2x1x32xf32>,
    %331 = vector.shape_cast %327 : vector<2x32xf32> to vector<2x1x32xf32>
    %c0_94 = arith.constant 0 : index
    %332 = arith.index_cast %290 : i32 to index
    %c32_95 = arith.constant 32 : index
    %333 = vector.load %arg11[%c0_94, %332, %c32_95] : memref<2x8x64xf32, #tpu.memory_space<vmem>>, vector<2x1x32xf32>
    tpu.vector_store %arg11[%c0_94, %332, %c32_95], %331 {strides = array<i32>} : memref<2x8x64xf32, #tpu.memory_space<vmem>>, vector<2x1x32xf32>,
    %c3_i32_96 = arith.constant 3 : i32
    %c7_i32_97 = arith.constant 7 : i32
    %334 = arith.subi %c7_i32_97, %c3_i32_96 : i32
    %c0_98 = arith.constant 0 : index
    %335 = arith.index_cast %c3_i32_96 : i32 to index
    %c0_99 = arith.constant 0 : index
    %336 = vector.load %arg10[%c0_98, %335, %c0_99] : memref<2x8x256xf32, #tpu.memory_space<vmem>>, vector<2x1x128xf32>
    %337 = vector.shape_cast %336 : vector<2x1x128xf32> to vector<2x128xf32>
    %c0_100 = arith.constant 0 : index
    %338 = arith.index_cast %334 : i32 to index
    %c128_101 = arith.constant 128 : index
    %339 = vector.load %arg10[%c0_100, %338, %c128_101] : memref<2x8x256xf32, #tpu.memory_space<vmem>>, vector<2x1x128xf32>
    %340 = vector.shape_cast %339 : vector<2x1x128xf32> to vector<2x128xf32>
    %341 = tpu.concatenate %337, %340 in 1 : vector<2x128xf32>, vector<2x128xf32> -> vector<2x256xf32>
    %342 = tpu.concatenate %325, %327 in 1 : vector<2x32xf32>, vector<2x32xf32> -> vector<2x64xf32>
    %343 = arith.truncf %342 : vector<2x64xf32> to vector<2x64xbf16>
    %cst_102 = arith.constant dense<0.000000e+00> : vector<2x256xf32>
    %344 = tpu.matmul %343, %200, %cst_102 {dimension_numbers = #tpu.dot_dimension_numbers<[1], [0], [0], [1], [0, 0, 1, 1], [], []>} : vector<2x64xbf16>, vector<64x256xbf16>, vector<2x256xf32> -> vector<2x256xf32>
    %345 = arith.addf %341, %344 : vector<2x256xf32>
    %346 = arith.negf %345 : vector<2x256xf32>
    %347 = math.exp %346 : vector<2x256xf32>
    %cst_103 = arith.constant 1.000000e+00 : f32
    %348 = vector.broadcast %cst_103 : f32 to vector<2x256xf32>
    %349 = arith.addf %348, %347 : vector<2x256xf32>
    %350 = arith.divf %348, %349 : vector<2x256xf32>
    %351 = math.tanh %345 : vector<2x256xf32>
    %352 = vector.extract_strided_slice %350 {offsets = [0, 0], sizes = [2, 32], strides = [1, 1]} : vector<2x256xf32> to vector<2x32xf32>
    %353 = vector.extract_strided_slice %350 {offsets = [0, 32], sizes = [2, 32], strides = [1, 1]} : vector<2x256xf32> to vector<2x32xf32>
    %354 = vector.extract_strided_slice %351 {offsets = [0, 64], sizes = [2, 32], strides = [1, 1]} : vector<2x256xf32> to vector<2x32xf32>
    %355 = vector.extract_strided_slice %350 {offsets = [0, 96], sizes = [2, 32], strides = [1, 1]} : vector<2x256xf32> to vector<2x32xf32>
    %356 = vector.extract_strided_slice %350 {offsets = [0, 128], sizes = [2, 32], strides = [1, 1]} : vector<2x256xf32> to vector<2x32xf32>
    %357 = vector.extract_strided_slice %350 {offsets = [0, 160], sizes = [2, 32], strides = [1, 1]} : vector<2x256xf32> to vector<2x32xf32>
    %358 = vector.extract_strided_slice %351 {offsets = [0, 192], sizes = [2, 32], strides = [1, 1]} : vector<2x256xf32> to vector<2x32xf32>
    %359 = vector.extract_strided_slice %350 {offsets = [0, 224], sizes = [2, 32], strides = [1, 1]} : vector<2x256xf32> to vector<2x32xf32>
    %360 = arith.mulf %353, %318 : vector<2x32xf32>
    %361 = arith.mulf %352, %354 : vector<2x32xf32>
    %362 = arith.addf %360, %361 : vector<2x32xf32>
    %363 = arith.mulf %357, %321 : vector<2x32xf32>
    %364 = arith.mulf %356, %358 : vector<2x32xf32>
    %365 = arith.addf %363, %364 : vector<2x32xf32>
    %366 = tpu.concatenate %362, %365 in 1 : vector<2x32xf32>, vector<2x32xf32> -> vector<2x64xf32>
    %367 = math.tanh %366 : vector<2x64xf32>
    %368 = vector.extract_strided_slice %367 {offsets = [0, 0], sizes = [2, 32], strides = [1, 1]} : vector<2x64xf32> to vector<2x32xf32>
    %369 = arith.mulf %355, %368 : vector<2x32xf32>
    %370 = vector.extract_strided_slice %367 {offsets = [0, 32], sizes = [2, 32], strides = [1, 1]} : vector<2x64xf32> to vector<2x32xf32>
    %371 = arith.mulf %359, %370 : vector<2x32xf32>
    %372 = vector.shape_cast %369 : vector<2x32xf32> to vector<2x1x32xf32>
    %c0_104 = arith.constant 0 : index
    %373 = arith.index_cast %c3_i32_96 : i32 to index
    %c0_105 = arith.constant 0 : index
    %374 = vector.load %arg11[%c0_104, %373, %c0_105] : memref<2x8x64xf32, #tpu.memory_space<vmem>>, vector<2x1x32xf32>
    tpu.vector_store %arg11[%c0_104, %373, %c0_105], %372 {strides = array<i32>} : memref<2x8x64xf32, #tpu.memory_space<vmem>>, vector<2x1x32xf32>,
    %375 = vector.shape_cast %371 : vector<2x32xf32> to vector<2x1x32xf32>
    %c0_106 = arith.constant 0 : index
    %376 = arith.index_cast %334 : i32 to index
    %c32_107 = arith.constant 32 : index
    %377 = vector.load %arg11[%c0_106, %376, %c32_107] : memref<2x8x64xf32, #tpu.memory_space<vmem>>, vector<2x1x32xf32>
    tpu.vector_store %arg11[%c0_106, %376, %c32_107], %375 {strides = array<i32>} : memref<2x8x64xf32, #tpu.memory_space<vmem>>, vector<2x1x32xf32>,
    %c4_i32_108 = arith.constant 4 : i32
    %c7_i32_109 = arith.constant 7 : i32
    %378 = arith.subi %c7_i32_109, %c4_i32_108 : i32
    %c0_110 = arith.constant 0 : index
    %379 = arith.index_cast %c4_i32_108 : i32 to index
    %c0_111 = arith.constant 0 : index
    %380 = vector.load %arg10[%c0_110, %379, %c0_111] : memref<2x8x256xf32, #tpu.memory_space<vmem>>, vector<2x1x128xf32>
    %381 = vector.shape_cast %380 : vector<2x1x128xf32> to vector<2x128xf32>
    %c0_112 = arith.constant 0 : index
    %382 = arith.index_cast %378 : i32 to index
    %c128_113 = arith.constant 128 : index
    %383 = vector.load %arg10[%c0_112, %382, %c128_113] : memref<2x8x256xf32, #tpu.memory_space<vmem>>, vector<2x1x128xf32>
    %384 = vector.shape_cast %383 : vector<2x1x128xf32> to vector<2x128xf32>
    %385 = tpu.concatenate %381, %384 in 1 : vector<2x128xf32>, vector<2x128xf32> -> vector<2x256xf32>
    %386 = tpu.concatenate %369, %371 in 1 : vector<2x32xf32>, vector<2x32xf32> -> vector<2x64xf32>
    %387 = arith.truncf %386 : vector<2x64xf32> to vector<2x64xbf16>
    %cst_114 = arith.constant dense<0.000000e+00> : vector<2x256xf32>
    %388 = tpu.matmul %387, %200, %cst_114 {dimension_numbers = #tpu.dot_dimension_numbers<[1], [0], [0], [1], [0, 0, 1, 1], [], []>} : vector<2x64xbf16>, vector<64x256xbf16>, vector<2x256xf32> -> vector<2x256xf32>
    %389 = arith.addf %385, %388 : vector<2x256xf32>
    %390 = arith.negf %389 : vector<2x256xf32>
    %391 = math.exp %390 : vector<2x256xf32>
    %cst_115 = arith.constant 1.000000e+00 : f32
    %392 = vector.broadcast %cst_115 : f32 to vector<2x256xf32>
    %393 = arith.addf %392, %391 : vector<2x256xf32>
    %394 = arith.divf %392, %393 : vector<2x256xf32>
    %395 = math.tanh %389 : vector<2x256xf32>
    %396 = vector.extract_strided_slice %394 {offsets = [0, 0], sizes = [2, 32], strides = [1, 1]} : vector<2x256xf32> to vector<2x32xf32>
    %397 = vector.extract_strided_slice %394 {offsets = [0, 32], sizes = [2, 32], strides = [1, 1]} : vector<2x256xf32> to vector<2x32xf32>
    %398 = vector.extract_strided_slice %395 {offsets = [0, 64], sizes = [2, 32], strides = [1, 1]} : vector<2x256xf32> to vector<2x32xf32>
    %399 = vector.extract_strided_slice %394 {offsets = [0, 96], sizes = [2, 32], strides = [1, 1]} : vector<2x256xf32> to vector<2x32xf32>
    %400 = vector.extract_strided_slice %394 {offsets = [0, 128], sizes = [2, 32], strides = [1, 1]} : vector<2x256xf32> to vector<2x32xf32>
    %401 = vector.extract_strided_slice %394 {offsets = [0, 160], sizes = [2, 32], strides = [1, 1]} : vector<2x256xf32> to vector<2x32xf32>
    %402 = vector.extract_strided_slice %395 {offsets = [0, 192], sizes = [2, 32], strides = [1, 1]} : vector<2x256xf32> to vector<2x32xf32>
    %403 = vector.extract_strided_slice %394 {offsets = [0, 224], sizes = [2, 32], strides = [1, 1]} : vector<2x256xf32> to vector<2x32xf32>
    %404 = arith.mulf %397, %362 : vector<2x32xf32>
    %405 = arith.mulf %396, %398 : vector<2x32xf32>
    %406 = arith.addf %404, %405 : vector<2x32xf32>
    %407 = arith.mulf %401, %365 : vector<2x32xf32>
    %408 = arith.mulf %400, %402 : vector<2x32xf32>
    %409 = arith.addf %407, %408 : vector<2x32xf32>
    %410 = tpu.concatenate %406, %409 in 1 : vector<2x32xf32>, vector<2x32xf32> -> vector<2x64xf32>
    %411 = math.tanh %410 : vector<2x64xf32>
    %412 = vector.extract_strided_slice %411 {offsets = [0, 0], sizes = [2, 32], strides = [1, 1]} : vector<2x64xf32> to vector<2x32xf32>
    %413 = arith.mulf %399, %412 : vector<2x32xf32>
    %414 = vector.extract_strided_slice %411 {offsets = [0, 32], sizes = [2, 32], strides = [1, 1]} : vector<2x64xf32> to vector<2x32xf32>
    %415 = arith.mulf %403, %414 : vector<2x32xf32>
    %416 = vector.shape_cast %413 : vector<2x32xf32> to vector<2x1x32xf32>
    %c0_116 = arith.constant 0 : index
    %417 = arith.index_cast %c4_i32_108 : i32 to index
    %c0_117 = arith.constant 0 : index
    %418 = vector.load %arg11[%c0_116, %417, %c0_117] : memref<2x8x64xf32, #tpu.memory_space<vmem>>, vector<2x1x32xf32>
    tpu.vector_store %arg11[%c0_116, %417, %c0_117], %416 {strides = array<i32>} : memref<2x8x64xf32, #tpu.memory_space<vmem>>, vector<2x1x32xf32>,
    %419 = vector.shape_cast %415 : vector<2x32xf32> to vector<2x1x32xf32>
    %c0_118 = arith.constant 0 : index
    %420 = arith.index_cast %378 : i32 to index
    %c32_119 = arith.constant 32 : index
    %421 = vector.load %arg11[%c0_118, %420, %c32_119] : memref<2x8x64xf32, #tpu.memory_space<vmem>>, vector<2x1x32xf32>
    tpu.vector_store %arg11[%c0_118, %420, %c32_119], %419 {strides = array<i32>} : memref<2x8x64xf32, #tpu.memory_space<vmem>>, vector<2x1x32xf32>,
    %c5_i32_120 = arith.constant 5 : i32
    %c7_i32_121 = arith.constant 7 : i32
    %422 = arith.subi %c7_i32_121, %c5_i32_120 : i32
    %c0_122 = arith.constant 0 : index
    %423 = arith.index_cast %c5_i32_120 : i32 to index
    %c0_123 = arith.constant 0 : index
    %424 = vector.load %arg10[%c0_122, %423, %c0_123] : memref<2x8x256xf32, #tpu.memory_space<vmem>>, vector<2x1x128xf32>
    %425 = vector.shape_cast %424 : vector<2x1x128xf32> to vector<2x128xf32>
    %c0_124 = arith.constant 0 : index
    %426 = arith.index_cast %422 : i32 to index
    %c128_125 = arith.constant 128 : index
    %427 = vector.load %arg10[%c0_124, %426, %c128_125] : memref<2x8x256xf32, #tpu.memory_space<vmem>>, vector<2x1x128xf32>
    %428 = vector.shape_cast %427 : vector<2x1x128xf32> to vector<2x128xf32>
    %429 = tpu.concatenate %425, %428 in 1 : vector<2x128xf32>, vector<2x128xf32> -> vector<2x256xf32>
    %430 = tpu.concatenate %413, %415 in 1 : vector<2x32xf32>, vector<2x32xf32> -> vector<2x64xf32>
    %431 = arith.truncf %430 : vector<2x64xf32> to vector<2x64xbf16>
    %cst_126 = arith.constant dense<0.000000e+00> : vector<2x256xf32>
    %432 = tpu.matmul %431, %200, %cst_126 {dimension_numbers = #tpu.dot_dimension_numbers<[1], [0], [0], [1], [0, 0, 1, 1], [], []>} : vector<2x64xbf16>, vector<64x256xbf16>, vector<2x256xf32> -> vector<2x256xf32>
    %433 = arith.addf %429, %432 : vector<2x256xf32>
    %434 = arith.negf %433 : vector<2x256xf32>
    %435 = math.exp %434 : vector<2x256xf32>
    %cst_127 = arith.constant 1.000000e+00 : f32
    %436 = vector.broadcast %cst_127 : f32 to vector<2x256xf32>
    %437 = arith.addf %436, %435 : vector<2x256xf32>
    %438 = arith.divf %436, %437 : vector<2x256xf32>
    %439 = math.tanh %433 : vector<2x256xf32>
    %440 = vector.extract_strided_slice %438 {offsets = [0, 0], sizes = [2, 32], strides = [1, 1]} : vector<2x256xf32> to vector<2x32xf32>
    %441 = vector.extract_strided_slice %438 {offsets = [0, 32], sizes = [2, 32], strides = [1, 1]} : vector<2x256xf32> to vector<2x32xf32>
    %442 = vector.extract_strided_slice %439 {offsets = [0, 64], sizes = [2, 32], strides = [1, 1]} : vector<2x256xf32> to vector<2x32xf32>
    %443 = vector.extract_strided_slice %438 {offsets = [0, 96], sizes = [2, 32], strides = [1, 1]} : vector<2x256xf32> to vector<2x32xf32>
    %444 = vector.extract_strided_slice %438 {offsets = [0, 128], sizes = [2, 32], strides = [1, 1]} : vector<2x256xf32> to vector<2x32xf32>
    %445 = vector.extract_strided_slice %438 {offsets = [0, 160], sizes = [2, 32], strides = [1, 1]} : vector<2x256xf32> to vector<2x32xf32>
    %446 = vector.extract_strided_slice %439 {offsets = [0, 192], sizes = [2, 32], strides = [1, 1]} : vector<2x256xf32> to vector<2x32xf32>
    %447 = vector.extract_strided_slice %438 {offsets = [0, 224], sizes = [2, 32], strides = [1, 1]} : vector<2x256xf32> to vector<2x32xf32>
    %448 = arith.mulf %441, %406 : vector<2x32xf32>
    %449 = arith.mulf %440, %442 : vector<2x32xf32>
    %450 = arith.addf %448, %449 : vector<2x32xf32>
    %451 = arith.mulf %445, %409 : vector<2x32xf32>
    %452 = arith.mulf %444, %446 : vector<2x32xf32>
    %453 = arith.addf %451, %452 : vector<2x32xf32>
    %454 = tpu.concatenate %450, %453 in 1 : vector<2x32xf32>, vector<2x32xf32> -> vector<2x64xf32>
    %455 = math.tanh %454 : vector<2x64xf32>
    %456 = vector.extract_strided_slice %455 {offsets = [0, 0], sizes = [2, 32], strides = [1, 1]} : vector<2x64xf32> to vector<2x32xf32>
    %457 = arith.mulf %443, %456 : vector<2x32xf32>
    %458 = vector.extract_strided_slice %455 {offsets = [0, 32], sizes = [2, 32], strides = [1, 1]} : vector<2x64xf32> to vector<2x32xf32>
    %459 = arith.mulf %447, %458 : vector<2x32xf32>
    %460 = vector.shape_cast %457 : vector<2x32xf32> to vector<2x1x32xf32>
    %c0_128 = arith.constant 0 : index
    %461 = arith.index_cast %c5_i32_120 : i32 to index
    %c0_129 = arith.constant 0 : index
    %462 = vector.load %arg11[%c0_128, %461, %c0_129] : memref<2x8x64xf32, #tpu.memory_space<vmem>>, vector<2x1x32xf32>
    tpu.vector_store %arg11[%c0_128, %461, %c0_129], %460 {strides = array<i32>} : memref<2x8x64xf32, #tpu.memory_space<vmem>>, vector<2x1x32xf32>,
    %463 = vector.shape_cast %459 : vector<2x32xf32> to vector<2x1x32xf32>
    %c0_130 = arith.constant 0 : index
    %464 = arith.index_cast %422 : i32 to index
    %c32_131 = arith.constant 32 : index
    %465 = vector.load %arg11[%c0_130, %464, %c32_131] : memref<2x8x64xf32, #tpu.memory_space<vmem>>, vector<2x1x32xf32>
    tpu.vector_store %arg11[%c0_130, %464, %c32_131], %463 {strides = array<i32>} : memref<2x8x64xf32, #tpu.memory_space<vmem>>, vector<2x1x32xf32>,
    %c6_i32_132 = arith.constant 6 : i32
    %c7_i32_133 = arith.constant 7 : i32
    %466 = arith.subi %c7_i32_133, %c6_i32_132 : i32
    %c0_134 = arith.constant 0 : index
    %467 = arith.index_cast %c6_i32_132 : i32 to index
    %c0_135 = arith.constant 0 : index
    %468 = vector.load %arg10[%c0_134, %467, %c0_135] : memref<2x8x256xf32, #tpu.memory_space<vmem>>, vector<2x1x128xf32>
    %469 = vector.shape_cast %468 : vector<2x1x128xf32> to vector<2x128xf32>
    %c0_136 = arith.constant 0 : index
    %470 = arith.index_cast %466 : i32 to index
    %c128_137 = arith.constant 128 : index
    %471 = vector.load %arg10[%c0_136, %470, %c128_137] : memref<2x8x256xf32, #tpu.memory_space<vmem>>, vector<2x1x128xf32>
    %472 = vector.shape_cast %471 : vector<2x1x128xf32> to vector<2x128xf32>
    %473 = tpu.concatenate %469, %472 in 1 : vector<2x128xf32>, vector<2x128xf32> -> vector<2x256xf32>
    %474 = tpu.concatenate %457, %459 in 1 : vector<2x32xf32>, vector<2x32xf32> -> vector<2x64xf32>
    %475 = arith.truncf %474 : vector<2x64xf32> to vector<2x64xbf16>
    %cst_138 = arith.constant dense<0.000000e+00> : vector<2x256xf32>
    %476 = tpu.matmul %475, %200, %cst_138 {dimension_numbers = #tpu.dot_dimension_numbers<[1], [0], [0], [1], [0, 0, 1, 1], [], []>} : vector<2x64xbf16>, vector<64x256xbf16>, vector<2x256xf32> -> vector<2x256xf32>
    %477 = arith.addf %473, %476 : vector<2x256xf32>
    %478 = arith.negf %477 : vector<2x256xf32>
    %479 = math.exp %478 : vector<2x256xf32>
    %cst_139 = arith.constant 1.000000e+00 : f32
    %480 = vector.broadcast %cst_139 : f32 to vector<2x256xf32>
    %481 = arith.addf %480, %479 : vector<2x256xf32>
    %482 = arith.divf %480, %481 : vector<2x256xf32>
    %483 = math.tanh %477 : vector<2x256xf32>
    %484 = vector.extract_strided_slice %482 {offsets = [0, 0], sizes = [2, 32], strides = [1, 1]} : vector<2x256xf32> to vector<2x32xf32>
    %485 = vector.extract_strided_slice %482 {offsets = [0, 32], sizes = [2, 32], strides = [1, 1]} : vector<2x256xf32> to vector<2x32xf32>
    %486 = vector.extract_strided_slice %483 {offsets = [0, 64], sizes = [2, 32], strides = [1, 1]} : vector<2x256xf32> to vector<2x32xf32>
    %487 = vector.extract_strided_slice %482 {offsets = [0, 96], sizes = [2, 32], strides = [1, 1]} : vector<2x256xf32> to vector<2x32xf32>
    %488 = vector.extract_strided_slice %482 {offsets = [0, 128], sizes = [2, 32], strides = [1, 1]} : vector<2x256xf32> to vector<2x32xf32>
    %489 = vector.extract_strided_slice %482 {offsets = [0, 160], sizes = [2, 32], strides = [1, 1]} : vector<2x256xf32> to vector<2x32xf32>
    %490 = vector.extract_strided_slice %483 {offsets = [0, 192], sizes = [2, 32], strides = [1, 1]} : vector<2x256xf32> to vector<2x32xf32>
    %491 = vector.extract_strided_slice %482 {offsets = [0, 224], sizes = [2, 32], strides = [1, 1]} : vector<2x256xf32> to vector<2x32xf32>
    %492 = arith.mulf %485, %450 : vector<2x32xf32>
    %493 = arith.mulf %484, %486 : vector<2x32xf32>
    %494 = arith.addf %492, %493 : vector<2x32xf32>
    %495 = arith.mulf %489, %453 : vector<2x32xf32>
    %496 = arith.mulf %488, %490 : vector<2x32xf32>
    %497 = arith.addf %495, %496 : vector<2x32xf32>
    %498 = tpu.concatenate %494, %497 in 1 : vector<2x32xf32>, vector<2x32xf32> -> vector<2x64xf32>
    %499 = math.tanh %498 : vector<2x64xf32>
    %500 = vector.extract_strided_slice %499 {offsets = [0, 0], sizes = [2, 32], strides = [1, 1]} : vector<2x64xf32> to vector<2x32xf32>
    %501 = arith.mulf %487, %500 : vector<2x32xf32>
    %502 = vector.extract_strided_slice %499 {offsets = [0, 32], sizes = [2, 32], strides = [1, 1]} : vector<2x64xf32> to vector<2x32xf32>
    %503 = arith.mulf %491, %502 : vector<2x32xf32>
    %504 = vector.shape_cast %501 : vector<2x32xf32> to vector<2x1x32xf32>
    %c0_140 = arith.constant 0 : index
    %505 = arith.index_cast %c6_i32_132 : i32 to index
    %c0_141 = arith.constant 0 : index
    %506 = vector.load %arg11[%c0_140, %505, %c0_141] : memref<2x8x64xf32, #tpu.memory_space<vmem>>, vector<2x1x32xf32>
    tpu.vector_store %arg11[%c0_140, %505, %c0_141], %504 {strides = array<i32>} : memref<2x8x64xf32, #tpu.memory_space<vmem>>, vector<2x1x32xf32>,
    %507 = vector.shape_cast %503 : vector<2x32xf32> to vector<2x1x32xf32>
    %c0_142 = arith.constant 0 : index
    %508 = arith.index_cast %466 : i32 to index
    %c32_143 = arith.constant 32 : index
    %509 = vector.load %arg11[%c0_142, %508, %c32_143] : memref<2x8x64xf32, #tpu.memory_space<vmem>>, vector<2x1x32xf32>
    tpu.vector_store %arg11[%c0_142, %508, %c32_143], %507 {strides = array<i32>} : memref<2x8x64xf32, #tpu.memory_space<vmem>>, vector<2x1x32xf32>,
    %c7_i32_144 = arith.constant 7 : i32
    %c7_i32_145 = arith.constant 7 : i32
    %510 = arith.subi %c7_i32_145, %c7_i32_144 : i32
    %c0_146 = arith.constant 0 : index
    %511 = arith.index_cast %c7_i32_144 : i32 to index
    %c0_147 = arith.constant 0 : index
    %512 = vector.load %arg10[%c0_146, %511, %c0_147] : memref<2x8x256xf32, #tpu.memory_space<vmem>>, vector<2x1x128xf32>
    %513 = vector.shape_cast %512 : vector<2x1x128xf32> to vector<2x128xf32>
    %c0_148 = arith.constant 0 : index
    %514 = arith.index_cast %510 : i32 to index
    %c128_149 = arith.constant 128 : index
    %515 = vector.load %arg10[%c0_148, %514, %c128_149] : memref<2x8x256xf32, #tpu.memory_space<vmem>>, vector<2x1x128xf32>
    %516 = vector.shape_cast %515 : vector<2x1x128xf32> to vector<2x128xf32>
    %517 = tpu.concatenate %513, %516 in 1 : vector<2x128xf32>, vector<2x128xf32> -> vector<2x256xf32>
    %518 = tpu.concatenate %501, %503 in 1 : vector<2x32xf32>, vector<2x32xf32> -> vector<2x64xf32>
    %519 = arith.truncf %518 : vector<2x64xf32> to vector<2x64xbf16>
    %cst_150 = arith.constant dense<0.000000e+00> : vector<2x256xf32>
    %520 = tpu.matmul %519, %200, %cst_150 {dimension_numbers = #tpu.dot_dimension_numbers<[1], [0], [0], [1], [0, 0, 1, 1], [], []>} : vector<2x64xbf16>, vector<64x256xbf16>, vector<2x256xf32> -> vector<2x256xf32>
    %521 = arith.addf %517, %520 : vector<2x256xf32>
    %522 = arith.negf %521 : vector<2x256xf32>
    %523 = math.exp %522 : vector<2x256xf32>
    %cst_151 = arith.constant 1.000000e+00 : f32
    %524 = vector.broadcast %cst_151 : f32 to vector<2x256xf32>
    %525 = arith.addf %524, %523 : vector<2x256xf32>
    %526 = arith.divf %524, %525 : vector<2x256xf32>
    %527 = math.tanh %521 : vector<2x256xf32>
    %528 = vector.extract_strided_slice %526 {offsets = [0, 0], sizes = [2, 32], strides = [1, 1]} : vector<2x256xf32> to vector<2x32xf32>
    %529 = vector.extract_strided_slice %526 {offsets = [0, 32], sizes = [2, 32], strides = [1, 1]} : vector<2x256xf32> to vector<2x32xf32>
    %530 = vector.extract_strided_slice %527 {offsets = [0, 64], sizes = [2, 32], strides = [1, 1]} : vector<2x256xf32> to vector<2x32xf32>
    %531 = vector.extract_strided_slice %526 {offsets = [0, 96], sizes = [2, 32], strides = [1, 1]} : vector<2x256xf32> to vector<2x32xf32>
    %532 = vector.extract_strided_slice %526 {offsets = [0, 128], sizes = [2, 32], strides = [1, 1]} : vector<2x256xf32> to vector<2x32xf32>
    %533 = vector.extract_strided_slice %526 {offsets = [0, 160], sizes = [2, 32], strides = [1, 1]} : vector<2x256xf32> to vector<2x32xf32>
    %534 = vector.extract_strided_slice %527 {offsets = [0, 192], sizes = [2, 32], strides = [1, 1]} : vector<2x256xf32> to vector<2x32xf32>
    %535 = vector.extract_strided_slice %526 {offsets = [0, 224], sizes = [2, 32], strides = [1, 1]} : vector<2x256xf32> to vector<2x32xf32>
    %536 = arith.mulf %529, %494 : vector<2x32xf32>
    %537 = arith.mulf %528, %530 : vector<2x32xf32>
    %538 = arith.addf %536, %537 : vector<2x32xf32>
    %539 = arith.mulf %533, %497 : vector<2x32xf32>
    %540 = arith.mulf %532, %534 : vector<2x32xf32>
    %541 = arith.addf %539, %540 : vector<2x32xf32>
    %542 = tpu.concatenate %538, %541 in 1 : vector<2x32xf32>, vector<2x32xf32> -> vector<2x64xf32>
    %543 = math.tanh %542 : vector<2x64xf32>
    %544 = vector.extract_strided_slice %543 {offsets = [0, 0], sizes = [2, 32], strides = [1, 1]} : vector<2x64xf32> to vector<2x32xf32>
    %545 = arith.mulf %531, %544 : vector<2x32xf32>
    %546 = vector.extract_strided_slice %543 {offsets = [0, 32], sizes = [2, 32], strides = [1, 1]} : vector<2x64xf32> to vector<2x32xf32>
    %547 = arith.mulf %535, %546 : vector<2x32xf32>
    %548 = vector.shape_cast %545 : vector<2x32xf32> to vector<2x1x32xf32>
    %c0_152 = arith.constant 0 : index
    %549 = arith.index_cast %c7_i32_144 : i32 to index
    %c0_153 = arith.constant 0 : index
    %550 = vector.load %arg11[%c0_152, %549, %c0_153] : memref<2x8x64xf32, #tpu.memory_space<vmem>>, vector<2x1x32xf32>
    tpu.vector_store %arg11[%c0_152, %549, %c0_153], %548 {strides = array<i32>} : memref<2x8x64xf32, #tpu.memory_space<vmem>>, vector<2x1x32xf32>,
    %551 = vector.shape_cast %547 : vector<2x32xf32> to vector<2x1x32xf32>
    %c0_154 = arith.constant 0 : index
    %552 = arith.index_cast %510 : i32 to index
    %c32_155 = arith.constant 32 : index
    %553 = vector.load %arg11[%c0_154, %552, %c32_155] : memref<2x8x64xf32, #tpu.memory_space<vmem>>, vector<2x1x32xf32>
    tpu.vector_store %arg11[%c0_154, %552, %c32_155], %551 {strides = array<i32>} : memref<2x8x64xf32, #tpu.memory_space<vmem>>, vector<2x1x32xf32>,
    %c8_i32_156 = arith.constant 8 : i32
    %c0_157 = arith.constant 0 : index
    %c0_158 = arith.constant 0 : index
    %c0_159 = arith.constant 0 : index
    %554 = vector.load %arg11[%c0_157, %c0_158, %c0_159] : memref<2x8x64xf32, #tpu.memory_space<vmem>>, vector<2x8x64xf32>
    %555 = vector.shape_cast %554 : vector<2x8x64xf32> to vector<16x64xf32>
    %c1 = arith.constant 1 : index
    %c0_160 = arith.constant 0 : index
    %c0_161 = arith.constant 0 : index
    %556 = vector.load %arg3[%c1, %c0_160, %c0_161] : memref<2x64x256xbf16, #tpu.memory_space<vmem>>, vector<1x64x256xbf16>
    %557 = vector.shape_cast %556 : vector<1x64x256xbf16> to vector<64x256xbf16>
    %558 = arith.truncf %555 : vector<16x64xf32> to vector<16x64xbf16>
    %cst_162 = arith.constant dense<0.000000e+00> : vector<16x256xf32>
    %559 = tpu.matmul %558, %557, %cst_162 {dimension_numbers = #tpu.dot_dimension_numbers<[1], [0], [0], [1], [0, 0, 1, 1], [], []>} : vector<16x64xbf16>, vector<64x256xbf16>, vector<16x256xf32> -> vector<16x256xf32>
    %c1_163 = arith.constant 1 : index
    %c0_164 = arith.constant 0 : index
    %c0_165 = arith.constant 0 : index
    %560 = vector.load %arg5[%c1_163, %c0_164, %c0_165] : memref<2x1x256xf32, #tpu.memory_space<vmem>>, vector<1x1x256xf32>
    %561 = vector.shape_cast %560 : vector<1x1x256xf32> to vector<1x256xf32>
    %562 = vector.broadcast %561 : vector<1x256xf32> to vector<16x256xf32>
    %563 = arith.addf %559, %562 : vector<16x256xf32>
    %564 = vector.shape_cast %563 : vector<16x256xf32> to vector<2x8x256xf32>
    %c0_166 = arith.constant 0 : index
    %c0_167 = arith.constant 0 : index
    %c0_168 = arith.constant 0 : index
    %565 = vector.load %arg10[%c0_166, %c0_167, %c0_168] : memref<2x8x256xf32, #tpu.memory_space<vmem>>, vector<2x8x256xf32>
    tpu.vector_store %arg10[%c0_166, %c0_167, %c0_168], %564 {strides = array<i32>} : memref<2x8x256xf32, #tpu.memory_space<vmem>>, vector<2x8x256xf32>,
    %c1_169 = arith.constant 1 : index
    %c0_170 = arith.constant 0 : index
    %c0_171 = arith.constant 0 : index
    %566 = vector.load %arg4[%c1_169, %c0_170, %c0_171] : memref<2x64x256xbf16, #tpu.memory_space<vmem>>, vector<1x64x256xbf16>
    %567 = vector.shape_cast %566 : vector<1x64x256xbf16> to vector<64x256xbf16>
    %cst_172 = arith.constant 0.000000e+00 : f32
    %568 = vector.broadcast %cst_172 : f32 to vector<2x32xf32>
    %c0_i32_173 = arith.constant 0 : i32
    %c7_i32_174 = arith.constant 7 : i32
    %569 = arith.subi %c7_i32_174, %c0_i32_173 : i32
    %c0_175 = arith.constant 0 : index
    %570 = arith.index_cast %c0_i32_173 : i32 to index
    %c0_176 = arith.constant 0 : index
    %571 = vector.load %arg10[%c0_175, %570, %c0_176] : memref<2x8x256xf32, #tpu.memory_space<vmem>>, vector<2x1x128xf32>
    %572 = vector.shape_cast %571 : vector<2x1x128xf32> to vector<2x128xf32>
    %c0_177 = arith.constant 0 : index
    %573 = arith.index_cast %569 : i32 to index
    %c128_178 = arith.constant 128 : index
    %574 = vector.load %arg10[%c0_177, %573, %c128_178] : memref<2x8x256xf32, #tpu.memory_space<vmem>>, vector<2x1x128xf32>
    %575 = vector.shape_cast %574 : vector<2x1x128xf32> to vector<2x128xf32>
    %576 = tpu.concatenate %572, %575 in 1 : vector<2x128xf32>, vector<2x128xf32> -> vector<2x256xf32>
    %577 = tpu.concatenate %568, %568 in 1 : vector<2x32xf32>, vector<2x32xf32> -> vector<2x64xf32>
    %578 = arith.truncf %577 : vector<2x64xf32> to vector<2x64xbf16>
    %cst_179 = arith.constant dense<0.000000e+00> : vector<2x256xf32>
    %579 = tpu.matmul %578, %567, %cst_179 {dimension_numbers = #tpu.dot_dimension_numbers<[1], [0], [0], [1], [0, 0, 1, 1], [], []>} : vector<2x64xbf16>, vector<64x256xbf16>, vector<2x256xf32> -> vector<2x256xf32>
    %580 = arith.addf %576, %579 : vector<2x256xf32>
    %581 = arith.negf %580 : vector<2x256xf32>
    %582 = math.exp %581 : vector<2x256xf32>
    %cst_180 = arith.constant 1.000000e+00 : f32
    %583 = vector.broadcast %cst_180 : f32 to vector<2x256xf32>
    %584 = arith.addf %583, %582 : vector<2x256xf32>
    %585 = arith.divf %583, %584 : vector<2x256xf32>
    %586 = math.tanh %580 : vector<2x256xf32>
    %587 = vector.extract_strided_slice %585 {offsets = [0, 0], sizes = [2, 32], strides = [1, 1]} : vector<2x256xf32> to vector<2x32xf32>
    %588 = vector.extract_strided_slice %585 {offsets = [0, 32], sizes = [2, 32], strides = [1, 1]} : vector<2x256xf32> to vector<2x32xf32>
    %589 = vector.extract_strided_slice %586 {offsets = [0, 64], sizes = [2, 32], strides = [1, 1]} : vector<2x256xf32> to vector<2x32xf32>
    %590 = vector.extract_strided_slice %585 {offsets = [0, 96], sizes = [2, 32], strides = [1, 1]} : vector<2x256xf32> to vector<2x32xf32>
    %591 = vector.extract_strided_slice %585 {offsets = [0, 128], sizes = [2, 32], strides = [1, 1]} : vector<2x256xf32> to vector<2x32xf32>
    %592 = vector.extract_strided_slice %585 {offsets = [0, 160], sizes = [2, 32], strides = [1, 1]} : vector<2x256xf32> to vector<2x32xf32>
    %593 = vector.extract_strided_slice %586 {offsets = [0, 192], sizes = [2, 32], strides = [1, 1]} : vector<2x256xf32> to vector<2x32xf32>
    %594 = vector.extract_strided_slice %585 {offsets = [0, 224], sizes = [2, 32], strides = [1, 1]} : vector<2x256xf32> to vector<2x32xf32>
    %595 = arith.mulf %588, %568 : vector<2x32xf32>
    %596 = arith.mulf %587, %589 : vector<2x32xf32>
    %597 = arith.addf %595, %596 : vector<2x32xf32>
    %598 = arith.mulf %592, %568 : vector<2x32xf32>
    %599 = arith.mulf %591, %593 : vector<2x32xf32>
    %600 = arith.addf %598, %599 : vector<2x32xf32>
    %601 = tpu.concatenate %597, %600 in 1 : vector<2x32xf32>, vector<2x32xf32> -> vector<2x64xf32>
    %602 = math.tanh %601 : vector<2x64xf32>
    %603 = vector.extract_strided_slice %602 {offsets = [0, 0], sizes = [2, 32], strides = [1, 1]} : vector<2x64xf32> to vector<2x32xf32>
    %604 = arith.mulf %590, %603 : vector<2x32xf32>
    %605 = vector.extract_strided_slice %602 {offsets = [0, 32], sizes = [2, 32], strides = [1, 1]} : vector<2x64xf32> to vector<2x32xf32>
    %606 = arith.mulf %594, %605 : vector<2x32xf32>
    %607 = vector.shape_cast %604 : vector<2x32xf32> to vector<2x1x32xf32>
    %c0_181 = arith.constant 0 : index
    %608 = arith.index_cast %c0_i32_173 : i32 to index
    %c0_182 = arith.constant 0 : index
    %609 = vector.load %arg11[%c0_181, %608, %c0_182] : memref<2x8x64xf32, #tpu.memory_space<vmem>>, vector<2x1x32xf32>
    tpu.vector_store %arg11[%c0_181, %608, %c0_182], %607 {strides = array<i32>} : memref<2x8x64xf32, #tpu.memory_space<vmem>>, vector<2x1x32xf32>,
    %610 = vector.shape_cast %606 : vector<2x32xf32> to vector<2x1x32xf32>
    %c0_183 = arith.constant 0 : index
    %611 = arith.index_cast %569 : i32 to index
    %c32_184 = arith.constant 32 : index
    %612 = vector.load %arg11[%c0_183, %611, %c32_184] : memref<2x8x64xf32, #tpu.memory_space<vmem>>, vector<2x1x32xf32>
    tpu.vector_store %arg11[%c0_183, %611, %c32_184], %610 {strides = array<i32>} : memref<2x8x64xf32, #tpu.memory_space<vmem>>, vector<2x1x32xf32>,
    %c1_i32_185 = arith.constant 1 : i32
    %c7_i32_186 = arith.constant 7 : i32
    %613 = arith.subi %c7_i32_186, %c1_i32_185 : i32
    %c0_187 = arith.constant 0 : index
    %614 = arith.index_cast %c1_i32_185 : i32 to index
    %c0_188 = arith.constant 0 : index
    %615 = vector.load %arg10[%c0_187, %614, %c0_188] : memref<2x8x256xf32, #tpu.memory_space<vmem>>, vector<2x1x128xf32>
    %616 = vector.shape_cast %615 : vector<2x1x128xf32> to vector<2x128xf32>
    %c0_189 = arith.constant 0 : index
    %617 = arith.index_cast %613 : i32 to index
    %c128_190 = arith.constant 128 : index
    %618 = vector.load %arg10[%c0_189, %617, %c128_190] : memref<2x8x256xf32, #tpu.memory_space<vmem>>, vector<2x1x128xf32>
    %619 = vector.shape_cast %618 : vector<2x1x128xf32> to vector<2x128xf32>
    %620 = tpu.concatenate %616, %619 in 1 : vector<2x128xf32>, vector<2x128xf32> -> vector<2x256xf32>
    %621 = tpu.concatenate %604, %606 in 1 : vector<2x32xf32>, vector<2x32xf32> -> vector<2x64xf32>
    %622 = arith.truncf %621 : vector<2x64xf32> to vector<2x64xbf16>
    %cst_191 = arith.constant dense<0.000000e+00> : vector<2x256xf32>
    %623 = tpu.matmul %622, %567, %cst_191 {dimension_numbers = #tpu.dot_dimension_numbers<[1], [0], [0], [1], [0, 0, 1, 1], [], []>} : vector<2x64xbf16>, vector<64x256xbf16>, vector<2x256xf32> -> vector<2x256xf32>
    %624 = arith.addf %620, %623 : vector<2x256xf32>
    %625 = arith.negf %624 : vector<2x256xf32>
    %626 = math.exp %625 : vector<2x256xf32>
    %cst_192 = arith.constant 1.000000e+00 : f32
    %627 = vector.broadcast %cst_192 : f32 to vector<2x256xf32>
    %628 = arith.addf %627, %626 : vector<2x256xf32>
    %629 = arith.divf %627, %628 : vector<2x256xf32>
    %630 = math.tanh %624 : vector<2x256xf32>
    %631 = vector.extract_strided_slice %629 {offsets = [0, 0], sizes = [2, 32], strides = [1, 1]} : vector<2x256xf32> to vector<2x32xf32>
    %632 = vector.extract_strided_slice %629 {offsets = [0, 32], sizes = [2, 32], strides = [1, 1]} : vector<2x256xf32> to vector<2x32xf32>
    %633 = vector.extract_strided_slice %630 {offsets = [0, 64], sizes = [2, 32], strides = [1, 1]} : vector<2x256xf32> to vector<2x32xf32>
    %634 = vector.extract_strided_slice %629 {offsets = [0, 96], sizes = [2, 32], strides = [1, 1]} : vector<2x256xf32> to vector<2x32xf32>
    %635 = vector.extract_strided_slice %629 {offsets = [0, 128], sizes = [2, 32], strides = [1, 1]} : vector<2x256xf32> to vector<2x32xf32>
    %636 = vector.extract_strided_slice %629 {offsets = [0, 160], sizes = [2, 32], strides = [1, 1]} : vector<2x256xf32> to vector<2x32xf32>
    %637 = vector.extract_strided_slice %630 {offsets = [0, 192], sizes = [2, 32], strides = [1, 1]} : vector<2x256xf32> to vector<2x32xf32>
    %638 = vector.extract_strided_slice %629 {offsets = [0, 224], sizes = [2, 32], strides = [1, 1]} : vector<2x256xf32> to vector<2x32xf32>
    %639 = arith.mulf %632, %597 : vector<2x32xf32>
    %640 = arith.mulf %631, %633 : vector<2x32xf32>
    %641 = arith.addf %639, %640 : vector<2x32xf32>
    %642 = arith.mulf %636, %600 : vector<2x32xf32>
    %643 = arith.mulf %635, %637 : vector<2x32xf32>
    %644 = arith.addf %642, %643 : vector<2x32xf32>
    %645 = tpu.concatenate %641, %644 in 1 : vector<2x32xf32>, vector<2x32xf32> -> vector<2x64xf32>
    %646 = math.tanh %645 : vector<2x64xf32>
    %647 = vector.extract_strided_slice %646 {offsets = [0, 0], sizes = [2, 32], strides = [1, 1]} : vector<2x64xf32> to vector<2x32xf32>
    %648 = arith.mulf %634, %647 : vector<2x32xf32>
    %649 = vector.extract_strided_slice %646 {offsets = [0, 32], sizes = [2, 32], strides = [1, 1]} : vector<2x64xf32> to vector<2x32xf32>
    %650 = arith.mulf %638, %649 : vector<2x32xf32>
    %651 = vector.shape_cast %648 : vector<2x32xf32> to vector<2x1x32xf32>
    %c0_193 = arith.constant 0 : index
    %652 = arith.index_cast %c1_i32_185 : i32 to index
    %c0_194 = arith.constant 0 : index
    %653 = vector.load %arg11[%c0_193, %652, %c0_194] : memref<2x8x64xf32, #tpu.memory_space<vmem>>, vector<2x1x32xf32>
    tpu.vector_store %arg11[%c0_193, %652, %c0_194], %651 {strides = array<i32>} : memref<2x8x64xf32, #tpu.memory_space<vmem>>, vector<2x1x32xf32>,
    %654 = vector.shape_cast %650 : vector<2x32xf32> to vector<2x1x32xf32>
    %c0_195 = arith.constant 0 : index
    %655 = arith.index_cast %613 : i32 to index
    %c32_196 = arith.constant 32 : index
    %656 = vector.load %arg11[%c0_195, %655, %c32_196] : memref<2x8x64xf32, #tpu.memory_space<vmem>>, vector<2x1x32xf32>
    tpu.vector_store %arg11[%c0_195, %655, %c32_196], %654 {strides = array<i32>} : memref<2x8x64xf32, #tpu.memory_space<vmem>>, vector<2x1x32xf32>,
    %c2_i32_197 = arith.constant 2 : i32
    %c7_i32_198 = arith.constant 7 : i32
    %657 = arith.subi %c7_i32_198, %c2_i32_197 : i32
    %c0_199 = arith.constant 0 : index
    %658 = arith.index_cast %c2_i32_197 : i32 to index
    %c0_200 = arith.constant 0 : index
    %659 = vector.load %arg10[%c0_199, %658, %c0_200] : memref<2x8x256xf32, #tpu.memory_space<vmem>>, vector<2x1x128xf32>
    %660 = vector.shape_cast %659 : vector<2x1x128xf32> to vector<2x128xf32>
    %c0_201 = arith.constant 0 : index
    %661 = arith.index_cast %657 : i32 to index
    %c128_202 = arith.constant 128 : index
    %662 = vector.load %arg10[%c0_201, %661, %c128_202] : memref<2x8x256xf32, #tpu.memory_space<vmem>>, vector<2x1x128xf32>
    %663 = vector.shape_cast %662 : vector<2x1x128xf32> to vector<2x128xf32>
    %664 = tpu.concatenate %660, %663 in 1 : vector<2x128xf32>, vector<2x128xf32> -> vector<2x256xf32>
    %665 = tpu.concatenate %648, %650 in 1 : vector<2x32xf32>, vector<2x32xf32> -> vector<2x64xf32>
    %666 = arith.truncf %665 : vector<2x64xf32> to vector<2x64xbf16>
    %cst_203 = arith.constant dense<0.000000e+00> : vector<2x256xf32>
    %667 = tpu.matmul %666, %567, %cst_203 {dimension_numbers = #tpu.dot_dimension_numbers<[1], [0], [0], [1], [0, 0, 1, 1], [], []>} : vector<2x64xbf16>, vector<64x256xbf16>, vector<2x256xf32> -> vector<2x256xf32>
    %668 = arith.addf %664, %667 : vector<2x256xf32>
    %669 = arith.negf %668 : vector<2x256xf32>
    %670 = math.exp %669 : vector<2x256xf32>
    %cst_204 = arith.constant 1.000000e+00 : f32
    %671 = vector.broadcast %cst_204 : f32 to vector<2x256xf32>
    %672 = arith.addf %671, %670 : vector<2x256xf32>
    %673 = arith.divf %671, %672 : vector<2x256xf32>
    %674 = math.tanh %668 : vector<2x256xf32>
    %675 = vector.extract_strided_slice %673 {offsets = [0, 0], sizes = [2, 32], strides = [1, 1]} : vector<2x256xf32> to vector<2x32xf32>
    %676 = vector.extract_strided_slice %673 {offsets = [0, 32], sizes = [2, 32], strides = [1, 1]} : vector<2x256xf32> to vector<2x32xf32>
    %677 = vector.extract_strided_slice %674 {offsets = [0, 64], sizes = [2, 32], strides = [1, 1]} : vector<2x256xf32> to vector<2x32xf32>
    %678 = vector.extract_strided_slice %673 {offsets = [0, 96], sizes = [2, 32], strides = [1, 1]} : vector<2x256xf32> to vector<2x32xf32>
    %679 = vector.extract_strided_slice %673 {offsets = [0, 128], sizes = [2, 32], strides = [1, 1]} : vector<2x256xf32> to vector<2x32xf32>
    %680 = vector.extract_strided_slice %673 {offsets = [0, 160], sizes = [2, 32], strides = [1, 1]} : vector<2x256xf32> to vector<2x32xf32>
    %681 = vector.extract_strided_slice %674 {offsets = [0, 192], sizes = [2, 32], strides = [1, 1]} : vector<2x256xf32> to vector<2x32xf32>
    %682 = vector.extract_strided_slice %673 {offsets = [0, 224], sizes = [2, 32], strides = [1, 1]} : vector<2x256xf32> to vector<2x32xf32>
    %683 = arith.mulf %676, %641 : vector<2x32xf32>
    %684 = arith.mulf %675, %677 : vector<2x32xf32>
    %685 = arith.addf %683, %684 : vector<2x32xf32>
    %686 = arith.mulf %680, %644 : vector<2x32xf32>
    %687 = arith.mulf %679, %681 : vector<2x32xf32>
    %688 = arith.addf %686, %687 : vector<2x32xf32>
    %689 = tpu.concatenate %685, %688 in 1 : vector<2x32xf32>, vector<2x32xf32> -> vector<2x64xf32>
    %690 = math.tanh %689 : vector<2x64xf32>
    %691 = vector.extract_strided_slice %690 {offsets = [0, 0], sizes = [2, 32], strides = [1, 1]} : vector<2x64xf32> to vector<2x32xf32>
    %692 = arith.mulf %678, %691 : vector<2x32xf32>
    %693 = vector.extract_strided_slice %690 {offsets = [0, 32], sizes = [2, 32], strides = [1, 1]} : vector<2x64xf32> to vector<2x32xf32>
    %694 = arith.mulf %682, %693 : vector<2x32xf32>
    %695 = vector.shape_cast %692 : vector<2x32xf32> to vector<2x1x32xf32>
    %c0_205 = arith.constant 0 : index
    %696 = arith.index_cast %c2_i32_197 : i32 to index
    %c0_206 = arith.constant 0 : index
    %697 = vector.load %arg11[%c0_205, %696, %c0_206] : memref<2x8x64xf32, #tpu.memory_space<vmem>>, vector<2x1x32xf32>
    tpu.vector_store %arg11[%c0_205, %696, %c0_206], %695 {strides = array<i32>} : memref<2x8x64xf32, #tpu.memory_space<vmem>>, vector<2x1x32xf32>,
    %698 = vector.shape_cast %694 : vector<2x32xf32> to vector<2x1x32xf32>
    %c0_207 = arith.constant 0 : index
    %699 = arith.index_cast %657 : i32 to index
    %c32_208 = arith.constant 32 : index
    %700 = vector.load %arg11[%c0_207, %699, %c32_208] : memref<2x8x64xf32, #tpu.memory_space<vmem>>, vector<2x1x32xf32>
    tpu.vector_store %arg11[%c0_207, %699, %c32_208], %698 {strides = array<i32>} : memref<2x8x64xf32, #tpu.memory_space<vmem>>, vector<2x1x32xf32>,
    %c3_i32_209 = arith.constant 3 : i32
    %c7_i32_210 = arith.constant 7 : i32
    %701 = arith.subi %c7_i32_210, %c3_i32_209 : i32
    %c0_211 = arith.constant 0 : index
    %702 = arith.index_cast %c3_i32_209 : i32 to index
    %c0_212 = arith.constant 0 : index
    %703 = vector.load %arg10[%c0_211, %702, %c0_212] : memref<2x8x256xf32, #tpu.memory_space<vmem>>, vector<2x1x128xf32>
    %704 = vector.shape_cast %703 : vector<2x1x128xf32> to vector<2x128xf32>
    %c0_213 = arith.constant 0 : index
    %705 = arith.index_cast %701 : i32 to index
    %c128_214 = arith.constant 128 : index
    %706 = vector.load %arg10[%c0_213, %705, %c128_214] : memref<2x8x256xf32, #tpu.memory_space<vmem>>, vector<2x1x128xf32>
    %707 = vector.shape_cast %706 : vector<2x1x128xf32> to vector<2x128xf32>
    %708 = tpu.concatenate %704, %707 in 1 : vector<2x128xf32>, vector<2x128xf32> -> vector<2x256xf32>
    %709 = tpu.concatenate %692, %694 in 1 : vector<2x32xf32>, vector<2x32xf32> -> vector<2x64xf32>
    %710 = arith.truncf %709 : vector<2x64xf32> to vector<2x64xbf16>
    %cst_215 = arith.constant dense<0.000000e+00> : vector<2x256xf32>
    %711 = tpu.matmul %710, %567, %cst_215 {dimension_numbers = #tpu.dot_dimension_numbers<[1], [0], [0], [1], [0, 0, 1, 1], [], []>} : vector<2x64xbf16>, vector<64x256xbf16>, vector<2x256xf32> -> vector<2x256xf32>
    %712 = arith.addf %708, %711 : vector<2x256xf32>
    %713 = arith.negf %712 : vector<2x256xf32>
    %714 = math.exp %713 : vector<2x256xf32>
    %cst_216 = arith.constant 1.000000e+00 : f32
    %715 = vector.broadcast %cst_216 : f32 to vector<2x256xf32>
    %716 = arith.addf %715, %714 : vector<2x256xf32>
    %717 = arith.divf %715, %716 : vector<2x256xf32>
    %718 = math.tanh %712 : vector<2x256xf32>
    %719 = vector.extract_strided_slice %717 {offsets = [0, 0], sizes = [2, 32], strides = [1, 1]} : vector<2x256xf32> to vector<2x32xf32>
    %720 = vector.extract_strided_slice %717 {offsets = [0, 32], sizes = [2, 32], strides = [1, 1]} : vector<2x256xf32> to vector<2x32xf32>
    %721 = vector.extract_strided_slice %718 {offsets = [0, 64], sizes = [2, 32], strides = [1, 1]} : vector<2x256xf32> to vector<2x32xf32>
    %722 = vector.extract_strided_slice %717 {offsets = [0, 96], sizes = [2, 32], strides = [1, 1]} : vector<2x256xf32> to vector<2x32xf32>
    %723 = vector.extract_strided_slice %717 {offsets = [0, 128], sizes = [2, 32], strides = [1, 1]} : vector<2x256xf32> to vector<2x32xf32>
    %724 = vector.extract_strided_slice %717 {offsets = [0, 160], sizes = [2, 32], strides = [1, 1]} : vector<2x256xf32> to vector<2x32xf32>
    %725 = vector.extract_strided_slice %718 {offsets = [0, 192], sizes = [2, 32], strides = [1, 1]} : vector<2x256xf32> to vector<2x32xf32>
    %726 = vector.extract_strided_slice %717 {offsets = [0, 224], sizes = [2, 32], strides = [1, 1]} : vector<2x256xf32> to vector<2x32xf32>
    %727 = arith.mulf %720, %685 : vector<2x32xf32>
    %728 = arith.mulf %719, %721 : vector<2x32xf32>
    %729 = arith.addf %727, %728 : vector<2x32xf32>
    %730 = arith.mulf %724, %688 : vector<2x32xf32>
    %731 = arith.mulf %723, %725 : vector<2x32xf32>
    %732 = arith.addf %730, %731 : vector<2x32xf32>
    %733 = tpu.concatenate %729, %732 in 1 : vector<2x32xf32>, vector<2x32xf32> -> vector<2x64xf32>
    %734 = math.tanh %733 : vector<2x64xf32>
    %735 = vector.extract_strided_slice %734 {offsets = [0, 0], sizes = [2, 32], strides = [1, 1]} : vector<2x64xf32> to vector<2x32xf32>
    %736 = arith.mulf %722, %735 : vector<2x32xf32>
    %737 = vector.extract_strided_slice %734 {offsets = [0, 32], sizes = [2, 32], strides = [1, 1]} : vector<2x64xf32> to vector<2x32xf32>
    %738 = arith.mulf %726, %737 : vector<2x32xf32>
    %739 = vector.shape_cast %736 : vector<2x32xf32> to vector<2x1x32xf32>
    %c0_217 = arith.constant 0 : index
    %740 = arith.index_cast %c3_i32_209 : i32 to index
    %c0_218 = arith.constant 0 : index
    %741 = vector.load %arg11[%c0_217, %740, %c0_218] : memref<2x8x64xf32, #tpu.memory_space<vmem>>, vector<2x1x32xf32>
    tpu.vector_store %arg11[%c0_217, %740, %c0_218], %739 {strides = array<i32>} : memref<2x8x64xf32, #tpu.memory_space<vmem>>, vector<2x1x32xf32>,
    %742 = vector.shape_cast %738 : vector<2x32xf32> to vector<2x1x32xf32>
    %c0_219 = arith.constant 0 : index
    %743 = arith.index_cast %701 : i32 to index
    %c32_220 = arith.constant 32 : index
    %744 = vector.load %arg11[%c0_219, %743, %c32_220] : memref<2x8x64xf32, #tpu.memory_space<vmem>>, vector<2x1x32xf32>
    tpu.vector_store %arg11[%c0_219, %743, %c32_220], %742 {strides = array<i32>} : memref<2x8x64xf32, #tpu.memory_space<vmem>>, vector<2x1x32xf32>,
    %c4_i32_221 = arith.constant 4 : i32
    %c7_i32_222 = arith.constant 7 : i32
    %745 = arith.subi %c7_i32_222, %c4_i32_221 : i32
    %c0_223 = arith.constant 0 : index
    %746 = arith.index_cast %c4_i32_221 : i32 to index
    %c0_224 = arith.constant 0 : index
    %747 = vector.load %arg10[%c0_223, %746, %c0_224] : memref<2x8x256xf32, #tpu.memory_space<vmem>>, vector<2x1x128xf32>
    %748 = vector.shape_cast %747 : vector<2x1x128xf32> to vector<2x128xf32>
    %c0_225 = arith.constant 0 : index
    %749 = arith.index_cast %745 : i32 to index
    %c128_226 = arith.constant 128 : index
    %750 = vector.load %arg10[%c0_225, %749, %c128_226] : memref<2x8x256xf32, #tpu.memory_space<vmem>>, vector<2x1x128xf32>
    %751 = vector.shape_cast %750 : vector<2x1x128xf32> to vector<2x128xf32>
    %752 = tpu.concatenate %748, %751 in 1 : vector<2x128xf32>, vector<2x128xf32> -> vector<2x256xf32>
    %753 = tpu.concatenate %736, %738 in 1 : vector<2x32xf32>, vector<2x32xf32> -> vector<2x64xf32>
    %754 = arith.truncf %753 : vector<2x64xf32> to vector<2x64xbf16>
    %cst_227 = arith.constant dense<0.000000e+00> : vector<2x256xf32>
    %755 = tpu.matmul %754, %567, %cst_227 {dimension_numbers = #tpu.dot_dimension_numbers<[1], [0], [0], [1], [0, 0, 1, 1], [], []>} : vector<2x64xbf16>, vector<64x256xbf16>, vector<2x256xf32> -> vector<2x256xf32>
    %756 = arith.addf %752, %755 : vector<2x256xf32>
    %757 = arith.negf %756 : vector<2x256xf32>
    %758 = math.exp %757 : vector<2x256xf32>
    %cst_228 = arith.constant 1.000000e+00 : f32
    %759 = vector.broadcast %cst_228 : f32 to vector<2x256xf32>
    %760 = arith.addf %759, %758 : vector<2x256xf32>
    %761 = arith.divf %759, %760 : vector<2x256xf32>
    %762 = math.tanh %756 : vector<2x256xf32>
    %763 = vector.extract_strided_slice %761 {offsets = [0, 0], sizes = [2, 32], strides = [1, 1]} : vector<2x256xf32> to vector<2x32xf32>
    %764 = vector.extract_strided_slice %761 {offsets = [0, 32], sizes = [2, 32], strides = [1, 1]} : vector<2x256xf32> to vector<2x32xf32>
    %765 = vector.extract_strided_slice %762 {offsets = [0, 64], sizes = [2, 32], strides = [1, 1]} : vector<2x256xf32> to vector<2x32xf32>
    %766 = vector.extract_strided_slice %761 {offsets = [0, 96], sizes = [2, 32], strides = [1, 1]} : vector<2x256xf32> to vector<2x32xf32>
    %767 = vector.extract_strided_slice %761 {offsets = [0, 128], sizes = [2, 32], strides = [1, 1]} : vector<2x256xf32> to vector<2x32xf32>
    %768 = vector.extract_strided_slice %761 {offsets = [0, 160], sizes = [2, 32], strides = [1, 1]} : vector<2x256xf32> to vector<2x32xf32>
    %769 = vector.extract_strided_slice %762 {offsets = [0, 192], sizes = [2, 32], strides = [1, 1]} : vector<2x256xf32> to vector<2x32xf32>
    %770 = vector.extract_strided_slice %761 {offsets = [0, 224], sizes = [2, 32], strides = [1, 1]} : vector<2x256xf32> to vector<2x32xf32>
    %771 = arith.mulf %764, %729 : vector<2x32xf32>
    %772 = arith.mulf %763, %765 : vector<2x32xf32>
    %773 = arith.addf %771, %772 : vector<2x32xf32>
    %774 = arith.mulf %768, %732 : vector<2x32xf32>
    %775 = arith.mulf %767, %769 : vector<2x32xf32>
    %776 = arith.addf %774, %775 : vector<2x32xf32>
    %777 = tpu.concatenate %773, %776 in 1 : vector<2x32xf32>, vector<2x32xf32> -> vector<2x64xf32>
    %778 = math.tanh %777 : vector<2x64xf32>
    %779 = vector.extract_strided_slice %778 {offsets = [0, 0], sizes = [2, 32], strides = [1, 1]} : vector<2x64xf32> to vector<2x32xf32>
    %780 = arith.mulf %766, %779 : vector<2x32xf32>
    %781 = vector.extract_strided_slice %778 {offsets = [0, 32], sizes = [2, 32], strides = [1, 1]} : vector<2x64xf32> to vector<2x32xf32>
    %782 = arith.mulf %770, %781 : vector<2x32xf32>
    %783 = vector.shape_cast %780 : vector<2x32xf32> to vector<2x1x32xf32>
    %c0_229 = arith.constant 0 : index
    %784 = arith.index_cast %c4_i32_221 : i32 to index
    %c0_230 = arith.constant 0 : index
    %785 = vector.load %arg11[%c0_229, %784, %c0_230] : memref<2x8x64xf32, #tpu.memory_space<vmem>>, vector<2x1x32xf32>
    tpu.vector_store %arg11[%c0_229, %784, %c0_230], %783 {strides = array<i32>} : memref<2x8x64xf32, #tpu.memory_space<vmem>>, vector<2x1x32xf32>,
    %786 = vector.shape_cast %782 : vector<2x32xf32> to vector<2x1x32xf32>
    %c0_231 = arith.constant 0 : index
    %787 = arith.index_cast %745 : i32 to index
    %c32_232 = arith.constant 32 : index
    %788 = vector.load %arg11[%c0_231, %787, %c32_232] : memref<2x8x64xf32, #tpu.memory_space<vmem>>, vector<2x1x32xf32>
    tpu.vector_store %arg11[%c0_231, %787, %c32_232], %786 {strides = array<i32>} : memref<2x8x64xf32, #tpu.memory_space<vmem>>, vector<2x1x32xf32>,
    %c5_i32_233 = arith.constant 5 : i32
    %c7_i32_234 = arith.constant 7 : i32
    %789 = arith.subi %c7_i32_234, %c5_i32_233 : i32
    %c0_235 = arith.constant 0 : index
    %790 = arith.index_cast %c5_i32_233 : i32 to index
    %c0_236 = arith.constant 0 : index
    %791 = vector.load %arg10[%c0_235, %790, %c0_236] : memref<2x8x256xf32, #tpu.memory_space<vmem>>, vector<2x1x128xf32>
    %792 = vector.shape_cast %791 : vector<2x1x128xf32> to vector<2x128xf32>
    %c0_237 = arith.constant 0 : index
    %793 = arith.index_cast %789 : i32 to index
    %c128_238 = arith.constant 128 : index
    %794 = vector.load %arg10[%c0_237, %793, %c128_238] : memref<2x8x256xf32, #tpu.memory_space<vmem>>, vector<2x1x128xf32>
    %795 = vector.shape_cast %794 : vector<2x1x128xf32> to vector<2x128xf32>
    %796 = tpu.concatenate %792, %795 in 1 : vector<2x128xf32>, vector<2x128xf32> -> vector<2x256xf32>
    %797 = tpu.concatenate %780, %782 in 1 : vector<2x32xf32>, vector<2x32xf32> -> vector<2x64xf32>
    %798 = arith.truncf %797 : vector<2x64xf32> to vector<2x64xbf16>
    %cst_239 = arith.constant dense<0.000000e+00> : vector<2x256xf32>
    %799 = tpu.matmul %798, %567, %cst_239 {dimension_numbers = #tpu.dot_dimension_numbers<[1], [0], [0], [1], [0, 0, 1, 1], [], []>} : vector<2x64xbf16>, vector<64x256xbf16>, vector<2x256xf32> -> vector<2x256xf32>
    %800 = arith.addf %796, %799 : vector<2x256xf32>
    %801 = arith.negf %800 : vector<2x256xf32>
    %802 = math.exp %801 : vector<2x256xf32>
    %cst_240 = arith.constant 1.000000e+00 : f32
    %803 = vector.broadcast %cst_240 : f32 to vector<2x256xf32>
    %804 = arith.addf %803, %802 : vector<2x256xf32>
    %805 = arith.divf %803, %804 : vector<2x256xf32>
    %806 = math.tanh %800 : vector<2x256xf32>
    %807 = vector.extract_strided_slice %805 {offsets = [0, 0], sizes = [2, 32], strides = [1, 1]} : vector<2x256xf32> to vector<2x32xf32>
    %808 = vector.extract_strided_slice %805 {offsets = [0, 32], sizes = [2, 32], strides = [1, 1]} : vector<2x256xf32> to vector<2x32xf32>
    %809 = vector.extract_strided_slice %806 {offsets = [0, 64], sizes = [2, 32], strides = [1, 1]} : vector<2x256xf32> to vector<2x32xf32>
    %810 = vector.extract_strided_slice %805 {offsets = [0, 96], sizes = [2, 32], strides = [1, 1]} : vector<2x256xf32> to vector<2x32xf32>
    %811 = vector.extract_strided_slice %805 {offsets = [0, 128], sizes = [2, 32], strides = [1, 1]} : vector<2x256xf32> to vector<2x32xf32>
    %812 = vector.extract_strided_slice %805 {offsets = [0, 160], sizes = [2, 32], strides = [1, 1]} : vector<2x256xf32> to vector<2x32xf32>
    %813 = vector.extract_strided_slice %806 {offsets = [0, 192], sizes = [2, 32], strides = [1, 1]} : vector<2x256xf32> to vector<2x32xf32>
    %814 = vector.extract_strided_slice %805 {offsets = [0, 224], sizes = [2, 32], strides = [1, 1]} : vector<2x256xf32> to vector<2x32xf32>
    %815 = arith.mulf %808, %773 : vector<2x32xf32>
    %816 = arith.mulf %807, %809 : vector<2x32xf32>
    %817 = arith.addf %815, %816 : vector<2x32xf32>
    %818 = arith.mulf %812, %776 : vector<2x32xf32>
    %819 = arith.mulf %811, %813 : vector<2x32xf32>
    %820 = arith.addf %818, %819 : vector<2x32xf32>
    %821 = tpu.concatenate %817, %820 in 1 : vector<2x32xf32>, vector<2x32xf32> -> vector<2x64xf32>
    %822 = math.tanh %821 : vector<2x64xf32>
    %823 = vector.extract_strided_slice %822 {offsets = [0, 0], sizes = [2, 32], strides = [1, 1]} : vector<2x64xf32> to vector<2x32xf32>
    %824 = arith.mulf %810, %823 : vector<2x32xf32>
    %825 = vector.extract_strided_slice %822 {offsets = [0, 32], sizes = [2, 32], strides = [1, 1]} : vector<2x64xf32> to vector<2x32xf32>
    %826 = arith.mulf %814, %825 : vector<2x32xf32>
    %827 = vector.shape_cast %824 : vector<2x32xf32> to vector<2x1x32xf32>
    %c0_241 = arith.constant 0 : index
    %828 = arith.index_cast %c5_i32_233 : i32 to index
    %c0_242 = arith.constant 0 : index
    %829 = vector.load %arg11[%c0_241, %828, %c0_242] : memref<2x8x64xf32, #tpu.memory_space<vmem>>, vector<2x1x32xf32>
    tpu.vector_store %arg11[%c0_241, %828, %c0_242], %827 {strides = array<i32>} : memref<2x8x64xf32, #tpu.memory_space<vmem>>, vector<2x1x32xf32>,
    %830 = vector.shape_cast %826 : vector<2x32xf32> to vector<2x1x32xf32>
    %c0_243 = arith.constant 0 : index
    %831 = arith.index_cast %789 : i32 to index
    %c32_244 = arith.constant 32 : index
    %832 = vector.load %arg11[%c0_243, %831, %c32_244] : memref<2x8x64xf32, #tpu.memory_space<vmem>>, vector<2x1x32xf32>
    tpu.vector_store %arg11[%c0_243, %831, %c32_244], %830 {strides = array<i32>} : memref<2x8x64xf32, #tpu.memory_space<vmem>>, vector<2x1x32xf32>,
    %c6_i32_245 = arith.constant 6 : i32
    %c7_i32_246 = arith.constant 7 : i32
    %833 = arith.subi %c7_i32_246, %c6_i32_245 : i32
    %c0_247 = arith.constant 0 : index
    %834 = arith.index_cast %c6_i32_245 : i32 to index
    %c0_248 = arith.constant 0 : index
    %835 = vector.load %arg10[%c0_247, %834, %c0_248] : memref<2x8x256xf32, #tpu.memory_space<vmem>>, vector<2x1x128xf32>
    %836 = vector.shape_cast %835 : vector<2x1x128xf32> to vector<2x128xf32>
    %c0_249 = arith.constant 0 : index
    %837 = arith.index_cast %833 : i32 to index
    %c128_250 = arith.constant 128 : index
    %838 = vector.load %arg10[%c0_249, %837, %c128_250] : memref<2x8x256xf32, #tpu.memory_space<vmem>>, vector<2x1x128xf32>
    %839 = vector.shape_cast %838 : vector<2x1x128xf32> to vector<2x128xf32>
    %840 = tpu.concatenate %836, %839 in 1 : vector<2x128xf32>, vector<2x128xf32> -> vector<2x256xf32>
    %841 = tpu.concatenate %824, %826 in 1 : vector<2x32xf32>, vector<2x32xf32> -> vector<2x64xf32>
    %842 = arith.truncf %841 : vector<2x64xf32> to vector<2x64xbf16>
    %cst_251 = arith.constant dense<0.000000e+00> : vector<2x256xf32>
    %843 = tpu.matmul %842, %567, %cst_251 {dimension_numbers = #tpu.dot_dimension_numbers<[1], [0], [0], [1], [0, 0, 1, 1], [], []>} : vector<2x64xbf16>, vector<64x256xbf16>, vector<2x256xf32> -> vector<2x256xf32>
    %844 = arith.addf %840, %843 : vector<2x256xf32>
    %845 = arith.negf %844 : vector<2x256xf32>
    %846 = math.exp %845 : vector<2x256xf32>
    %cst_252 = arith.constant 1.000000e+00 : f32
    %847 = vector.broadcast %cst_252 : f32 to vector<2x256xf32>
    %848 = arith.addf %847, %846 : vector<2x256xf32>
    %849 = arith.divf %847, %848 : vector<2x256xf32>
    %850 = math.tanh %844 : vector<2x256xf32>
    %851 = vector.extract_strided_slice %849 {offsets = [0, 0], sizes = [2, 32], strides = [1, 1]} : vector<2x256xf32> to vector<2x32xf32>
    %852 = vector.extract_strided_slice %849 {offsets = [0, 32], sizes = [2, 32], strides = [1, 1]} : vector<2x256xf32> to vector<2x32xf32>
    %853 = vector.extract_strided_slice %850 {offsets = [0, 64], sizes = [2, 32], strides = [1, 1]} : vector<2x256xf32> to vector<2x32xf32>
    %854 = vector.extract_strided_slice %849 {offsets = [0, 96], sizes = [2, 32], strides = [1, 1]} : vector<2x256xf32> to vector<2x32xf32>
    %855 = vector.extract_strided_slice %849 {offsets = [0, 128], sizes = [2, 32], strides = [1, 1]} : vector<2x256xf32> to vector<2x32xf32>
    %856 = vector.extract_strided_slice %849 {offsets = [0, 160], sizes = [2, 32], strides = [1, 1]} : vector<2x256xf32> to vector<2x32xf32>
    %857 = vector.extract_strided_slice %850 {offsets = [0, 192], sizes = [2, 32], strides = [1, 1]} : vector<2x256xf32> to vector<2x32xf32>
    %858 = vector.extract_strided_slice %849 {offsets = [0, 224], sizes = [2, 32], strides = [1, 1]} : vector<2x256xf32> to vector<2x32xf32>
    %859 = arith.mulf %852, %817 : vector<2x32xf32>
    %860 = arith.mulf %851, %853 : vector<2x32xf32>
    %861 = arith.addf %859, %860 : vector<2x32xf32>
    %862 = arith.mulf %856, %820 : vector<2x32xf32>
    %863 = arith.mulf %855, %857 : vector<2x32xf32>
    %864 = arith.addf %862, %863 : vector<2x32xf32>
    %865 = tpu.concatenate %861, %864 in 1 : vector<2x32xf32>, vector<2x32xf32> -> vector<2x64xf32>
    %866 = math.tanh %865 : vector<2x64xf32>
    %867 = vector.extract_strided_slice %866 {offsets = [0, 0], sizes = [2, 32], strides = [1, 1]} : vector<2x64xf32> to vector<2x32xf32>
    %868 = arith.mulf %854, %867 : vector<2x32xf32>
    %869 = vector.extract_strided_slice %866 {offsets = [0, 32], sizes = [2, 32], strides = [1, 1]} : vector<2x64xf32> to vector<2x32xf32>
    %870 = arith.mulf %858, %869 : vector<2x32xf32>
    %871 = vector.shape_cast %868 : vector<2x32xf32> to vector<2x1x32xf32>
    %c0_253 = arith.constant 0 : index
    %872 = arith.index_cast %c6_i32_245 : i32 to index
    %c0_254 = arith.constant 0 : index
    %873 = vector.load %arg11[%c0_253, %872, %c0_254] : memref<2x8x64xf32, #tpu.memory_space<vmem>>, vector<2x1x32xf32>
    tpu.vector_store %arg11[%c0_253, %872, %c0_254], %871 {strides = array<i32>} : memref<2x8x64xf32, #tpu.memory_space<vmem>>, vector<2x1x32xf32>,
    %874 = vector.shape_cast %870 : vector<2x32xf32> to vector<2x1x32xf32>
    %c0_255 = arith.constant 0 : index
    %875 = arith.index_cast %833 : i32 to index
    %c32_256 = arith.constant 32 : index
    %876 = vector.load %arg11[%c0_255, %875, %c32_256] : memref<2x8x64xf32, #tpu.memory_space<vmem>>, vector<2x1x32xf32>
    tpu.vector_store %arg11[%c0_255, %875, %c32_256], %874 {strides = array<i32>} : memref<2x8x64xf32, #tpu.memory_space<vmem>>, vector<2x1x32xf32>,
    %c7_i32_257 = arith.constant 7 : i32
    %c7_i32_258 = arith.constant 7 : i32
    %877 = arith.subi %c7_i32_258, %c7_i32_257 : i32
    %c0_259 = arith.constant 0 : index
    %878 = arith.index_cast %c7_i32_257 : i32 to index
    %c0_260 = arith.constant 0 : index
    %879 = vector.load %arg10[%c0_259, %878, %c0_260] : memref<2x8x256xf32, #tpu.memory_space<vmem>>, vector<2x1x128xf32>
    %880 = vector.shape_cast %879 : vector<2x1x128xf32> to vector<2x128xf32>
    %c0_261 = arith.constant 0 : index
    %881 = arith.index_cast %877 : i32 to index
    %c128_262 = arith.constant 128 : index
    %882 = vector.load %arg10[%c0_261, %881, %c128_262] : memref<2x8x256xf32, #tpu.memory_space<vmem>>, vector<2x1x128xf32>
    %883 = vector.shape_cast %882 : vector<2x1x128xf32> to vector<2x128xf32>
    %884 = tpu.concatenate %880, %883 in 1 : vector<2x128xf32>, vector<2x128xf32> -> vector<2x256xf32>
    %885 = tpu.concatenate %868, %870 in 1 : vector<2x32xf32>, vector<2x32xf32> -> vector<2x64xf32>
    %886 = arith.truncf %885 : vector<2x64xf32> to vector<2x64xbf16>
    %cst_263 = arith.constant dense<0.000000e+00> : vector<2x256xf32>
    %887 = tpu.matmul %886, %567, %cst_263 {dimension_numbers = #tpu.dot_dimension_numbers<[1], [0], [0], [1], [0, 0, 1, 1], [], []>} : vector<2x64xbf16>, vector<64x256xbf16>, vector<2x256xf32> -> vector<2x256xf32>
    %888 = arith.addf %884, %887 : vector<2x256xf32>
    %889 = arith.negf %888 : vector<2x256xf32>
    %890 = math.exp %889 : vector<2x256xf32>
    %cst_264 = arith.constant 1.000000e+00 : f32
    %891 = vector.broadcast %cst_264 : f32 to vector<2x256xf32>
    %892 = arith.addf %891, %890 : vector<2x256xf32>
    %893 = arith.divf %891, %892 : vector<2x256xf32>
    %894 = math.tanh %888 : vector<2x256xf32>
    %895 = vector.extract_strided_slice %893 {offsets = [0, 0], sizes = [2, 32], strides = [1, 1]} : vector<2x256xf32> to vector<2x32xf32>
    %896 = vector.extract_strided_slice %893 {offsets = [0, 32], sizes = [2, 32], strides = [1, 1]} : vector<2x256xf32> to vector<2x32xf32>
    %897 = vector.extract_strided_slice %894 {offsets = [0, 64], sizes = [2, 32], strides = [1, 1]} : vector<2x256xf32> to vector<2x32xf32>
    %898 = vector.extract_strided_slice %893 {offsets = [0, 96], sizes = [2, 32], strides = [1, 1]} : vector<2x256xf32> to vector<2x32xf32>
    %899 = vector.extract_strided_slice %893 {offsets = [0, 128], sizes = [2, 32], strides = [1, 1]} : vector<2x256xf32> to vector<2x32xf32>
    %900 = vector.extract_strided_slice %893 {offsets = [0, 160], sizes = [2, 32], strides = [1, 1]} : vector<2x256xf32> to vector<2x32xf32>
    %901 = vector.extract_strided_slice %894 {offsets = [0, 192], sizes = [2, 32], strides = [1, 1]} : vector<2x256xf32> to vector<2x32xf32>
    %902 = vector.extract_strided_slice %893 {offsets = [0, 224], sizes = [2, 32], strides = [1, 1]} : vector<2x256xf32> to vector<2x32xf32>
    %903 = arith.mulf %896, %861 : vector<2x32xf32>
    %904 = arith.mulf %895, %897 : vector<2x32xf32>
    %905 = arith.addf %903, %904 : vector<2x32xf32>
    %906 = arith.mulf %900, %864 : vector<2x32xf32>
    %907 = arith.mulf %899, %901 : vector<2x32xf32>
    %908 = arith.addf %906, %907 : vector<2x32xf32>
    %909 = tpu.concatenate %905, %908 in 1 : vector<2x32xf32>, vector<2x32xf32> -> vector<2x64xf32>
    %910 = math.tanh %909 : vector<2x64xf32>
    %911 = vector.extract_strided_slice %910 {offsets = [0, 0], sizes = [2, 32], strides = [1, 1]} : vector<2x64xf32> to vector<2x32xf32>
    %912 = arith.mulf %898, %911 : vector<2x32xf32>
    %913 = vector.extract_strided_slice %910 {offsets = [0, 32], sizes = [2, 32], strides = [1, 1]} : vector<2x64xf32> to vector<2x32xf32>
    %914 = arith.mulf %902, %913 : vector<2x32xf32>
    %915 = vector.shape_cast %912 : vector<2x32xf32> to vector<2x1x32xf32>
    %c0_265 = arith.constant 0 : index
    %916 = arith.index_cast %c7_i32_257 : i32 to index
    %c0_266 = arith.constant 0 : index
    %917 = vector.load %arg11[%c0_265, %916, %c0_266] : memref<2x8x64xf32, #tpu.memory_space<vmem>>, vector<2x1x32xf32>
    tpu.vector_store %arg11[%c0_265, %916, %c0_266], %915 {strides = array<i32>} : memref<2x8x64xf32, #tpu.memory_space<vmem>>, vector<2x1x32xf32>,
    %918 = vector.shape_cast %914 : vector<2x32xf32> to vector<2x1x32xf32>
    %c0_267 = arith.constant 0 : index
    %919 = arith.index_cast %877 : i32 to index
    %c32_268 = arith.constant 32 : index
    %920 = vector.load %arg11[%c0_267, %919, %c32_268] : memref<2x8x64xf32, #tpu.memory_space<vmem>>, vector<2x1x32xf32>
    tpu.vector_store %arg11[%c0_267, %919, %c32_268], %918 {strides = array<i32>} : memref<2x8x64xf32, #tpu.memory_space<vmem>>, vector<2x1x32xf32>,
    %c8_i32_269 = arith.constant 8 : i32
    %c0_270 = arith.constant 0 : index
    %c0_271 = arith.constant 0 : index
    %c0_272 = arith.constant 0 : index
    %921 = vector.load %arg11[%c0_270, %c0_271, %c0_272] : memref<2x8x64xf32, #tpu.memory_space<vmem>>, vector<2x8x64xf32>
    %922 = vector.shape_cast %921 : vector<2x8x64xf32> to vector<16x64xf32>
    %923 = arith.truncf %922 : vector<16x64xf32> to vector<16x64xbf16>
    %c0_273 = arith.constant 0 : index
    %c0_274 = arith.constant 0 : index
    %924 = vector.load %arg6[%c0_273, %c0_274] : memref<64x5xbf16, #tpu.memory_space<vmem>>, vector<64x5xbf16>
    %cst_275 = arith.constant dense<0.000000e+00> : vector<16x5xf32>
    %925 = tpu.matmul %923, %924, %cst_275 {dimension_numbers = #tpu.dot_dimension_numbers<[1], [0], [0], [1], [0, 0, 1, 1], [], []>} : vector<16x64xbf16>, vector<64x5xbf16>, vector<16x5xf32> -> vector<16x5xf32>
    %c0_276 = arith.constant 0 : index
    %c0_277 = arith.constant 0 : index
    %926 = vector.load %arg7[%c0_276, %c0_277] : memref<1x5xf32, #tpu.memory_space<vmem>>, vector<1x5xf32>
    %927 = vector.broadcast %926 : vector<1x5xf32> to vector<16x5xf32>
    %928 = arith.addf %925, %927 : vector<16x5xf32>
    %cst_278 = arith.constant dense<0xFF800000> : vector<16xf32>
    %929 = vector.multi_reduction <maximumf>, %928, %cst_278 [1] : vector<16x5xf32> to vector<16xf32>
    %930 = vector.shape_cast %929 : vector<16xf32> to vector<16x1xf32>
    %931 = tpu.iota {dimensions = array<i32: 1>} : vector<16x5xi32>
    %932 = vector.broadcast %930 : vector<16x1xf32> to vector<16x5xf32>
    %933 = arith.cmpf oeq, %928, %932 : vector<16x5xf32>
    %c5_i32_279 = arith.constant 5 : i32
    %934 = vector.broadcast %c5_i32_279 : i32 to vector<16x5xi32>
    %935 = arith.select %933, %931, %934 : vector<16x5xi1>, vector<16x5xi32>
    %cst_280 = arith.constant dense<2147483647> : vector<16xi32>
    %936 = vector.multi_reduction <minsi>, %935, %cst_280 [1] : vector<16x5xi32> to vector<16xi32>
    %937 = vector.shape_cast %936 : vector<16xi32> to vector<2x8xi32>
    %c0_281 = arith.constant 0 : index
    %c0_282 = arith.constant 0 : index
    %938 = vector.load %arg8[%c0_281, %c0_282] : memref<2x8xi32, #tpu.memory_space<vmem>>, vector<2x8xi32>
    tpu.vector_store %arg8[%c0_281, %c0_282], %937 {strides = array<i32>} : memref<2x8xi32, #tpu.memory_space<vmem>>, vector<2x8xi32>,
    return
  }
  func.func @transform_0(%arg0: i32, %arg1: memref<16xi32, #tpu.memory_space<smem>>) -> (i32, i32) {
    %c0_i32 = arith.constant 0 : i32
    %c0_i32_0 = arith.constant 0 : i32
    %c0_i32_1 = arith.constant 0 : i32
    return %c0_i32, %c0_i32_0 : i32, i32
  }
  func.func @transform_1(%arg0: i32, %arg1: memref<16xi32, #tpu.memory_space<smem>>) -> (i32, i32, i32) {
    %c0_i32 = arith.constant 0 : i32
    %c0_i32_0 = arith.constant 0 : i32
    %c0_i32_1 = arith.constant 0 : i32
    %c0_i32_2 = arith.constant 0 : i32
    return %c0_i32, %c0_i32_0, %c0_i32_1 : i32, i32, i32
  }
  func.func @transform_2(%arg0: i32, %arg1: memref<16xi32, #tpu.memory_space<smem>>) -> (i32, i32, i32) {
    %c0_i32 = arith.constant 0 : i32
    %c0_i32_0 = arith.constant 0 : i32
    %c0_i32_1 = arith.constant 0 : i32
    %c0_i32_2 = arith.constant 0 : i32
    return %c0_i32, %c0_i32_0, %c0_i32_1 : i32, i32, i32
  }
  func.func @transform_3(%arg0: i32, %arg1: memref<16xi32, #tpu.memory_space<smem>>) -> (i32, i32, i32) {
    %c0_i32 = arith.constant 0 : i32
    %c0_i32_0 = arith.constant 0 : i32
    %c0_i32_1 = arith.constant 0 : i32
    %c0_i32_2 = arith.constant 0 : i32
    return %c0_i32, %c0_i32_0, %c0_i32_1 : i32, i32, i32
  }
  func.func @transform_4(%arg0: i32, %arg1: memref<16xi32, #tpu.memory_space<smem>>) -> (i32, i32) {
    %c0_i32 = arith.constant 0 : i32
    %c0_i32_0 = arith.constant 0 : i32
    %c0_i32_1 = arith.constant 0 : i32
    return %c0_i32, %c0_i32_0 : i32, i32
  }
  func.func @transform_5(%arg0: i32, %arg1: memref<16xi32, #tpu.memory_space<smem>>) -> (i32, i32) {
    %c0_i32 = arith.constant 0 : i32
    %c0_i32_0 = arith.constant 0 : i32
    %c0_i32_1 = arith.constant 0 : i32
    return %c0_i32, %c0_i32_0 : i32, i32
  }
  func.func @transform_6(%arg0: i32, %arg1: memref<16xi32, #tpu.memory_space<smem>>) -> (i32, i32) {
    %c0_i32 = arith.constant 0 : i32
    %c0_i32_0 = arith.constant 0 : i32
    return %arg0, %c0_i32 : i32, i32
  }
}

</mosaic_0001>

<llo_original>
// kernel: mutil_model_forward.1
$region0: #{mutil_model_forward.1}
  #allocation0 [shape = 'u32[]', space=smem, size = 0x4, offset = 0x4, fixed_abs, tag = 'smem constant byte address 0x4 - core index']
  #allocation1 [shape = 'u32[72,128]{1,0:T(1,128)}', space=vmem, size = 0x9000, scoped, tag = 'internal scratch']
  #allocation2 [shape = 'f32[16,32]{1,0:T(8,128)}', space=vmem, size = 0x2000, scoped, tag = 'scratch operand']
  #allocation3 [shape = 'f32[2,8,256]{2,1,0:T(8,128)}', space=vmem, size = 0x4000, scoped, tag = 'scratch operand']
  #allocation4 [shape = 'f32[2,8,64]{2,1,0:T(8,128)}', space=vmem, size = 0x2000, scoped, tag = 'scratch operand']
  #allocation5 [shape = 's32[1]{0}', space=sflag, size = 0x4, scoped, tag = 'scoped memory for mutil_model_forward.1']
  #allocation6 [shape = 'u8[512]{0}', space=smem, size = 0x200, scoped, tag = 'prefetched SMEM operand 0']
  %s0 = inlined_call_operand.vmem [shape: s32[16], index: 0, kind: input, shape index: {}]
  %s1 = inlined_call_operand.vmem [shape: f32[50,32], index: 1, kind: input, shape index: {}]
  %s2 = inlined_call_operand.hbm [shape: bf16[2,64,256], index: 2, kind: input, shape index: {}]
  %s3 = inlined_call_operand.hbm [shape: bf16[2,64,256], index: 3, kind: input, shape index: {}]
  %s4 = inlined_call_operand.vmem [shape: f32[2,1,256], index: 4, kind: input, shape index: {}]
  %s5 = inlined_call_operand.vmem [shape: bf16[64,5], index: 5, kind: input, shape index: {}]
  %s6 = inlined_call_operand.vmem [shape: f32[1,5], index: 6, kind: input, shape index: {}]
  %s7 = inlined_call_operand.hbm [shape: s32[2,8], index: 7, kind: output, shape index: {}]
  %s8 = sld [smem:[#allocation0]]
  $region42: #{mutil_model_forward.1} parent=0
    _
  %s10 = ssub.s32 1, %s8
  %s11 = scalar_select 0, %s10, %s8
  %s13 = sshll.u32 %s0, 4
  %s14 = int_to_ptr.vmem [resolvable:$true] %s13
  %16 = dma.vmem_to_smem %s14, 16, [#allocation6], [#allocation5]
  %18 = dma.done [#allocation5], 16
  %19 = sfence
  $region1: #{mutil_model_forward.1} parent=0
    #allocation7 [shape = 'u8[65536]{0}', space=vmem, size = 0x10000, scoped, tag = 'input window, operand 2, single buffered']
    #allocation8 [shape = 's32[1]{0}', space=sflag, size = 0x4, scoped, tag = 'scoped memory for mutil_model_forward.1']
    #allocation9 [shape = 's32[1]{0}', space=sflag, size = 0x4, scoped, tag = 'scoped memory for mutil_model_forward.1']
    #allocation10 [shape = 'u8[65536]{0}', space=vmem, size = 0x10000, scoped, tag = 'input window, operand 3, single buffered']
    #allocation11 [shape = 's32[1]{0}', space=sflag, size = 0x4, scoped, tag = 'scoped memory for mutil_model_forward.1']
    #allocation12 [shape = 'u8[1024]{0}', space=vmem, size = 0x400, scoped, tag = 'output window, operand 0, single buffered']
    %20 = vsyncpa [#allocation8], 0
    %21 = vsyncpa [#allocation11], 0
    %22 = vsyncpa [#allocation9], 0
    // Predicated region
    $region2: #{mutil_model_forward.1} parent=1 // pred_check
      _
    $region3: #{mutil_model_forward.1} parent=1 // pred_check_branch
      %24 = sbr.rel (0) target = $region5
    $region4: #{mutil_model_forward.1} parent=1 // pred_region
      _
    $region5: #{mutil_model_forward.1} parent=1 // pred_fallthru
      _
    // Predicated region
    $region6: #{mutil_model_forward.1} parent=1 // pred_check
      _
    $region7: #{mutil_model_forward.1} parent=1 // pred_check_branch
      %26 = sbr.rel (0) target = $region9
    $region8: #{mutil_model_forward.1} parent=1 // pred_region
      %28 = vsyncadd [#allocation8], 0
      %s29 = sshll.u32 %s2, 4
      %s30 = int_to_ptr.hbm [resolvable:$true] %s29
      %s31 = sshll.u32 [#allocation7], 4
      %s32 = int_to_ptr.vmem [resolvable:$true] %s31
      %37 = dma.hbm_to_vmem [thread:$0]  %s30, 2048, %s32, [#allocation8], 128, 128, 8
    $region9: #{mutil_model_forward.1} parent=1 // pred_fallthru
      _
    // Predicated region
    $region10: #{mutil_model_forward.1} parent=1 // pred_check
      _
    $region11: #{mutil_model_forward.1} parent=1 // pred_check_branch
      %39 = sbr.rel (0) target = $region13
    $region12: #{mutil_model_forward.1} parent=1 // pred_region
      %41 = vsyncadd [#allocation11], 0
      %s42 = sshll.u32 %s3, 4
      %s43 = int_to_ptr.hbm [resolvable:$true] %s42
      %s44 = sshll.u32 [#allocation10], 4
      %s45 = int_to_ptr.vmem [resolvable:$true] %s44
      %50 = dma.hbm_to_vmem [thread:$0]  %s43, 2048, %s45, [#allocation11], 128, 128, 8
    $region13: #{mutil_model_forward.1} parent=1 // pred_fallthru
      _
    // Predicated region
    $region14: #{mutil_model_forward.1} parent=1 // pred_check
      _
    $region15: #{mutil_model_forward.1} parent=1 // pred_check_branch
      %52 = sbr.rel (0) target = $region17
    $region16: #{mutil_model_forward.1} parent=1 // pred_region
      _
    $region17: #{mutil_model_forward.1} parent=1 // pred_fallthru
      _
    // Predicated region
    $region18: #{mutil_model_forward.1} parent=1 // pred_check
      _
    $region19: #{mutil_model_forward.1} parent=1 // pred_check_branch
      %54 = sbr.rel (0) target = $region21
    $region20: #{mutil_model_forward.1} parent=1 // pred_region
      _
    $region21: #{mutil_model_forward.1} parent=1 // pred_fallthru
      _
    // Predicated region
    $region22: #{mutil_model_forward.1} parent=1 // pred_check
      _
    $region23: #{mutil_model_forward.1} parent=1 // pred_check_branch
      %56 = sbr.rel (0) target = $region25
    $region24: #{mutil_model_forward.1} parent=1 // pred_region
      _
    $region25: #{mutil_model_forward.1} parent=1 // pred_fallthru
      _
    // Predicated region
    $region26: #{mutil_model_forward.1} parent=1 // pred_check
      _
    $region27: #{mutil_model_forward.1} parent=1 // pred_check_branch
      %58 = sbr.rel (0) target = $region29
    $region28: #{mutil_model_forward.1} parent=1 // pred_region
      %60 = dma.done [#allocation8], 2048
    $region29: #{mutil_model_forward.1} parent=1 // pred_fallthru
      _
    // Predicated region
    $region30: #{mutil_model_forward.1} parent=1 // pred_check
      _
    $region31: #{mutil_model_forward.1} parent=1 // pred_check_branch
      %62 = sbr.rel (0) target = $region33
    $region32: #{mutil_model_forward.1} parent=1 // pred_region
      %64 = dma.done [#allocation11], 2048
    $region33: #{mutil_model_forward.1} parent=1 // pred_fallthru
      _
    %s66 = smul.u32 0, 16
    %v67 = vlaneseq
    %v68 = vshrl.u32 %v67, 7
    %s69 = sadd.s32 %s66, 0
    %s70 = sld [smem:[#allocation6 + %s69]]
    %s71 = scalar_lea.vmem %s1, %s70
    %v72 = vld [vmem:[%s71] sm:$0x1]
    %v73 = vperm.slane %v72, 0
    %vm74 = vcmp.eq.s32.totalorder %v68, 0
    %v75 = vsel %vm74, %v73, 0.0
    %s76 = sadd.s32 %s69, 1
    %s77 = sld [smem:[#allocation6 + %s76]]
    %s78 = scalar_lea.vmem %s1, %s77
    %v79 = vld [vmem:[%s78] sm:$0x1]
    %v80 = vperm.slane %v79, 0
    %vm81 = vcmp.eq.s32.totalorder %v68, 1
    %v82 = vsel %vm81, %v80, %v75
    %s83 = sadd.s32 %s69, 2
    %s84 = sld [smem:[#allocation6 + %s83]]
    %s85 = scalar_lea.vmem %s1, %s84
    %v86 = vld [vmem:[%s85] sm:$0x1]
    %v87 = vperm.slane %v86, 0
    %vm88 = vcmp.eq.s32.totalorder %v68, 2
    %v89 = vsel %vm88, %v87, %v82
    %s90 = sadd.s32 %s69, 3
    %s91 = sld [smem:[#allocation6 + %s90]]
    %s92 = scalar_lea.vmem %s1, %s91
    %v93 = vld [vmem:[%s92] sm:$0x1]
    %v94 = vperm.slane %v93, 0
    %vm95 = vcmp.eq.s32.totalorder %v68, 3
    %v96 = vsel %vm95, %v94, %v89
    %s97 = sadd.s32 %s69, 4
    %s98 = sld [smem:[#allocation6 + %s97]]
    %s99 = scalar_lea.vmem %s1, %s98
    %v100 = vld [vmem:[%s99] sm:$0x1]
    %v101 = vperm.slane %v100, 0
    %vm102 = vcmp.eq.s32.totalorder %v68, 4
    %v103 = vsel %vm102, %v101, %v96
    %s104 = sadd.s32 %s69, 5
    %s105 = sld [smem:[#allocation6 + %s104]]
    %s106 = scalar_lea.vmem %s1, %s105
    %v107 = vld [vmem:[%s106] sm:$0x1]
    %v108 = vperm.slane %v107, 0
    %vm109 = vcmp.eq.s32.totalorder %v68, 5
    %v110 = vsel %vm109, %v108, %v103
    %s111 = sadd.s32 %s69, 6
    %s112 = sld [smem:[#allocation6 + %s111]]
    %s113 = scalar_lea.vmem %s1, %s112
    %v114 = vld [vmem:[%s113] sm:$0x1]
    %v115 = vperm.slane %v114, 0
    %vm116 = vcmp.eq.s32.totalorder %v68, 6
    %v117 = vsel %vm116, %v115, %v110
    %s118 = sadd.s32 %s69, 7
    %s119 = sld [smem:[#allocation6 + %s118]]
    %s120 = scalar_lea.vmem %s1, %s119
    %v121 = vld [vmem:[%s120] sm:$0x1]
    %v122 = vperm.slane %v121, 0
    %vm123 = vcmp.eq.s32.totalorder %v68, 7
    %v124 = vsel %vm123, %v122, %v117
    %vm125 = vcmask 261120
    %126 = vst.msk [vmem:[#allocation2] sm:$0xff] %vm125, %v124
    %s127 = sadd.s32 %s66, 8
    %s128 = sld [smem:[#allocation6 + %s127]]
    %s129 = scalar_lea.vmem %s1, %s128
    %v130 = vld [vmem:[%s129] sm:$0x1]
    %v131 = vperm.slane %v130, 0
    %v132 = vsel %vm74, %v131, 0.0
    %s133 = sadd.s32 %s127, 1
    %s134 = sld [smem:[#allocation6 + %s133]]
    %s135 = scalar_lea.vmem %s1, %s134
    %v136 = vld [vmem:[%s135] sm:$0x1]
    %v137 = vperm.slane %v136, 0
    %v138 = vsel %vm81, %v137, %v132
    %s139 = sadd.s32 %s127, 2
    %s140 = sld [smem:[#allocation6 + %s139]]
    %s141 = scalar_lea.vmem %s1, %s140
    %v142 = vld [vmem:[%s141] sm:$0x1]
    %v143 = vperm.slane %v142, 0
    %v144 = vsel %vm88, %v143, %v138
    %s145 = sadd.s32 %s127, 3
    %s146 = sld [smem:[#allocation6 + %s145]]
    %s147 = scalar_lea.vmem %s1, %s146
    %v148 = vld [vmem:[%s147] sm:$0x1]
    %v149 = vperm.slane %v148, 0
    %v150 = vsel %vm95, %v149, %v144
    %s151 = sadd.s32 %s127, 4
    %s152 = sld [smem:[#allocation6 + %s151]]
    %s153 = scalar_lea.vmem %s1, %s152
    %v154 = vld [vmem:[%s153] sm:$0x1]
    %v155 = vperm.slane %v154, 0
    %v156 = vsel %vm102, %v155, %v150
    %s157 = sadd.s32 %s127, 5
    %s158 = sld [smem:[#allocation6 + %s157]]
    %s159 = scalar_lea.vmem %s1, %s158
    %v160 = vld [vmem:[%s159] sm:$0x1]
    %v161 = vperm.slane %v160, 0
    %v162 = vsel %vm109, %v161, %v156
    %s163 = sadd.s32 %s127, 6
    %s164 = sld [smem:[#allocation6 + %s163]]
    %s165 = scalar_lea.vmem %s1, %s164
    %v166 = vld [vmem:[%s165] sm:$0x1]
    %v167 = vperm.slane %v166, 0
    %v168 = vsel %vm116, %v167, %v162
    %s169 = sadd.s32 %s127, 7
    %s170 = sld [smem:[#allocation6 + %s169]]
    %s171 = scalar_lea.vmem %s1, %s170
    %v172 = vld [vmem:[%s171] sm:$0x1]
    %v173 = vperm.slane %v172, 0
    %v174 = vsel %vm123, %v173, %v168
    %s175 = scalar_lea.vmem [#allocation2], 8
    %176 = vst.msk [vmem:[%s175] sm:$0xff] %vm125, %v174
    %v177 = vld [vmem:[#allocation2] sm:$0xff]
    %v178 = vld [vmem:[#allocation2 + $0x8] sm:$0xff]
    %v179 = vld [vmem:[#allocation7] sm:$0xff]
    %v180 = vld [vmem:[#allocation7 + $0x8] sm:$0xff]
    %v181 = vld [vmem:[#allocation7 + $0x10] sm:$0xff]
    %v182 = vld [vmem:[#allocation7 + $0x18] sm:$0xff]
    %v183 = vpack.c.bf16 %v178, %v177
    %v184 = vld [vmem:[%s4] sm:$0x3]
    %v186 = vperm.slane %v184, 0
    %v187 = vperm.slane %v184, 1
    %v194 = vunpack.c.l.b16 %v179
    %v195 = vunpack.c.h.b16 %v179
    %v196 = vunpack.c.l.b16 %v180
    %v197 = vunpack.c.h.b16 %v180
    %v198 = vunpack.c.l.b16 %v181
    %v199 = vunpack.c.h.b16 %v181
    %v200 = vunpack.c.l.b16 %v182
    %v201 = vunpack.c.h.b16 %v182
    %v202 = vpack.c.b16 %v196, %v194
    %v203 = vpack.c.b16 %v197, %v195
    %v204 = vpack.c.b16 %v200, %v198
    %v205 = vpack.c.b16 %v201, %v199
    %v211 = vsel %vm125, %v183, 0
    %213 = vmatpush.bf16.msra.mxu0 0
    %214 = vmatpush.bf16.msra.mxu0 0
    %215 = vmatpush.bf16.msra.mxu0 0
    %216 = vmatpush.bf16.msra.mxu0 0
    %217 = vmatpush.bf16.msra.mxu0 0
    %218 = vmatpush.bf16.msra.mxu0 0
    %219 = vmatpush.bf16.msra.mxu0 %v204
    %220 = vmatpush.bf16.msra.mxu0 %v202
    %221 = vmatmul.bf16.gmra.mxu0 %v211
    %v222 = vpop.f32.mrf.mxu0
    %v223 = vadd.f32 %v186, %v222
    %v224 = vpop.f32.mrf.mxu0
    %v225 = vadd.f32 %v186, %v224
    %226 = vdwg.mxu0
    %227 = vmatpush.bf16.msra.mxu0 0
    %228 = vmatpush.bf16.msra.mxu0 0
    %229 = vmatpush.bf16.msra.mxu0 0
    %230 = vmatpush.bf16.msra.mxu0 0
    %231 = vmatpush.bf16.msra.mxu0 0
    %232 = vmatpush.bf16.msra.mxu0 0
    %233 = vmatpush.bf16.msra.mxu0 %v205
    %234 = vmatpush.bf16.msra.mxu0 %v203
    %235 = vmatmul.bf16.gmra.mxu0 %v211
    %v236 = vpop.f32.mrf.mxu0
    %v237 = vadd.f32 %v187, %v236
    %v238 = vpop.f32.mrf.mxu0
    %v239 = vadd.f32 %v187, %v238
    %240 = vdwg.mxu0
    %241 = vst [vmem:[#allocation3] sm:$0xff] %v223
    %242 = vst [vmem:[#allocation3 + $0x8] sm:$0xff] %v237
    %243 = vst [vmem:[#allocation3 + $0x10] sm:$0xff] %v225
    %244 = vst [vmem:[#allocation3 + $0x18] sm:$0xff] %v239
    %v245 = vld [vmem:[#allocation10] sm:$0xff]
    %v246 = vld [vmem:[#allocation10 + $0x8] sm:$0xff]
    %v247 = vld [vmem:[#allocation10 + $0x10] sm:$0xff]
    %v248 = vld [vmem:[#allocation10 + $0x18] sm:$0xff]
    %v249 = vld [vmem:[#allocation10 + $0x20] sm:$0xff]
    %v250 = vld [vmem:[#allocation10 + $0x28] sm:$0xff]
    %v251 = vld [vmem:[#allocation10 + $0x30] sm:$0xff]
    %v252 = vld [vmem:[#allocation10 + $0x38] sm:$0xff]
    %v253 = vld [vmem:[#allocation3] ss:$0 sm:$0xff]
    %v254 = vld [vmem:[#allocation3 + $0x10] ss:$0 sm:$0xff]
    %v255 = vld [vmem:[#allocation3 + $0xf] ss:$0 sm:$0xff]
    %v256 = vld [vmem:[#allocation3 + $0x1f] ss:$0 sm:$0xff]
    %vm259 = vcmask 1041409
    %v260 = vsel %vm259, %v254, %v253
    %v264 = vsel %vm259, %v256, %v255
    %v266 = vpack.c.bf16 0.0, 0.0
    %v275 = vunpack.c.l.b16 %v245
    %v276 = vunpack.c.h.b16 %v245
    %v277 = vunpack.c.l.b16 %v246
    %v278 = vunpack.c.h.b16 %v246
    %v279 = vunpack.c.l.b16 %v247
    %v280 = vunpack.c.h.b16 %v247
    %v281 = vunpack.c.l.b16 %v248
    %v282 = vunpack.c.h.b16 %v248
    %v283 = vunpack.c.l.b16 %v249
    %v284 = vunpack.c.h.b16 %v249
    %v285 = vunpack.c.l.b16 %v250
    %v286 = vunpack.c.h.b16 %v250
    %v287 = vunpack.c.l.b16 %v251
    %v288 = vunpack.c.h.b16 %v251
    %v289 = vunpack.c.l.b16 %v252
    %v290 = vunpack.c.h.b16 %v252
    %v291 = vpack.c.b16 %v277, %v275
    %v292 = vpack.c.b16 %v278, %v276
    %v293 = vpack.c.b16 %v281, %v279
    %v294 = vpack.c.b16 %v282, %v280
    %v295 = vpack.c.b16 %v285, %v283
    %v296 = vpack.c.b16 %v286, %v284
    %v297 = vpack.c.b16 %v289, %v287
    %v298 = vpack.c.b16 %v290, %v288
    %vm307 = vcmask 523264
    %v309 = vsel %vm307, %v266, 0
    %311 = vmatpush.bf16.msra.mxu0 0
    %312 = vmatpush.bf16.msra.mxu0 0
    %313 = vmatpush.bf16.msra.mxu0 0
    %314 = vmatpush.bf16.msra.mxu0 0
    %315 = vmatpush.bf16.msra.mxu0 %v297
    %316 = vmatpush.bf16.msra.mxu0 %v295
    %317 = vmatpush.bf16.msra.mxu0 %v293
    %318 = vmatpush.bf16.msra.mxu0 %v291
    %319 = vmatmul.bf16.gmra.mxu0 %v309
    %v320 = vpop.f32.mrf.mxu0
    %v321 = vadd.f32 0.0, %v320
    %v322 = vpop.f32.mrf.mxu0
    %323 = vdwg.mxu0
    %324 = vmatpush.bf16.msra.mxu0 0
    %325 = vmatpush.bf16.msra.mxu0 0
    %326 = vmatpush.bf16.msra.mxu0 0
    %327 = vmatpush.bf16.msra.mxu0 0
    %328 = vmatpush.bf16.msra.mxu0 %v298
    %329 = vmatpush.bf16.msra.mxu0 %v296
    %330 = vmatpush.bf16.msra.mxu0 %v294
    %331 = vmatpush.bf16.msra.mxu0 %v292
    %332 = vmatmul.bf16.gmra.mxu0 %v309
    %v333 = vpop.f32.mrf.mxu0
    %v334 = vadd.f32 0.0, %v333
    %v335 = vpop.f32.mrf.mxu0
    %336 = vdwg.mxu0
    %v337 = vadd.f32 %v260, %v321
    %v338 = vadd.f32 %v264, %v334
    %v339 = vxor.u32 %v337, 2147483648
    %v340 = vxor.u32 %v338, 2147483648
    %v341 = vmul.f32 %v339, 1.442695
    %v342 = vpow.pop %v341
    %v343 = vmul.f32 %v340, 1.442695
    %v344 = vpow.pop %v343
    %v345 = vadd.f32 %v342, 1.0
    %v346 = vadd.f32 %v344, 1.0
    %v347 = vrcp.pop %v345
    %v348 = vmul.f32 %v345, %v347
    %v349 = vsub.f32 1.0, %v348
    %v350 = vmul.f32 %v347, %v349
    %v351 = vadd.f32 %v347, %v350
    %vm352 = vweird.f32 %v345
    %vm353 = vweird.f32 %v347
    %vm354 = vmor %vm352, %vm353
    %v355 = vsel %vm354, %v347, %v351
    %v356 = vand.u32 2147483647, %v345
    %vm357 = vcmp.eq.f32.partialorder %v356, 8.507059e+37
    %v358 = vand.u32 %v345, 2147483648
    %v359 = vor.u32 1.1754944e-38, %v358
    %v360 = vsel %vm357, %v359, %v355
    %v361 = vmul.f32 1.0, %v360
    %v362 = vrcp.pop %v346
    %v363 = vmul.f32 %v346, %v362
    %v364 = vsub.f32 1.0, %v363
    %v365 = vmul.f32 %v362, %v364
    %v366 = vadd.f32 %v362, %v365
    %vm367 = vweird.f32 %v346
    %vm368 = vweird.f32 %v362
    %vm369 = vmor %vm367, %vm368
    %v370 = vsel %vm369, %v362, %v366
    %v371 = vand.u32 2147483647, %v346
    %vm372 = vcmp.eq.f32.partialorder %v371, 8.507059e+37
    %v373 = vand.u32 %v346, 2147483648
    %v374 = vor.u32 1.1754944e-38, %v373
    %v375 = vsel %vm372, %v374, %v370
    %v376 = vmul.f32 1.0, %v375
    %v377 = vtanh.pop %v337
    %v378 = vtanh.pop %v338
    %v379 = vmul.f32 %v361, 0.0
    %381 = vrot.lane.b32.xlu0 %v377, 64
    %v382 = vpop.permute.xlu0 %381
    %v384 = vmul.f32 %v361, %v382
    %386 = vrot.lane.b32.xlu0 %v384, 32
    %v387 = vpop.permute.xlu0 %386
    %v389 = vadd.f32 %v379, %v387
    %v390 = vmul.f32 %v376, 0.0
    %392 = vrot.lane.b32.xlu0 %v378, 64
    %v393 = vpop.permute.xlu0 %392
    %v395 = vmul.f32 %v376, %v393
    %397 = vrot.lane.b32.xlu0 %v395, 32
    %v398 = vpop.permute.xlu0 %397
    %v400 = vadd.f32 %v390, %v398
    %402 = vrot.lane.b32.xlu0 %v389, 96
    %v403 = vpop.permute.xlu0 %402
    %v405 = vsel %vm125, %v403, %v400
    %v406 = vtanh.pop %v405
    %408 = vrot.lane.b32.xlu0 %v406, 96
    %v409 = vpop.permute.xlu0 %408
    %v411 = vmul.f32 %v361, %v409
    %412 = vrot.lane.b32.xlu0 %v406, 64
    %v413 = vpop.permute.xlu0 %412
    %v415 = vmul.f32 %v376, %v413
    %v417 = vrot.slane %v411, 1
    %v418 = vperm.slane %v411, 0
    %v419 = vperm.slane %v417, 0
    %420 = vrot.lane.b32.xlu0 %v418, 32
    %v421 = vpop.permute.xlu0 %420
    %422 = vrot.lane.b32.xlu0 %v419, 32
    %v423 = vpop.permute.xlu0 %422
    %vm426 = vcmask 253952
    %427 = vst.msk [vmem:[#allocation4] sm:$0x1] %vm426, %v421
    %428 = vst.msk [vmem:[#allocation4 + $0x8] sm:$0x1] %vm426, %v423
    %v430 = vrot.slane %v415, 1
    %v431 = vperm.slane %v415, 0
    %v432 = vperm.slane %v430, 0
    %433 = vrot.lane.b32.xlu0 %v431, 64
    %v434 = vpop.permute.xlu0 %433
    %435 = vrot.lane.b32.xlu0 %v432, 64
    %v436 = vpop.permute.xlu0 %435
    %vm439 = vcmask 516352
    %440 = vst.msk [vmem:[#allocation4 + $0x7] sm:$0x1] %vm439, %v434
    %441 = vst.msk [vmem:[#allocation4 + $0xf] sm:$0x1] %vm439, %v436
    %v442 = vld [vmem:[#allocation3 + $0x1] ss:$0 sm:$0xff]
    %v443 = vld [vmem:[#allocation3 + $0x11] ss:$0 sm:$0xff]
    %v444 = vld [vmem:[#allocation3 + $0xe] ss:$0 sm:$0xff]
    %v445 = vld [vmem:[#allocation3 + $0x1e] ss:$0 sm:$0xff]
    %v448 = vsel %vm259, %v443, %v442
    %v452 = vsel %vm259, %v445, %v444
    %454 = vrot.lane.b32.xlu0 %v411, 32
    %v455 = vpop.permute.xlu0 %454
    %457 = vrot.lane.b32.xlu0 %v415, 64
    %v458 = vpop.permute.xlu0 %457
    %v460 = vsel %vm125, %v455, %v458
    %v461 = vpack.c.bf16 %v460, %v460
    %v463 = vsel %vm307, %v461, 0
    %465 = vmatpush.bf16.msra.mxu0 0
    %466 = vmatpush.bf16.msra.mxu0 0
    %467 = vmatpush.bf16.msra.mxu0 0
    %468 = vmatpush.bf16.msra.mxu0 0
    %469 = vmatpush.bf16.msra.mxu0 %v297
    %470 = vmatpush.bf16.msra.mxu0 %v295
    %471 = vmatpush.bf16.msra.mxu0 %v293
    %472 = vmatpush.bf16.msra.mxu0 %v291
    %473 = vmatmul.bf16.gmra.mxu0 %v463
    %v474 = vpop.f32.mrf.mxu0
    %v475 = vadd.f32 0.0, %v474
    %v476 = vpop.f32.mrf.mxu0
    %477 = vdwg.mxu0
    %478 = vmatpush.bf16.msra.mxu0 0
    %479 = vmatpush.bf16.msra.mxu0 0
    %480 = vmatpush.bf16.msra.mxu0 0
    %481 = vmatpush.bf16.msra.mxu0 0
    %482 = vmatpush.bf16.msra.mxu0 %v298
    %483 = vmatpush.bf16.msra.mxu0 %v296
    %484 = vmatpush.bf16.msra.mxu0 %v294
    %485 = vmatpush.bf16.msra.mxu0 %v292
    %486 = vmatmul.bf16.gmra.mxu0 %v463
    %v487 = vpop.f32.mrf.mxu0
    %v488 = vadd.f32 0.0, %v487
    %v489 = vpop.f32.mrf.mxu0
    %490 = vdwg.mxu0
    %v491 = vadd.f32 %v448, %v475
    %v492 = vadd.f32 %v452, %v488
    %v493 = vxor.u32 %v491, 2147483648
    %v494 = vxor.u32 %v492, 2147483648
    %v495 = vmul.f32 %v493, 1.442695
    %v496 = vpow.pop %v495
    %v497 = vmul.f32 %v494, 1.442695
    %v498 = vpow.pop %v497
    %v499 = vadd.f32 %v496, 1.0
    %v500 = vadd.f32 %v498, 1.0
    %v501 = vrcp.pop %v499
    %v502 = vmul.f32 %v499, %v501
    %v503 = vsub.f32 1.0, %v502
    %v504 = vmul.f32 %v501, %v503
    %v505 = vadd.f32 %v501, %v504
    %vm506 = vweird.f32 %v499
    %vm507 = vweird.f32 %v501
    %vm508 = vmor %vm506, %vm507
    %v509 = vsel %vm508, %v501, %v505
    %v510 = vand.u32 2147483647, %v499
    %vm511 = vcmp.eq.f32.partialorder %v510, 8.507059e+37
    %v512 = vand.u32 %v499, 2147483648
    %v513 = vor.u32 1.1754944e-38, %v512
    %v514 = vsel %vm511, %v513, %v509
    %v515 = vmul.f32 1.0, %v514
    %v516 = vrcp.pop %v500
    %v517 = vmul.f32 %v500, %v516
    %v518 = vsub.f32 1.0, %v517
    %v519 = vmul.f32 %v516, %v518
    %v520 = vadd.f32 %v516, %v519
    %vm521 = vweird.f32 %v500
    %vm522 = vweird.f32 %v516
    %vm523 = vmor %vm521, %vm522
    %v524 = vsel %vm523, %v516, %v520
    %v525 = vand.u32 2147483647, %v500
    %vm526 = vcmp.eq.f32.partialorder %v525, 8.507059e+37
    %v527 = vand.u32 %v500, 2147483648
    %v528 = vor.u32 1.1754944e-38, %v527
    %v529 = vsel %vm526, %v528, %v524
    %v530 = vmul.f32 1.0, %v529
    %v531 = vtanh.pop %v491
    %v532 = vtanh.pop %v492
    %v533 = vmul.f32 %v515, %v389
    %535 = vrot.lane.b32.xlu0 %v531, 64
    %v536 = vpop.permute.xlu0 %535
    %v538 = vmul.f32 %v515, %v536
    %540 = vrot.lane.b32.xlu0 %v538, 32
    %v541 = vpop.permute.xlu0 %540
    %v543 = vadd.f32 %v533, %v541
    %v544 = vmul.f32 %v530, %v400
    %546 = vrot.lane.b32.xlu0 %v532, 64
    %v547 = vpop.permute.xlu0 %546
    %v549 = vmul.f32 %v530, %v547
    %551 = vrot.lane.b32.xlu0 %v549, 32
    %v552 = vpop.permute.xlu0 %551
    %v554 = vadd.f32 %v544, %v552
    %556 = vrot.lane.b32.xlu0 %v543, 96
    %v557 = vpop.permute.xlu0 %556
    %v559 = vsel %vm125, %v557, %v554
    %v560 = vtanh.pop %v559
    %562 = vrot.lane.b32.xlu0 %v560, 96
    %v563 = vpop.permute.xlu0 %562
    %v565 = vmul.f32 %v515, %v563
    %566 = vrot.lane.b32.xlu0 %v560, 64
    %v567 = vpop.permute.xlu0 %566
    %v569 = vmul.f32 %v530, %v567
    %v571 = vrot.slane %v565, 1
    %v572 = vperm.slane %v565, 0
    %v573 = vperm.slane %v571, 0
    %574 = vrot.lane.b32.xlu0 %v572, 32
    %v575 = vpop.permute.xlu0 %574
    %576 = vrot.lane.b32.xlu0 %v573, 32
    %v577 = vpop.permute.xlu0 %576
    %580 = vst.msk [vmem:[#allocation4 + $0x1] sm:$0x1] %vm426, %v575
    %581 = vst.msk [vmem:[#allocation4 + $0x9] sm:$0x1] %vm426, %v577
    %v583 = vrot.slane %v569, 1
    %v584 = vperm.slane %v569, 0
    %v585 = vperm.slane %v583, 0
    %586 = vrot.lane.b32.xlu0 %v584, 64
    %v587 = vpop.permute.xlu0 %586
    %588 = vrot.lane.b32.xlu0 %v585, 64
    %v589 = vpop.permute.xlu0 %588
    %592 = vst.msk [vmem:[#allocation4 + $0x6] sm:$0x1] %vm439, %v587
    %593 = vst.msk [vmem:[#allocation4 + $0xe] sm:$0x1] %vm439, %v589
    %v594 = vld [vmem:[#allocation3 + $0x2] ss:$0 sm:$0xff]
    %v595 = vld [vmem:[#allocation3 + $0x12] ss:$0 sm:$0xff]
    %v596 = vld [vmem:[#allocation3 + $0xd] ss:$0 sm:$0xff]
    %v597 = vld [vmem:[#allocation3 + $0x1d] ss:$0 sm:$0xff]
    %v600 = vsel %vm259, %v595, %v594
    %v604 = vsel %vm259, %v597, %v596
    %606 = vrot.lane.b32.xlu0 %v565, 32
    %v607 = vpop.permute.xlu0 %606
    %609 = vrot.lane.b32.xlu0 %v569, 64
    %v610 = vpop.permute.xlu0 %609
    %v612 = vsel %vm125, %v607, %v610
    %v613 = vpack.c.bf16 %v612, %v612
    %v615 = vsel %vm307, %v613, 0
    %617 = vmatpush.bf16.msra.mxu0 0
    %618 = vmatpush.bf16.msra.mxu0 0
    %619 = vmatpush.bf16.msra.mxu0 0
    %620 = vmatpush.bf16.msra.mxu0 0
    %621 = vmatpush.bf16.msra.mxu0 %v297
    %622 = vmatpush.bf16.msra.mxu0 %v295
    %623 = vmatpush.bf16.msra.mxu0 %v293
    %624 = vmatpush.bf16.msra.mxu0 %v291
    %625 = vmatmul.bf16.gmra.mxu0 %v615
    %v626 = vpop.f32.mrf.mxu0
    %v627 = vadd.f32 0.0, %v626
    %v628 = vpop.f32.mrf.mxu0
    %629 = vdwg.mxu0
    %630 = vmatpush.bf16.msra.mxu0 0
    %631 = vmatpush.bf16.msra.mxu0 0
    %632 = vmatpush.bf16.msra.mxu0 0
    %633 = vmatpush.bf16.msra.mxu0 0
    %634 = vmatpush.bf16.msra.mxu0 %v298
    %635 = vmatpush.bf16.msra.mxu0 %v296
    %636 = vmatpush.bf16.msra.mxu0 %v294
    %637 = vmatpush.bf16.msra.mxu0 %v292
    %638 = vmatmul.bf16.gmra.mxu0 %v615
    %v639 = vpop.f32.mrf.mxu0
    %v640 = vadd.f32 0.0, %v639
    %v641 = vpop.f32.mrf.mxu0
    %642 = vdwg.mxu0
    %v643 = vadd.f32 %v600, %v627
    %v644 = vadd.f32 %v604, %v640
    %v645 = vxor.u32 %v643, 2147483648
    %v646 = vxor.u32 %v644, 2147483648
    %v647 = vmul.f32 %v645, 1.442695
    %v648 = vpow.pop %v647
    %v649 = vmul.f32 %v646, 1.442695
    %v650 = vpow.pop %v649
    %v651 = vadd.f32 %v648, 1.0
    %v652 = vadd.f32 %v650, 1.0
    %v653 = vrcp.pop %v651
    %v654 = vmul.f32 %v651, %v653
    %v655 = vsub.f32 1.0, %v654
    %v656 = vmul.f32 %v653, %v655
    %v657 = vadd.f32 %v653, %v656
    %vm658 = vweird.f32 %v651
    %vm659 = vweird.f32 %v653
    %vm660 = vmor %vm658, %vm659
    %v661 = vsel %vm660, %v653, %v657
    %v662 = vand.u32 2147483647, %v651
    %vm663 = vcmp.eq.f32.partialorder %v662, 8.507059e+37
    %v664 = vand.u32 %v651, 2147483648
    %v665 = vor.u32 1.1754944e-38, %v664
    %v666 = vsel %vm663, %v665, %v661
    %v667 = vmul.f32 1.0, %v666
    %v668 = vrcp.pop %v652
    %v669 = vmul.f32 %v652, %v668
    %v670 = vsub.f32 1.0, %v669
    %v671 = vmul.f32 %v668, %v670
    %v672 = vadd.f32 %v668, %v671
    %vm673 = vweird.f32 %v652
    %vm674 = vweird.f32 %v668
    %vm675 = vmor %vm673, %vm674
    %v676 = vsel %vm675, %v668, %v672
    %v677 = vand.u32 2147483647, %v652
    %vm678 = vcmp.eq.f32.partialorder %v677, 8.507059e+37
    %v679 = vand.u32 %v652, 2147483648
    %v680 = vor.u32 1.1754944e-38, %v679
    %v681 = vsel %vm678, %v680, %v676
    %v682 = vmul.f32 1.0, %v681
    %v683 = vtanh.pop %v643
    %v684 = vtanh.pop %v644
    %v685 = vmul.f32 %v667, %v543
    %687 = vrot.lane.b32.xlu0 %v683, 64
    %v688 = vpop.permute.xlu0 %687
    %v690 = vmul.f32 %v667, %v688
    %692 = vrot.lane.b32.xlu0 %v690, 32
    %v693 = vpop.permute.xlu0 %692
    %v695 = vadd.f32 %v685, %v693
    %v696 = vmul.f32 %v682, %v554
    %698 = vrot.lane.b32.xlu0 %v684, 64
    %v699 = vpop.permute.xlu0 %698
    %v701 = vmul.f32 %v682, %v699
    %703 = vrot.lane.b32.xlu0 %v701, 32
    %v704 = vpop.permute.xlu0 %703
    %v706 = vadd.f32 %v696, %v704
    %708 = vrot.lane.b32.xlu0 %v695, 96
    %v709 = vpop.permute.xlu0 %708
    %v711 = vsel %vm125, %v709, %v706
    %v712 = vtanh.pop %v711
    %714 = vrot.lane.b32.xlu0 %v712, 96
    %v715 = vpop.permute.xlu0 %714
    %v717 = vmul.f32 %v667, %v715
    %718 = vrot.lane.b32.xlu0 %v712, 64
    %v719 = vpop.permute.xlu0 %718
    %v721 = vmul.f32 %v682, %v719
    %v723 = vrot.slane %v717, 1
    %v724 = vperm.slane %v717, 0
    %v725 = vperm.slane %v723, 0
    %726 = vrot.lane.b32.xlu0 %v724, 32
    %v727 = vpop.permute.xlu0 %726
    %728 = vrot.lane.b32.xlu0 %v725, 32
    %v729 = vpop.permute.xlu0 %728
    %732 = vst.msk [vmem:[#allocation4 + $0x2] sm:$0x1] %vm426, %v727
    %733 = vst.msk [vmem:[#allocation4 + $0xa] sm:$0x1] %vm426, %v729
    %v735 = vrot.slane %v721, 1
    %v736 = vperm.slane %v721, 0
    %v737 = vperm.slane %v735, 0
    %738 = vrot.lane.b32.xlu0 %v736, 64
    %v739 = vpop.permute.xlu0 %738
    %740 = vrot.lane.b32.xlu0 %v737, 64
    %v741 = vpop.permute.xlu0 %740
    %744 = vst.msk [vmem:[#allocation4 + $0x5] sm:$0x1] %vm439, %v739
    %745 = vst.msk [vmem:[#allocation4 + $0xd] sm:$0x1] %vm439, %v741
    %v746 = vld [vmem:[#allocation3 + $0x3] ss:$0 sm:$0xff]
    %v747 = vld [vmem:[#allocation3 + $0x13] ss:$0 sm:$0xff]
    %v748 = vld [vmem:[#allocation3 + $0xc] ss:$0 sm:$0xff]
    %v749 = vld [vmem:[#allocation3 + $0x1c] ss:$0 sm:$0xff]
    %v752 = vsel %vm259, %v747, %v746
    %v756 = vsel %vm259, %v749, %v748
    %758 = vrot.lane.b32.xlu0 %v717, 32
    %v759 = vpop.permute.xlu0 %758
    %761 = vrot.lane.b32.xlu0 %v721, 64
    %v762 = vpop.permute.xlu0 %761
    %v764 = vsel %vm125, %v759, %v762
    %v765 = vpack.c.bf16 %v764, %v764
    %v767 = vsel %vm307, %v765, 0
    %769 = vmatpush.bf16.msra.mxu0 0
    %770 = vmatpush.bf16.msra.mxu0 0
    %771 = vmatpush.bf16.msra.mxu0 0
    %772 = vmatpush.bf16.msra.mxu0 0
    %773 = vmatpush.bf16.msra.mxu0 %v297
    %774 = vmatpush.bf16.msra.mxu0 %v295
    %775 = vmatpush.bf16.msra.mxu0 %v293
    %776 = vmatpush.bf16.msra.mxu0 %v291
    %777 = vmatmul.bf16.gmra.mxu0 %v767
    %v778 = vpop.f32.mrf.mxu0
    %v779 = vadd.f32 0.0, %v778
    %v780 = vpop.f32.mrf.mxu0
    %781 = vdwg.mxu0
    %782 = vmatpush.bf16.msra.mxu0 0
    %783 = vmatpush.bf16.msra.mxu0 0
    %784 = vmatpush.bf16.msra.mxu0 0
    %785 = vmatpush.bf16.msra.mxu0 0
    %786 = vmatpush.bf16.msra.mxu0 %v298
    %787 = vmatpush.bf16.msra.mxu0 %v296
    %788 = vmatpush.bf16.msra.mxu0 %v294
    %789 = vmatpush.bf16.msra.mxu0 %v292
    %790 = vmatmul.bf16.gmra.mxu0 %v767
    %v791 = vpop.f32.mrf.mxu0
    %v792 = vadd.f32 0.0, %v791
    %v793 = vpop.f32.mrf.mxu0
    %794 = vdwg.mxu0
    %v795 = vadd.f32 %v752, %v779
    %v796 = vadd.f32 %v756, %v792
    %v797 = vxor.u32 %v795, 2147483648
    %v798 = vxor.u32 %v796, 2147483648
    %v799 = vmul.f32 %v797, 1.442695
    %v800 = vpow.pop %v799
    %v801 = vmul.f32 %v798, 1.442695
    %v802 = vpow.pop %v801
    %v803 = vadd.f32 %v800, 1.0
    %v804 = vadd.f32 %v802, 1.0
    %v805 = vrcp.pop %v803
    %v806 = vmul.f32 %v803, %v805
    %v807 = vsub.f32 1.0, %v806
    %v808 = vmul.f32 %v805, %v807
    %v809 = vadd.f32 %v805, %v808
    %vm810 = vweird.f32 %v803
    %vm811 = vweird.f32 %v805
    %vm812 = vmor %vm810, %vm811
    %v813 = vsel %vm812, %v805, %v809
    %v814 = vand.u32 2147483647, %v803
    %vm815 = vcmp.eq.f32.partialorder %v814, 8.507059e+37
    %v816 = vand.u32 %v803, 2147483648
    %v817 = vor.u32 1.1754944e-38, %v816
    %v818 = vsel %vm815, %v817, %v813
    %v819 = vmul.f32 1.0, %v818
    %v820 = vrcp.pop %v804
    %v821 = vmul.f32 %v804, %v820
    %v822 = vsub.f32 1.0, %v821
    %v823 = vmul.f32 %v820, %v822
    %v824 = vadd.f32 %v820, %v823
    %vm825 = vweird.f32 %v804
    %vm826 = vweird.f32 %v820
    %vm827 = vmor %vm825, %vm826
    %v828 = vsel %vm827, %v820, %v824
    %v829 = vand.u32 2147483647, %v804
    %vm830 = vcmp.eq.f32.partialorder %v829, 8.507059e+37
    %v831 = vand.u32 %v804, 2147483648
    %v832 = vor.u32 1.1754944e-38, %v831
    %v833 = vsel %vm830, %v832, %v828
    %v834 = vmul.f32 1.0, %v833
    %v835 = vtanh.pop %v795
    %v836 = vtanh.pop %v796
    %v837 = vmul.f32 %v819, %v695
    %839 = vrot.lane.b32.xlu0 %v835, 64
    %v840 = vpop.permute.xlu0 %839
    %v842 = vmul.f32 %v819, %v840
    %844 = vrot.lane.b32.xlu0 %v842, 32
    %v845 = vpop.permute.xlu0 %844
    %v847 = vadd.f32 %v837, %v845
    %v848 = vmul.f32 %v834, %v706
    %850 = vrot.lane.b32.xlu0 %v836, 64
    %v851 = vpop.permute.xlu0 %850
    %v853 = vmul.f32 %v834, %v851
    %855 = vrot.lane.b32.xlu0 %v853, 32
    %v856 = vpop.permute.xlu0 %855
    %v858 = vadd.f32 %v848, %v856
    %860 = vrot.lane.b32.xlu0 %v847, 96
    %v861 = vpop.permute.xlu0 %860
    %v863 = vsel %vm125, %v861, %v858
    %v864 = vtanh.pop %v863
    %866 = vrot.lane.b32.xlu0 %v864, 96
    %v867 = vpop.permute.xlu0 %866
    %v869 = vmul.f32 %v819, %v867
    %870 = vrot.lane.b32.xlu0 %v864, 64
    %v871 = vpop.permute.xlu0 %870
    %v873 = vmul.f32 %v834, %v871
    %v875 = vrot.slane %v869, 1
    %v876 = vperm.slane %v869, 0
    %v877 = vperm.slane %v875, 0
    %878 = vrot.lane.b32.xlu0 %v876, 32
    %v879 = vpop.permute.xlu0 %878
    %880 = vrot.lane.b32.xlu0 %v877, 32
    %v881 = vpop.permute.xlu0 %880
    %884 = vst.msk [vmem:[#allocation4 + $0x3] sm:$0x1] %vm426, %v879
    %885 = vst.msk [vmem:[#allocation4 + $0xb] sm:$0x1] %vm426, %v881
    %v887 = vrot.slane %v873, 1
    %v888 = vperm.slane %v873, 0
    %v889 = vperm.slane %v887, 0
    %890 = vrot.lane.b32.xlu0 %v888, 64
    %v891 = vpop.permute.xlu0 %890
    %892 = vrot.lane.b32.xlu0 %v889, 64
    %v893 = vpop.permute.xlu0 %892
    %896 = vst.msk [vmem:[#allocation4 + $0x4] sm:$0x1] %vm439, %v891
    %897 = vst.msk [vmem:[#allocation4 + $0xc] sm:$0x1] %vm439, %v893
    %v898 = vld [vmem:[#allocation3 + $0x4] ss:$0 sm:$0xff]
    %v899 = vld [vmem:[#allocation3 + $0x14] ss:$0 sm:$0xff]
    %v900 = vld [vmem:[#allocation3 + $0xb] ss:$0 sm:$0xff]
    %v901 = vld [vmem:[#allocation3 + $0x1b] ss:$0 sm:$0xff]
    %v904 = vsel %vm259, %v899, %v898
    %v908 = vsel %vm259, %v901, %v900
    %910 = vrot.lane.b32.xlu0 %v869, 32
    %v911 = vpop.permute.xlu0 %910
    %913 = vrot.lane.b32.xlu0 %v873, 64
    %v914 = vpop.permute.xlu0 %913
    %v916 = vsel %vm125, %v911, %v914
    %v917 = vpack.c.bf16 %v916, %v916
    %v919 = vsel %vm307, %v917, 0
    %921 = vmatpush.bf16.msra.mxu0 0
    %922 = vmatpush.bf16.msra.mxu0 0
    %923 = vmatpush.bf16.msra.mxu0 0
    %924 = vmatpush.bf16.msra.mxu0 0
    %925 = vmatpush.bf16.msra.mxu0 %v297
    %926 = vmatpush.bf16.msra.mxu0 %v295
    %927 = vmatpush.bf16.msra.mxu0 %v293
    %928 = vmatpush.bf16.msra.mxu0 %v291
    %929 = vmatmul.bf16.gmra.mxu0 %v919
    %v930 = vpop.f32.mrf.mxu0
    %v931 = vadd.f32 0.0, %v930
    %v932 = vpop.f32.mrf.mxu0
    %933 = vdwg.mxu0
    %934 = vmatpush.bf16.msra.mxu0 0
    %935 = vmatpush.bf16.msra.mxu0 0
    %936 = vmatpush.bf16.msra.mxu0 0
    %937 = vmatpush.bf16.msra.mxu0 0
    %938 = vmatpush.bf16.msra.mxu0 %v298
    %939 = vmatpush.bf16.msra.mxu0 %v296
    %940 = vmatpush.bf16.msra.mxu0 %v294
    %941 = vmatpush.bf16.msra.mxu0 %v292
    %942 = vmatmul.bf16.gmra.mxu0 %v919
    %v943 = vpop.f32.mrf.mxu0
    %v944 = vadd.f32 0.0, %v943
    %v945 = vpop.f32.mrf.mxu0
    %946 = vdwg.mxu0
    %v947 = vadd.f32 %v904, %v931
    %v948 = vadd.f32 %v908, %v944
    %v949 = vxor.u32 %v947, 2147483648
    %v950 = vxor.u32 %v948, 2147483648
    %v951 = vmul.f32 %v949, 1.442695
    %v952 = vpow.pop %v951
    %v953 = vmul.f32 %v950, 1.442695
    %v954 = vpow.pop %v953
    %v955 = vadd.f32 %v952, 1.0
    %v956 = vadd.f32 %v954, 1.0
    %v957 = vrcp.pop %v955
    %v958 = vmul.f32 %v955, %v957
    %v959 = vsub.f32 1.0, %v958
    %v960 = vmul.f32 %v957, %v959
    %v961 = vadd.f32 %v957, %v960
    %vm962 = vweird.f32 %v955
    %vm963 = vweird.f32 %v957
    %vm964 = vmor %vm962, %vm963
    %v965 = vsel %vm964, %v957, %v961
    %v966 = vand.u32 2147483647, %v955
    %vm967 = vcmp.eq.f32.partialorder %v966, 8.507059e+37
    %v968 = vand.u32 %v955, 2147483648
    %v969 = vor.u32 1.1754944e-38, %v968
    %v970 = vsel %vm967, %v969, %v965
    %v971 = vmul.f32 1.0, %v970
    %v972 = vrcp.pop %v956
    %v973 = vmul.f32 %v956, %v972
    %v974 = vsub.f32 1.0, %v973
    %v975 = vmul.f32 %v972, %v974
    %v976 = vadd.f32 %v972, %v975
    %vm977 = vweird.f32 %v956
    %vm978 = vweird.f32 %v972
    %vm979 = vmor %vm977, %vm978
    %v980 = vsel %vm979, %v972, %v976
    %v981 = vand.u32 2147483647, %v956
    %vm982 = vcmp.eq.f32.partialorder %v981, 8.507059e+37
    %v983 = vand.u32 %v956, 2147483648
    %v984 = vor.u32 1.1754944e-38, %v983
    %v985 = vsel %vm982, %v984, %v980
    %v986 = vmul.f32 1.0, %v985
    %v987 = vtanh.pop %v947
    %v988 = vtanh.pop %v948
    %v989 = vmul.f32 %v971, %v847
    %991 = vrot.lane.b32.xlu0 %v987, 64
    %v992 = vpop.permute.xlu0 %991
    %v994 = vmul.f32 %v971, %v992
    %996 = vrot.lane.b32.xlu0 %v994, 32
    %v997 = vpop.permute.xlu0 %996
    %v999 = vadd.f32 %v989, %v997
    %v1000 = vmul.f32 %v986, %v858
    %1002 = vrot.lane.b32.xlu0 %v988, 64
    %v1003 = vpop.permute.xlu0 %1002
    %v1005 = vmul.f32 %v986, %v1003
    %1007 = vrot.lane.b32.xlu0 %v1005, 32
    %v1008 = vpop.permute.xlu0 %1007
    %v1010 = vadd.f32 %v1000, %v1008
    %1012 = vrot.lane.b32.xlu0 %v999, 96
    %v1013 = vpop.permute.xlu0 %1012
    %v1015 = vsel %vm125, %v1013, %v1010
    %v1016 = vtanh.pop %v1015
    %1018 = vrot.lane.b32.xlu0 %v1016, 96
    %v1019 = vpop.permute.xlu0 %1018
    %v1021 = vmul.f32 %v971, %v1019
    %1022 = vrot.lane.b32.xlu0 %v1016, 64
    %v1023 = vpop.permute.xlu0 %1022
    %v1025 = vmul.f32 %v986, %v1023
    %v1027 = vrot.slane %v1021, 1
    %v1028 = vperm.slane %v1021, 0
    %v1029 = vperm.slane %v1027, 0
    %1030 = vrot.lane.b32.xlu0 %v1028, 32
    %v1031 = vpop.permute.xlu0 %1030
    %1032 = vrot.lane.b32.xlu0 %v1029, 32
    %v1033 = vpop.permute.xlu0 %1032
    %1036 = vst.msk [vmem:[#allocation4 + $0x4] sm:$0x1] %vm426, %v1031
    %1037 = vst.msk [vmem:[#allocation4 + $0xc] sm:$0x1] %vm426, %v1033
    %v1039 = vrot.slane %v1025, 1
    %v1040 = vperm.slane %v1025, 0
    %v1041 = vperm.slane %v1039, 0
    %1042 = vrot.lane.b32.xlu0 %v1040, 64
    %v1043 = vpop.permute.xlu0 %1042
    %1044 = vrot.lane.b32.xlu0 %v1041, 64
    %v1045 = vpop.permute.xlu0 %1044
    %1048 = vst.msk [vmem:[#allocation4 + $0x3] sm:$0x1] %vm439, %v1043
    %1049 = vst.msk [vmem:[#allocation4 + $0xb] sm:$0x1] %vm439, %v1045
    %v1050 = vld [vmem:[#allocation3 + $0x5] ss:$0 sm:$0xff]
    %v1051 = vld [vmem:[#allocation3 + $0x15] ss:$0 sm:$0xff]
    %v1052 = vld [vmem:[#allocation3 + $0xa] ss:$0 sm:$0xff]
    %v1053 = vld [vmem:[#allocation3 + $0x1a] ss:$0 sm:$0xff]
    %v1056 = vsel %vm259, %v1051, %v1050
    %v1060 = vsel %vm259, %v1053, %v1052
    %1062 = vrot.lane.b32.xlu0 %v1021, 32
    %v1063 = vpop.permute.xlu0 %1062
    %1065 = vrot.lane.b32.xlu0 %v1025, 64
    %v1066 = vpop.permute.xlu0 %1065
    %v1068 = vsel %vm125, %v1063, %v1066
    %v1069 = vpack.c.bf16 %v1068, %v1068
    %v1071 = vsel %vm307, %v1069, 0
    %1073 = vmatpush.bf16.msra.mxu0 0
    %1074 = vmatpush.bf16.msra.mxu0 0
    %1075 = vmatpush.bf16.msra.mxu0 0
    %1076 = vmatpush.bf16.msra.mxu0 0
    %1077 = vmatpush.bf16.msra.mxu0 %v297
    %1078 = vmatpush.bf16.msra.mxu0 %v295
    %1079 = vmatpush.bf16.msra.mxu0 %v293
    %1080 = vmatpush.bf16.msra.mxu0 %v291
    %1081 = vmatmul.bf16.gmra.mxu0 %v1071
    %v1082 = vpop.f32.mrf.mxu0
    %v1083 = vadd.f32 0.0, %v1082
    %v1084 = vpop.f32.mrf.mxu0
    %1085 = vdwg.mxu0
    %1086 = vmatpush.bf16.msra.mxu0 0
    %1087 = vmatpush.bf16.msra.mxu0 0
    %1088 = vmatpush.bf16.msra.mxu0 0
    %1089 = vmatpush.bf16.msra.mxu0 0
    %1090 = vmatpush.bf16.msra.mxu0 %v298
    %1091 = vmatpush.bf16.msra.mxu0 %v296
    %1092 = vmatpush.bf16.msra.mxu0 %v294
    %1093 = vmatpush.bf16.msra.mxu0 %v292
    %1094 = vmatmul.bf16.gmra.mxu0 %v1071
    %v1095 = vpop.f32.mrf.mxu0
    %v1096 = vadd.f32 0.0, %v1095
    %v1097 = vpop.f32.mrf.mxu0
    %1098 = vdwg.mxu0
    %v1099 = vadd.f32 %v1056, %v1083
    %v1100 = vadd.f32 %v1060, %v1096
    %v1101 = vxor.u32 %v1099, 2147483648
    %v1102 = vxor.u32 %v1100, 2147483648
    %v1103 = vmul.f32 %v1101, 1.442695
    %v1104 = vpow.pop %v1103
    %v1105 = vmul.f32 %v1102, 1.442695
    %v1106 = vpow.pop %v1105
    %v1107 = vadd.f32 %v1104, 1.0
    %v1108 = vadd.f32 %v1106, 1.0
    %v1109 = vrcp.pop %v1107
    %v1110 = vmul.f32 %v1107, %v1109
    %v1111 = vsub.f32 1.0, %v1110
    %v1112 = vmul.f32 %v1109, %v1111
    %v1113 = vadd.f32 %v1109, %v1112
    %vm1114 = vweird.f32 %v1107
    %vm1115 = vweird.f32 %v1109
    %vm1116 = vmor %vm1114, %vm1115
    %v1117 = vsel %vm1116, %v1109, %v1113
    %v1118 = vand.u32 2147483647, %v1107
    %vm1119 = vcmp.eq.f32.partialorder %v1118, 8.507059e+37
    %v1120 = vand.u32 %v1107, 2147483648
    %v1121 = vor.u32 1.1754944e-38, %v1120
    %v1122 = vsel %vm1119, %v1121, %v1117
    %v1123 = vmul.f32 1.0, %v1122
    %v1124 = vrcp.pop %v1108
    %v1125 = vmul.f32 %v1108, %v1124
    %v1126 = vsub.f32 1.0, %v1125
    %v1127 = vmul.f32 %v1124, %v1126
    %v1128 = vadd.f32 %v1124, %v1127
    %vm1129 = vweird.f32 %v1108
    %vm1130 = vweird.f32 %v1124
    %vm1131 = vmor %vm1129, %vm1130
    %v1132 = vsel %vm1131, %v1124, %v1128
    %v1133 = vand.u32 2147483647, %v1108
    %vm1134 = vcmp.eq.f32.partialorder %v1133, 8.507059e+37
    %v1135 = vand.u32 %v1108, 2147483648
    %v1136 = vor.u32 1.1754944e-38, %v1135
    %v1137 = vsel %vm1134, %v1136, %v1132
    %v1138 = vmul.f32 1.0, %v1137
    %v1139 = vtanh.pop %v1099
    %v1140 = vtanh.pop %v1100
    %v1141 = vmul.f32 %v1123, %v999
    %1143 = vrot.lane.b32.xlu0 %v1139, 64
    %v1144 = vpop.permute.xlu0 %1143
    %v1146 = vmul.f32 %v1123, %v1144
    %1148 = vrot.lane.b32.xlu0 %v1146, 32
    %v1149 = vpop.permute.xlu0 %1148
    %v1151 = vadd.f32 %v1141, %v1149
    %v1152 = vmul.f32 %v1138, %v1010
    %1154 = vrot.lane.b32.xlu0 %v1140, 64
    %v1155 = vpop.permute.xlu0 %1154
    %v1157 = vmul.f32 %v1138, %v1155
    %1159 = vrot.lane.b32.xlu0 %v1157, 32
    %v1160 = vpop.permute.xlu0 %1159
    %v1162 = vadd.f32 %v1152, %v1160
    %1164 = vrot.lane.b32.xlu0 %v1151, 96
    %v1165 = vpop.permute.xlu0 %1164
    %v1167 = vsel %vm125, %v1165, %v1162
    %v1168 = vtanh.pop %v1167
    %1170 = vrot.lane.b32.xlu0 %v1168, 96
    %v1171 = vpop.permute.xlu0 %1170
    %v1173 = vmul.f32 %v1123, %v1171
    %1174 = vrot.lane.b32.xlu0 %v1168, 64
    %v1175 = vpop.permute.xlu0 %1174
    %v1177 = vmul.f32 %v1138, %v1175
    %v1179 = vrot.slane %v1173, 1
    %v1180 = vperm.slane %v1173, 0
    %v1181 = vperm.slane %v1179, 0
    %1182 = vrot.lane.b32.xlu0 %v1180, 32
    %v1183 = vpop.permute.xlu0 %1182
    %1184 = vrot.lane.b32.xlu0 %v1181, 32
    %v1185 = vpop.permute.xlu0 %1184
    %1188 = vst.msk [vmem:[#allocation4 + $0x5] sm:$0x1] %vm426, %v1183
    %1189 = vst.msk [vmem:[#allocation4 + $0xd] sm:$0x1] %vm426, %v1185
    %v1191 = vrot.slane %v1177, 1
    %v1192 = vperm.slane %v1177, 0
    %v1193 = vperm.slane %v1191, 0
    %1194 = vrot.lane.b32.xlu0 %v1192, 64
    %v1195 = vpop.permute.xlu0 %1194
    %1196 = vrot.lane.b32.xlu0 %v1193, 64
    %v1197 = vpop.permute.xlu0 %1196
    %1200 = vst.msk [vmem:[#allocation4 + $0x2] sm:$0x1] %vm439, %v1195
    %1201 = vst.msk [vmem:[#allocation4 + $0xa] sm:$0x1] %vm439, %v1197
    %v1202 = vld [vmem:[#allocation3 + $0x6] ss:$0 sm:$0xff]
    %v1203 = vld [vmem:[#allocation3 + $0x16] ss:$0 sm:$0xff]
    %v1204 = vld [vmem:[#allocation3 + $0x9] ss:$0 sm:$0xff]
    %v1205 = vld [vmem:[#allocation3 + $0x19] ss:$0 sm:$0xff]
    %v1208 = vsel %vm259, %v1203, %v1202
    %v1212 = vsel %vm259, %v1205, %v1204
    %1214 = vrot.lane.b32.xlu0 %v1173, 32
    %v1215 = vpop.permute.xlu0 %1214
    %1217 = vrot.lane.b32.xlu0 %v1177, 64
    %v1218 = vpop.permute.xlu0 %1217
    %v1220 = vsel %vm125, %v1215, %v1218
    %v1221 = vpack.c.bf16 %v1220, %v1220
    %v1223 = vsel %vm307, %v1221, 0
    %1225 = vmatpush.bf16.msra.mxu0 0
    %1226 = vmatpush.bf16.msra.mxu0 0
    %1227 = vmatpush.bf16.msra.mxu0 0
    %1228 = vmatpush.bf16.msra.mxu0 0
    %1229 = vmatpush.bf16.msra.mxu0 %v297
    %1230 = vmatpush.bf16.msra.mxu0 %v295
    %1231 = vmatpush.bf16.msra.mxu0 %v293
    %1232 = vmatpush.bf16.msra.mxu0 %v291
    %1233 = vmatmul.bf16.gmra.mxu0 %v1223
    %v1234 = vpop.f32.mrf.mxu0
    %v1235 = vadd.f32 0.0, %v1234
    %v1236 = vpop.f32.mrf.mxu0
    %1237 = vdwg.mxu0
    %1238 = vmatpush.bf16.msra.mxu0 0
    %1239 = vmatpush.bf16.msra.mxu0 0
    %1240 = vmatpush.bf16.msra.mxu0 0
    %1241 = vmatpush.bf16.msra.mxu0 0
    %1242 = vmatpush.bf16.msra.mxu0 %v298
    %1243 = vmatpush.bf16.msra.mxu0 %v296
    %1244 = vmatpush.bf16.msra.mxu0 %v294
    %1245 = vmatpush.bf16.msra.mxu0 %v292
    %1246 = vmatmul.bf16.gmra.mxu0 %v1223
    %v1247 = vpop.f32.mrf.mxu0
    %v1248 = vadd.f32 0.0, %v1247
    %v1249 = vpop.f32.mrf.mxu0
    %1250 = vdwg.mxu0
    %v1251 = vadd.f32 %v1208, %v1235
    %v1252 = vadd.f32 %v1212, %v1248
    %v1253 = vxor.u32 %v1251, 2147483648
    %v1254 = vxor.u32 %v1252, 2147483648
    %v1255 = vmul.f32 %v1253, 1.442695
    %v1256 = vpow.pop %v1255
    %v1257 = vmul.f32 %v1254, 1.442695
    %v1258 = vpow.pop %v1257
    %v1259 = vadd.f32 %v1256, 1.0
    %v1260 = vadd.f32 %v1258, 1.0
    %v1261 = vrcp.pop %v1259
    %v1262 = vmul.f32 %v1259, %v1261
    %v1263 = vsub.f32 1.0, %v1262
    %v1264 = vmul.f32 %v1261, %v1263
    %v1265 = vadd.f32 %v1261, %v1264
    %vm1266 = vweird.f32 %v1259
    %vm1267 = vweird.f32 %v1261
    %vm1268 = vmor %vm1266, %vm1267
    %v1269 = vsel %vm1268, %v1261, %v1265
    %v1270 = vand.u32 2147483647, %v1259
    %vm1271 = vcmp.eq.f32.partialorder %v1270, 8.507059e+37
    %v1272 = vand.u32 %v1259, 2147483648
    %v1273 = vor.u32 1.1754944e-38, %v1272
    %v1274 = vsel %vm1271, %v1273, %v1269
    %v1275 = vmul.f32 1.0, %v1274
    %v1276 = vrcp.pop %v1260
    %v1277 = vmul.f32 %v1260, %v1276
    %v1278 = vsub.f32 1.0, %v1277
    %v1279 = vmul.f32 %v1276, %v1278
    %v1280 = vadd.f32 %v1276, %v1279
    %vm1281 = vweird.f32 %v1260
    %vm1282 = vweird.f32 %v1276
    %vm1283 = vmor %vm1281, %vm1282
    %v1284 = vsel %vm1283, %v1276, %v1280
    %v1285 = vand.u32 2147483647, %v1260
    %vm1286 = vcmp.eq.f32.partialorder %v1285, 8.507059e+37
    %v1287 = vand.u32 %v1260, 2147483648
    %v1288 = vor.u32 1.1754944e-38, %v1287
    %v1289 = vsel %vm1286, %v1288, %v1284
    %v1290 = vmul.f32 1.0, %v1289
    %v1291 = vtanh.pop %v1251
    %v1292 = vtanh.pop %v1252
    %v1293 = vmul.f32 %v1275, %v1151
    %1295 = vrot.lane.b32.xlu0 %v1291, 64
    %v1296 = vpop.permute.xlu0 %1295
    %v1298 = vmul.f32 %v1275, %v1296
    %1300 = vrot.lane.b32.xlu0 %v1298, 32
    %v1301 = vpop.permute.xlu0 %1300
    %v1303 = vadd.f32 %v1293, %v1301
    %v1304 = vmul.f32 %v1290, %v1162
    %1306 = vrot.lane.b32.xlu0 %v1292, 64
    %v1307 = vpop.permute.xlu0 %1306
    %v1309 = vmul.f32 %v1290, %v1307
    %1311 = vrot.lane.b32.xlu0 %v1309, 32
    %v1312 = vpop.permute.xlu0 %1311
    %v1314 = vadd.f32 %v1304, %v1312
    %1316 = vrot.lane.b32.xlu0 %v1303, 96
    %v1317 = vpop.permute.xlu0 %1316
    %v1319 = vsel %vm125, %v1317, %v1314
    %v1320 = vtanh.pop %v1319
    %1322 = vrot.lane.b32.xlu0 %v1320, 96
    %v1323 = vpop.permute.xlu0 %1322
    %v1325 = vmul.f32 %v1275, %v1323
    %1326 = vrot.lane.b32.xlu0 %v1320, 64
    %v1327 = vpop.permute.xlu0 %1326
    %v1329 = vmul.f32 %v1290, %v1327
    %v1331 = vrot.slane %v1325, 1
    %v1332 = vperm.slane %v1325, 0
    %v1333 = vperm.slane %v1331, 0
    %1334 = vrot.lane.b32.xlu0 %v1332, 32
    %v1335 = vpop.permute.xlu0 %1334
    %1336 = vrot.lane.b32.xlu0 %v1333, 32
    %v1337 = vpop.permute.xlu0 %1336
    %1340 = vst.msk [vmem:[#allocation4 + $0x6] sm:$0x1] %vm426, %v1335
    %1341 = vst.msk [vmem:[#allocation4 + $0xe] sm:$0x1] %vm426, %v1337
    %v1343 = vrot.slane %v1329, 1
    %v1344 = vperm.slane %v1329, 0
    %v1345 = vperm.slane %v1343, 0
    %1346 = vrot.lane.b32.xlu0 %v1344, 64
    %v1347 = vpop.permute.xlu0 %1346
    %1348 = vrot.lane.b32.xlu0 %v1345, 64
    %v1349 = vpop.permute.xlu0 %1348
    %1352 = vst.msk [vmem:[#allocation4 + $0x1] sm:$0x1] %vm439, %v1347
    %1353 = vst.msk [vmem:[#allocation4 + $0x9] sm:$0x1] %vm439, %v1349
    %v1354 = vld [vmem:[#allocation3 + $0x7] ss:$0 sm:$0xff]
    %v1355 = vld [vmem:[#allocation3 + $0x17] ss:$0 sm:$0xff]
    %v1356 = vld [vmem:[#allocation3 + $0x8] ss:$0 sm:$0xff]
    %v1357 = vld [vmem:[#allocation3 + $0x18] ss:$0 sm:$0xff]
    %v1360 = vsel %vm259, %v1355, %v1354
    %v1364 = vsel %vm259, %v1357, %v1356
    %1366 = vrot.lane.b32.xlu0 %v1325, 32
    %v1367 = vpop.permute.xlu0 %1366
    %1369 = vrot.lane.b32.xlu0 %v1329, 64
    %v1370 = vpop.permute.xlu0 %1369
    %v1372 = vsel %vm125, %v1367, %v1370
    %v1373 = vpack.c.bf16 %v1372, %v1372
    %v1375 = vsel %vm307, %v1373, 0
    %1377 = vmatpush.bf16.msra.mxu0 0
    %1378 = vmatpush.bf16.msra.mxu0 0
    %1379 = vmatpush.bf16.msra.mxu0 0
    %1380 = vmatpush.bf16.msra.mxu0 0
    %1381 = vmatpush.bf16.msra.mxu0 %v297
    %1382 = vmatpush.bf16.msra.mxu0 %v295
    %1383 = vmatpush.bf16.msra.mxu0 %v293
    %1384 = vmatpush.bf16.msra.mxu0 %v291
    %1385 = vmatmul.bf16.gmra.mxu0 %v1375
    %v1386 = vpop.f32.mrf.mxu0
    %v1387 = vadd.f32 0.0, %v1386
    %v1388 = vpop.f32.mrf.mxu0
    %1389 = vdwg.mxu0
    %1390 = vmatpush.bf16.msra.mxu0 0
    %1391 = vmatpush.bf16.msra.mxu0 0
    %1392 = vmatpush.bf16.msra.mxu0 0
    %1393 = vmatpush.bf16.msra.mxu0 0
    %1394 = vmatpush.bf16.msra.mxu0 %v298
    %1395 = vmatpush.bf16.msra.mxu0 %v296
    %1396 = vmatpush.bf16.msra.mxu0 %v294
    %1397 = vmatpush.bf16.msra.mxu0 %v292
    %1398 = vmatmul.bf16.gmra.mxu0 %v1375
    %v1399 = vpop.f32.mrf.mxu0
    %v1400 = vadd.f32 0.0, %v1399
    %v1401 = vpop.f32.mrf.mxu0
    %1402 = vdwg.mxu0
    %v1403 = vadd.f32 %v1360, %v1387
    %v1404 = vadd.f32 %v1364, %v1400
    %v1405 = vxor.u32 %v1403, 2147483648
    %v1406 = vxor.u32 %v1404, 2147483648
    %v1407 = vmul.f32 %v1405, 1.442695
    %v1408 = vpow.pop %v1407
    %v1409 = vmul.f32 %v1406, 1.442695
    %v1410 = vpow.pop %v1409
    %v1411 = vadd.f32 %v1408, 1.0
    %v1412 = vadd.f32 %v1410, 1.0
    %v1413 = vrcp.pop %v1411
    %v1414 = vmul.f32 %v1411, %v1413
    %v1415 = vsub.f32 1.0, %v1414
    %v1416 = vmul.f32 %v1413, %v1415
    %v1417 = vadd.f32 %v1413, %v1416
    %vm1418 = vweird.f32 %v1411
    %vm1419 = vweird.f32 %v1413
    %vm1420 = vmor %vm1418, %vm1419
    %v1421 = vsel %vm1420, %v1413, %v1417
    %v1422 = vand.u32 2147483647, %v1411
    %vm1423 = vcmp.eq.f32.partialorder %v1422, 8.507059e+37
    %v1424 = vand.u32 %v1411, 2147483648
    %v1425 = vor.u32 1.1754944e-38, %v1424
    %v1426 = vsel %vm1423, %v1425, %v1421
    %v1427 = vmul.f32 1.0, %v1426
    %v1428 = vrcp.pop %v1412
    %v1429 = vmul.f32 %v1412, %v1428
    %v1430 = vsub.f32 1.0, %v1429
    %v1431 = vmul.f32 %v1428, %v1430
    %v1432 = vadd.f32 %v1428, %v1431
    %vm1433 = vweird.f32 %v1412
    %vm1434 = vweird.f32 %v1428
    %vm1435 = vmor %vm1433, %vm1434
    %v1436 = vsel %vm1435, %v1428, %v1432
    %v1437 = vand.u32 2147483647, %v1412
    %vm1438 = vcmp.eq.f32.partialorder %v1437, 8.507059e+37
    %v1439 = vand.u32 %v1412, 2147483648
    %v1440 = vor.u32 1.1754944e-38, %v1439
    %v1441 = vsel %vm1438, %v1440, %v1436
    %v1442 = vmul.f32 1.0, %v1441
    %v1443 = vtanh.pop %v1403
    %v1444 = vtanh.pop %v1404
    %v1445 = vmul.f32 %v1427, %v1303
    %1447 = vrot.lane.b32.xlu0 %v1443, 64
    %v1448 = vpop.permute.xlu0 %1447
    %v1450 = vmul.f32 %v1427, %v1448
    %1452 = vrot.lane.b32.xlu0 %v1450, 32
    %v1453 = vpop.permute.xlu0 %1452
    %v1455 = vadd.f32 %v1445, %v1453
    %v1456 = vmul.f32 %v1442, %v1314
    %1458 = vrot.lane.b32.xlu0 %v1444, 64
    %v1459 = vpop.permute.xlu0 %1458
    %v1461 = vmul.f32 %v1442, %v1459
    %1463 = vrot.lane.b32.xlu0 %v1461, 32
    %v1464 = vpop.permute.xlu0 %1463
    %v1466 = vadd.f32 %v1456, %v1464
    %1468 = vrot.lane.b32.xlu0 %v1455, 96
    %v1469 = vpop.permute.xlu0 %1468
    %v1471 = vsel %vm125, %v1469, %v1466
    %v1472 = vtanh.pop %v1471
    %1474 = vrot.lane.b32.xlu0 %v1472, 96
    %v1475 = vpop.permute.xlu0 %1474
    %v1477 = vmul.f32 %v1427, %v1475
    %1478 = vrot.lane.b32.xlu0 %v1472, 64
    %v1479 = vpop.permute.xlu0 %1478
    %v1481 = vmul.f32 %v1442, %v1479
    %v1483 = vrot.slane %v1477, 1
    %v1484 = vperm.slane %v1477, 0
    %v1485 = vperm.slane %v1483, 0
    %1486 = vrot.lane.b32.xlu0 %v1484, 32
    %v1487 = vpop.permute.xlu0 %1486
    %1488 = vrot.lane.b32.xlu0 %v1485, 32
    %v1489 = vpop.permute.xlu0 %1488
    %1492 = vst.msk [vmem:[#allocation4 + $0x7] sm:$0x1] %vm426, %v1487
    %1493 = vst.msk [vmem:[#allocation4 + $0xf] sm:$0x1] %vm426, %v1489
    %v1495 = vrot.slane %v1481, 1
    %v1496 = vperm.slane %v1481, 0
    %v1497 = vperm.slane %v1495, 0
    %1498 = vrot.lane.b32.xlu0 %v1496, 64
    %v1499 = vpop.permute.xlu0 %1498
    %1500 = vrot.lane.b32.xlu0 %v1497, 64
    %v1501 = vpop.permute.xlu0 %1500
    %1504 = vst.msk [vmem:[#allocation4] sm:$0x1] %vm439, %v1499
    %1505 = vst.msk [vmem:[#allocation4 + $0x8] sm:$0x1] %vm439, %v1501
    %v1506 = vld [vmem:[#allocation4] sm:$0xff]
    %v1507 = vld [vmem:[#allocation4 + $0x8] sm:$0xff]
    %s1508 = scalar_lea.vmem [#allocation7], 64
    %v1509 = vld [vmem:[%s1508] sm:$0xff]
    %v1510 = vld [vmem:[%s1508 + $0x8] sm:$0xff]
    %v1511 = vld [vmem:[%s1508 + $0x10] sm:$0xff]
    %v1512 = vld [vmem:[%s1508 + $0x18] sm:$0xff]
    %v1513 = vld [vmem:[%s1508 + $0x20] sm:$0xff]
    %v1514 = vld [vmem:[%s1508 + $0x28] sm:$0xff]
    %v1515 = vld [vmem:[%s1508 + $0x30] sm:$0xff]
    %v1516 = vld [vmem:[%s1508 + $0x38] sm:$0xff]
    %v1517 = vpack.c.bf16 %v1507, %v1506
    %s1518 = scalar_lea.vmem %s4, 2
    %v1519 = vld [vmem:[%s1518] sm:$0x3]
    %v1521 = vperm.slane %v1519, 0
    %v1522 = vperm.slane %v1519, 1
    %v1533 = vunpack.c.l.b16 %v1509
    %v1534 = vunpack.c.h.b16 %v1509
    %v1535 = vunpack.c.l.b16 %v1510
    %v1536 = vunpack.c.h.b16 %v1510
    %v1537 = vunpack.c.l.b16 %v1511
    %v1538 = vunpack.c.h.b16 %v1511
    %v1539 = vunpack.c.l.b16 %v1512
    %v1540 = vunpack.c.h.b16 %v1512
    %v1541 = vunpack.c.l.b16 %v1513
    %v1542 = vunpack.c.h.b16 %v1513
    %v1543 = vunpack.c.l.b16 %v1514
    %v1544 = vunpack.c.h.b16 %v1514
    %v1545 = vunpack.c.l.b16 %v1515
    %v1546 = vunpack.c.h.b16 %v1515
    %v1547 = vunpack.c.l.b16 %v1516
    %v1548 = vunpack.c.h.b16 %v1516
    %v1549 = vpack.c.b16 %v1535, %v1533
    %v1550 = vpack.c.b16 %v1536, %v1534
    %v1551 = vpack.c.b16 %v1539, %v1537
    %v1552 = vpack.c.b16 %v1540, %v1538
    %v1553 = vpack.c.b16 %v1543, %v1541
    %v1554 = vpack.c.b16 %v1544, %v1542
    %v1555 = vpack.c.b16 %v1547, %v1545
    %v1556 = vpack.c.b16 %v1548, %v1546
    %v1566 = vsel %vm307, %v1517, 0
    %1568 = vmatpush.bf16.msra.mxu0 0
    %1569 = vmatpush.bf16.msra.mxu0 0
    %1570 = vmatpush.bf16.msra.mxu0 0
    %1571 = vmatpush.bf16.msra.mxu0 0
    %1572 = vmatpush.bf16.msra.mxu0 %v1555
    %1573 = vmatpush.bf16.msra.mxu0 %v1553
    %1574 = vmatpush.bf16.msra.mxu0 %v1551
    %1575 = vmatpush.bf16.msra.mxu0 %v1549
    %1576 = vmatmul.bf16.gmra.mxu0 %v1566
    %v1577 = vpop.f32.mrf.mxu0
    %v1578 = vadd.f32 %v1521, %v1577
    %v1579 = vpop.f32.mrf.mxu0
    %v1580 = vadd.f32 %v1521, %v1579
    %1581 = vdwg.mxu0
    %1582 = vmatpush.bf16.msra.mxu0 0
    %1583 = vmatpush.bf16.msra.mxu0 0
    %1584 = vmatpush.bf16.msra.mxu0 0
    %1585 = vmatpush.bf16.msra.mxu0 0
    %1586 = vmatpush.bf16.msra.mxu0 %v1556
    %1587 = vmatpush.bf16.msra.mxu0 %v1554
    %1588 = vmatpush.bf16.msra.mxu0 %v1552
    %1589 = vmatpush.bf16.msra.mxu0 %v1550
    %1590 = vmatmul.bf16.gmra.mxu0 %v1566
    %v1591 = vpop.f32.mrf.mxu0
    %v1592 = vadd.f32 %v1522, %v1591
    %v1593 = vpop.f32.mrf.mxu0
    %v1594 = vadd.f32 %v1522, %v1593
    %1595 = vdwg.mxu0
    %1596 = vst [vmem:[#allocation3] sm:$0xff] %v1578
    %1597 = vst [vmem:[#allocation3 + $0x8] sm:$0xff] %v1592
    %1598 = vst [vmem:[#allocation3 + $0x10] sm:$0xff] %v1580
    %1599 = vst [vmem:[#allocation3 + $0x18] sm:$0xff] %v1594
    %s1600 = scalar_lea.vmem [#allocation10], 64
    %v1601 = vld [vmem:[%s1600] sm:$0xff]
    %v1602 = vld [vmem:[%s1600 + $0x8] sm:$0xff]
    %v1603 = vld [vmem:[%s1600 + $0x10] sm:$0xff]
    %v1604 = vld [vmem:[%s1600 + $0x18] sm:$0xff]
    %v1605 = vld [vmem:[%s1600 + $0x20] sm:$0xff]
    %v1606 = vld [vmem:[%s1600 + $0x28] sm:$0xff]
    %v1607 = vld [vmem:[%s1600 + $0x30] sm:$0xff]
    %v1608 = vld [vmem:[%s1600 + $0x38] sm:$0xff]
    %v1609 = vld [vmem:[#allocation3] ss:$0 sm:$0xff]
    %v1610 = vld [vmem:[#allocation3 + $0x10] ss:$0 sm:$0xff]
    %v1611 = vld [vmem:[#allocation3 + $0xf] ss:$0 sm:$0xff]
    %v1612 = vld [vmem:[#allocation3 + $0x1f] ss:$0 sm:$0xff]
    %v1615 = vsel %vm259, %v1610, %v1609
    %v1619 = vsel %vm259, %v1612, %v1611
    %v1629 = vunpack.c.l.b16 %v1601
    %v1630 = vunpack.c.h.b16 %v1601
    %v1631 = vunpack.c.l.b16 %v1602
    %v1632 = vunpack.c.h.b16 %v1602
    %v1633 = vunpack.c.l.b16 %v1603
    %v1634 = vunpack.c.h.b16 %v1603
    %v1635 = vunpack.c.l.b16 %v1604
    %v1636 = vunpack.c.h.b16 %v1604
    %v1637 = vunpack.c.l.b16 %v1605
    %v1638 = vunpack.c.h.b16 %v1605
    %v1639 = vunpack.c.l.b16 %v1606
    %v1640 = vunpack.c.h.b16 %v1606
    %v1641 = vunpack.c.l.b16 %v1607
    %v1642 = vunpack.c.h.b16 %v1607
    %v1643 = vunpack.c.l.b16 %v1608
    %v1644 = vunpack.c.h.b16 %v1608
    %v1645 = vpack.c.b16 %v1631, %v1629
    %v1646 = vpack.c.b16 %v1632, %v1630
    %v1647 = vpack.c.b16 %v1635, %v1633
    %v1648 = vpack.c.b16 %v1636, %v1634
    %v1649 = vpack.c.b16 %v1639, %v1637
    %v1650 = vpack.c.b16 %v1640, %v1638
    %v1651 = vpack.c.b16 %v1643, %v1641
    %v1652 = vpack.c.b16 %v1644, %v1642
    %1661 = vmatpush.bf16.msra.mxu0 0
    %1662 = vmatpush.bf16.msra.mxu0 0
    %1663 = vmatpush.bf16.msra.mxu0 0
    %1664 = vmatpush.bf16.msra.mxu0 0
    %1665 = vmatpush.bf16.msra.mxu0 %v1651
    %1666 = vmatpush.bf16.msra.mxu0 %v1649
    %1667 = vmatpush.bf16.msra.mxu0 %v1647
    %1668 = vmatpush.bf16.msra.mxu0 %v1645
    %1669 = vmatmul.bf16.gmra.mxu0 %v309
    %v1670 = vpop.f32.mrf.mxu0
    %v1671 = vadd.f32 0.0, %v1670
    %v1672 = vpop.f32.mrf.mxu0
    %1673 = vdwg.mxu0
    %1674 = vmatpush.bf16.msra.mxu0 0
    %1675 = vmatpush.bf16.msra.mxu0 0
    %1676 = vmatpush.bf16.msra.mxu0 0
    %1677 = vmatpush.bf16.msra.mxu0 0
    %1678 = vmatpush.bf16.msra.mxu0 %v1652
    %1679 = vmatpush.bf16.msra.mxu0 %v1650
    %1680 = vmatpush.bf16.msra.mxu0 %v1648
    %1681 = vmatpush.bf16.msra.mxu0 %v1646
    %1682 = vmatmul.bf16.gmra.mxu0 %v309
    %v1683 = vpop.f32.mrf.mxu0
    %v1684 = vadd.f32 0.0, %v1683
    %v1685 = vpop.f32.mrf.mxu0
    %1686 = vdwg.mxu0
    %v1687 = vadd.f32 %v1615, %v1671
    %v1688 = vadd.f32 %v1619, %v1684
    %v1689 = vxor.u32 %v1687, 2147483648
    %v1690 = vxor.u32 %v1688, 2147483648
    %v1691 = vmul.f32 %v1689, 1.442695
    %v1692 = vpow.pop %v1691
    %v1693 = vmul.f32 %v1690, 1.442695
    %v1694 = vpow.pop %v1693
    %v1695 = vadd.f32 %v1692, 1.0
    %v1696 = vadd.f32 %v1694, 1.0
    %v1697 = vrcp.pop %v1695
    %v1698 = vmul.f32 %v1695, %v1697
    %v1699 = vsub.f32 1.0, %v1698
    %v1700 = vmul.f32 %v1697, %v1699
    %v1701 = vadd.f32 %v1697, %v1700
    %vm1702 = vweird.f32 %v1695
    %vm1703 = vweird.f32 %v1697
    %vm1704 = vmor %vm1702, %vm1703
    %v1705 = vsel %vm1704, %v1697, %v1701
    %v1706 = vand.u32 2147483647, %v1695
    %vm1707 = vcmp.eq.f32.partialorder %v1706, 8.507059e+37
    %v1708 = vand.u32 %v1695, 2147483648
    %v1709 = vor.u32 1.1754944e-38, %v1708
    %v1710 = vsel %vm1707, %v1709, %v1705
    %v1711 = vmul.f32 1.0, %v1710
    %v1712 = vrcp.pop %v1696
    %v1713 = vmul.f32 %v1696, %v1712
    %v1714 = vsub.f32 1.0, %v1713
    %v1715 = vmul.f32 %v1712, %v1714
    %v1716 = vadd.f32 %v1712, %v1715
    %vm1717 = vweird.f32 %v1696
    %vm1718 = vweird.f32 %v1712
    %vm1719 = vmor %vm1717, %vm1718
    %v1720 = vsel %vm1719, %v1712, %v1716
    %v1721 = vand.u32 2147483647, %v1696
    %vm1722 = vcmp.eq.f32.partialorder %v1721, 8.507059e+37
    %v1723 = vand.u32 %v1696, 2147483648
    %v1724 = vor.u32 1.1754944e-38, %v1723
    %v1725 = vsel %vm1722, %v1724, %v1720
    %v1726 = vmul.f32 1.0, %v1725
    %v1727 = vtanh.pop %v1687
    %v1728 = vtanh.pop %v1688
    %v1729 = vmul.f32 %v1711, 0.0
    %1731 = vrot.lane.b32.xlu0 %v1727, 64
    %v1732 = vpop.permute.xlu0 %1731
    %v1734 = vmul.f32 %v1711, %v1732
    %1736 = vrot.lane.b32.xlu0 %v1734, 32
    %v1737 = vpop.permute.xlu0 %1736
    %v1739 = vadd.f32 %v1729, %v1737
    %v1740 = vmul.f32 %v1726, 0.0
    %1742 = vrot.lane.b32.xlu0 %v1728, 64
    %v1743 = vpop.permute.xlu0 %1742
    %v1745 = vmul.f32 %v1726, %v1743
    %1747 = vrot.lane.b32.xlu0 %v1745, 32
    %v1748 = vpop.permute.xlu0 %1747
    %v1750 = vadd.f32 %v1740, %v1748
    %1752 = vrot.lane.b32.xlu0 %v1739, 96
    %v1753 = vpop.permute.xlu0 %1752
    %v1755 = vsel %vm125, %v1753, %v1750
    %v1756 = vtanh.pop %v1755
    %1758 = vrot.lane.b32.xlu0 %v1756, 96
    %v1759 = vpop.permute.xlu0 %1758
    %v1761 = vmul.f32 %v1711, %v1759
    %1762 = vrot.lane.b32.xlu0 %v1756, 64
    %v1763 = vpop.permute.xlu0 %1762
    %v1765 = vmul.f32 %v1726, %v1763
    %v1767 = vrot.slane %v1761, 1
    %v1768 = vperm.slane %v1761, 0
    %v1769 = vperm.slane %v1767, 0
    %1770 = vrot.lane.b32.xlu0 %v1768, 32
    %v1771 = vpop.permute.xlu0 %1770
    %1772 = vrot.lane.b32.xlu0 %v1769, 32
    %v1773 = vpop.permute.xlu0 %1772
    %1776 = vst.msk [vmem:[#allocation4] sm:$0x1] %vm426, %v1771
    %1777 = vst.msk [vmem:[#allocation4 + $0x8] sm:$0x1] %vm426, %v1773
    %v1779 = vrot.slane %v1765, 1
    %v1780 = vperm.slane %v1765, 0
    %v1781 = vperm.slane %v1779, 0
    %1782 = vrot.lane.b32.xlu0 %v1780, 64
    %v1783 = vpop.permute.xlu0 %1782
    %1784 = vrot.lane.b32.xlu0 %v1781, 64
    %v1785 = vpop.permute.xlu0 %1784
    %1788 = vst.msk [vmem:[#allocation4 + $0x7] sm:$0x1] %vm439, %v1783
    %1789 = vst.msk [vmem:[#allocation4 + $0xf] sm:$0x1] %vm439, %v1785
    %v1790 = vld [vmem:[#allocation3 + $0x1] ss:$0 sm:$0xff]
    %v1791 = vld [vmem:[#allocation3 + $0x11] ss:$0 sm:$0xff]
    %v1792 = vld [vmem:[#allocation3 + $0xe] ss:$0 sm:$0xff]
    %v1793 = vld [vmem:[#allocation3 + $0x1e] ss:$0 sm:$0xff]
    %v1796 = vsel %vm259, %v1791, %v1790
    %v1800 = vsel %vm259, %v1793, %v1792
    %1802 = vrot.lane.b32.xlu0 %v1761, 32
    %v1803 = vpop.permute.xlu0 %1802
    %1805 = vrot.lane.b32.xlu0 %v1765, 64
    %v1806 = vpop.permute.xlu0 %1805
    %v1808 = vsel %vm125, %v1803, %v1806
    %v1809 = vpack.c.bf16 %v1808, %v1808
    %v1811 = vsel %vm307, %v1809, 0
    %1813 = vmatpush.bf16.msra.mxu0 0
    %1814 = vmatpush.bf16.msra.mxu0 0
    %1815 = vmatpush.bf16.msra.mxu0 0
    %1816 = vmatpush.bf16.msra.mxu0 0
    %1817 = vmatpush.bf16.msra.mxu0 %v1651
    %1818 = vmatpush.bf16.msra.mxu0 %v1649
    %1819 = vmatpush.bf16.msra.mxu0 %v1647
    %1820 = vmatpush.bf16.msra.mxu0 %v1645
    %1821 = vmatmul.bf16.gmra.mxu0 %v1811
    %v1822 = vpop.f32.mrf.mxu0
    %v1823 = vadd.f32 0.0, %v1822
    %v1824 = vpop.f32.mrf.mxu0
    %1825 = vdwg.mxu0
    %1826 = vmatpush.bf16.msra.mxu0 0
    %1827 = vmatpush.bf16.msra.mxu0 0
    %1828 = vmatpush.bf16.msra.mxu0 0
    %1829 = vmatpush.bf16.msra.mxu0 0
    %1830 = vmatpush.bf16.msra.mxu0 %v1652
    %1831 = vmatpush.bf16.msra.mxu0 %v1650
    %1832 = vmatpush.bf16.msra.mxu0 %v1648
    %1833 = vmatpush.bf16.msra.mxu0 %v1646
    %1834 = vmatmul.bf16.gmra.mxu0 %v1811
    %v1835 = vpop.f32.mrf.mxu0
    %v1836 = vadd.f32 0.0, %v1835
    %v1837 = vpop.f32.mrf.mxu0
    %1838 = vdwg.mxu0
    %v1839 = vadd.f32 %v1796, %v1823
    %v1840 = vadd.f32 %v1800, %v1836
    %v1841 = vxor.u32 %v1839, 2147483648
    %v1842 = vxor.u32 %v1840, 2147483648
    %v1843 = vmul.f32 %v1841, 1.442695
    %v1844 = vpow.pop %v1843
    %v1845 = vmul.f32 %v1842, 1.442695
    %v1846 = vpow.pop %v1845
    %v1847 = vadd.f32 %v1844, 1.0
    %v1848 = vadd.f32 %v1846, 1.0
    %v1849 = vrcp.pop %v1847
    %v1850 = vmul.f32 %v1847, %v1849
    %v1851 = vsub.f32 1.0, %v1850
    %v1852 = vmul.f32 %v1849, %v1851
    %v1853 = vadd.f32 %v1849, %v1852
    %vm1854 = vweird.f32 %v1847
    %vm1855 = vweird.f32 %v1849
    %vm1856 = vmor %vm1854, %vm1855
    %v1857 = vsel %vm1856, %v1849, %v1853
    %v1858 = vand.u32 2147483647, %v1847
    %vm1859 = vcmp.eq.f32.partialorder %v1858, 8.507059e+37
    %v1860 = vand.u32 %v1847, 2147483648
    %v1861 = vor.u32 1.1754944e-38, %v1860
    %v1862 = vsel %vm1859, %v1861, %v1857
    %v1863 = vmul.f32 1.0, %v1862
    %v1864 = vrcp.pop %v1848
    %v1865 = vmul.f32 %v1848, %v1864
    %v1866 = vsub.f32 1.0, %v1865
    %v1867 = vmul.f32 %v1864, %v1866
    %v1868 = vadd.f32 %v1864, %v1867
    %vm1869 = vweird.f32 %v1848
    %vm1870 = vweird.f32 %v1864
    %vm1871 = vmor %vm1869, %vm1870
    %v1872 = vsel %vm1871, %v1864, %v1868
    %v1873 = vand.u32 2147483647, %v1848
    %vm1874 = vcmp.eq.f32.partialorder %v1873, 8.507059e+37
    %v1875 = vand.u32 %v1848, 2147483648
    %v1876 = vor.u32 1.1754944e-38, %v1875
    %v1877 = vsel %vm1874, %v1876, %v1872
    %v1878 = vmul.f32 1.0, %v1877
    %v1879 = vtanh.pop %v1839
    %v1880 = vtanh.pop %v1840
    %v1881 = vmul.f32 %v1863, %v1739
    %1883 = vrot.lane.b32.xlu0 %v1879, 64
    %v1884 = vpop.permute.xlu0 %1883
    %v1886 = vmul.f32 %v1863, %v1884
    %1888 = vrot.lane.b32.xlu0 %v1886, 32
    %v1889 = vpop.permute.xlu0 %1888
    %v1891 = vadd.f32 %v1881, %v1889
    %v1892 = vmul.f32 %v1878, %v1750
    %1894 = vrot.lane.b32.xlu0 %v1880, 64
    %v1895 = vpop.permute.xlu0 %1894
    %v1897 = vmul.f32 %v1878, %v1895
    %1899 = vrot.lane.b32.xlu0 %v1897, 32
    %v1900 = vpop.permute.xlu0 %1899
    %v1902 = vadd.f32 %v1892, %v1900
    %1904 = vrot.lane.b32.xlu0 %v1891, 96
    %v1905 = vpop.permute.xlu0 %1904
    %v1907 = vsel %vm125, %v1905, %v1902
    %v1908 = vtanh.pop %v1907
    %1910 = vrot.lane.b32.xlu0 %v1908, 96
    %v1911 = vpop.permute.xlu0 %1910
    %v1913 = vmul.f32 %v1863, %v1911
    %1914 = vrot.lane.b32.xlu0 %v1908, 64
    %v1915 = vpop.permute.xlu0 %1914
    %v1917 = vmul.f32 %v1878, %v1915
    %v1919 = vrot.slane %v1913, 1
    %v1920 = vperm.slane %v1913, 0
    %v1921 = vperm.slane %v1919, 0
    %1922 = vrot.lane.b32.xlu0 %v1920, 32
    %v1923 = vpop.permute.xlu0 %1922
    %1924 = vrot.lane.b32.xlu0 %v1921, 32
    %v1925 = vpop.permute.xlu0 %1924
    %1928 = vst.msk [vmem:[#allocation4 + $0x1] sm:$0x1] %vm426, %v1923
    %1929 = vst.msk [vmem:[#allocation4 + $0x9] sm:$0x1] %vm426, %v1925
    %v1931 = vrot.slane %v1917, 1
    %v1932 = vperm.slane %v1917, 0
    %v1933 = vperm.slane %v1931, 0
    %1934 = vrot.lane.b32.xlu0 %v1932, 64
    %v1935 = vpop.permute.xlu0 %1934
    %1936 = vrot.lane.b32.xlu0 %v1933, 64
    %v1937 = vpop.permute.xlu0 %1936
    %1940 = vst.msk [vmem:[#allocation4 + $0x6] sm:$0x1] %vm439, %v1935
    %1941 = vst.msk [vmem:[#allocation4 + $0xe] sm:$0x1] %vm439, %v1937
    %v1942 = vld [vmem:[#allocation3 + $0x2] ss:$0 sm:$0xff]
    %v1943 = vld [vmem:[#allocation3 + $0x12] ss:$0 sm:$0xff]
    %v1944 = vld [vmem:[#allocation3 + $0xd] ss:$0 sm:$0xff]
    %v1945 = vld [vmem:[#allocation3 + $0x1d] ss:$0 sm:$0xff]
    %v1948 = vsel %vm259, %v1943, %v1942
    %v1952 = vsel %vm259, %v1945, %v1944
    %1954 = vrot.lane.b32.xlu0 %v1913, 32
    %v1955 = vpop.permute.xlu0 %1954
    %1957 = vrot.lane.b32.xlu0 %v1917, 64
    %v1958 = vpop.permute.xlu0 %1957
    %v1960 = vsel %vm125, %v1955, %v1958
    %v1961 = vpack.c.bf16 %v1960, %v1960
    %v1963 = vsel %vm307, %v1961, 0
    %1965 = vmatpush.bf16.msra.mxu0 0
    %1966 = vmatpush.bf16.msra.mxu0 0
    %1967 = vmatpush.bf16.msra.mxu0 0
    %1968 = vmatpush.bf16.msra.mxu0 0
    %1969 = vmatpush.bf16.msra.mxu0 %v1651
    %1970 = vmatpush.bf16.msra.mxu0 %v1649
    %1971 = vmatpush.bf16.msra.mxu0 %v1647
    %1972 = vmatpush.bf16.msra.mxu0 %v1645
    %1973 = vmatmul.bf16.gmra.mxu0 %v1963
    %v1974 = vpop.f32.mrf.mxu0
    %v1975 = vadd.f32 0.0, %v1974
    %v1976 = vpop.f32.mrf.mxu0
    %1977 = vdwg.mxu0
    %1978 = vmatpush.bf16.msra.mxu0 0
    %1979 = vmatpush.bf16.msra.mxu0 0
    %1980 = vmatpush.bf16.msra.mxu0 0
    %1981 = vmatpush.bf16.msra.mxu0 0
    %1982 = vmatpush.bf16.msra.mxu0 %v1652
    %1983 = vmatpush.bf16.msra.mxu0 %v1650
    %1984 = vmatpush.bf16.msra.mxu0 %v1648
    %1985 = vmatpush.bf16.msra.mxu0 %v1646
    %1986 = vmatmul.bf16.gmra.mxu0 %v1963
    %v1987 = vpop.f32.mrf.mxu0
    %v1988 = vadd.f32 0.0, %v1987
    %v1989 = vpop.f32.mrf.mxu0
    %1990 = vdwg.mxu0
    %v1991 = vadd.f32 %v1948, %v1975
    %v1992 = vadd.f32 %v1952, %v1988
    %v1993 = vxor.u32 %v1991, 2147483648
    %v1994 = vxor.u32 %v1992, 2147483648
    %v1995 = vmul.f32 %v1993, 1.442695
    %v1996 = vpow.pop %v1995
    %v1997 = vmul.f32 %v1994, 1.442695
    %v1998 = vpow.pop %v1997
    %v1999 = vadd.f32 %v1996, 1.0
    %v2000 = vadd.f32 %v1998, 1.0
    %v2001 = vrcp.pop %v1999
    %v2002 = vmul.f32 %v1999, %v2001
    %v2003 = vsub.f32 1.0, %v2002
    %v2004 = vmul.f32 %v2001, %v2003
    %v2005 = vadd.f32 %v2001, %v2004
    %vm2006 = vweird.f32 %v1999
    %vm2007 = vweird.f32 %v2001
    %vm2008 = vmor %vm2006, %vm2007
    %v2009 = vsel %vm2008, %v2001, %v2005
    %v2010 = vand.u32 2147483647, %v1999
    %vm2011 = vcmp.eq.f32.partialorder %v2010, 8.507059e+37
    %v2012 = vand.u32 %v1999, 2147483648
    %v2013 = vor.u32 1.1754944e-38, %v2012
    %v2014 = vsel %vm2011, %v2013, %v2009
    %v2015 = vmul.f32 1.0, %v2014
    %v2016 = vrcp.pop %v2000
    %v2017 = vmul.f32 %v2000, %v2016
    %v2018 = vsub.f32 1.0, %v2017
    %v2019 = vmul.f32 %v2016, %v2018
    %v2020 = vadd.f32 %v2016, %v2019
    %vm2021 = vweird.f32 %v2000
    %vm2022 = vweird.f32 %v2016
    %vm2023 = vmor %vm2021, %vm2022
    %v2024 = vsel %vm2023, %v2016, %v2020
    %v2025 = vand.u32 2147483647, %v2000
    %vm2026 = vcmp.eq.f32.partialorder %v2025, 8.507059e+37
    %v2027 = vand.u32 %v2000, 2147483648
    %v2028 = vor.u32 1.1754944e-38, %v2027
    %v2029 = vsel %vm2026, %v2028, %v2024
    %v2030 = vmul.f32 1.0, %v2029
    %v2031 = vtanh.pop %v1991
    %v2032 = vtanh.pop %v1992
    %v2033 = vmul.f32 %v2015, %v1891
    %2035 = vrot.lane.b32.xlu0 %v2031, 64
    %v2036 = vpop.permute.xlu0 %2035
    %v2038 = vmul.f32 %v2015, %v2036
    %2040 = vrot.lane.b32.xlu0 %v2038, 32
    %v2041 = vpop.permute.xlu0 %2040
    %v2043 = vadd.f32 %v2033, %v2041
    %v2044 = vmul.f32 %v2030, %v1902
    %2046 = vrot.lane.b32.xlu0 %v2032, 64
    %v2047 = vpop.permute.xlu0 %2046
    %v2049 = vmul.f32 %v2030, %v2047
    %2051 = vrot.lane.b32.xlu0 %v2049, 32
    %v2052 = vpop.permute.xlu0 %2051
    %v2054 = vadd.f32 %v2044, %v2052
    %2056 = vrot.lane.b32.xlu0 %v2043, 96
    %v2057 = vpop.permute.xlu0 %2056
    %v2059 = vsel %vm125, %v2057, %v2054
    %v2060 = vtanh.pop %v2059
    %2062 = vrot.lane.b32.xlu0 %v2060, 96
    %v2063 = vpop.permute.xlu0 %2062
    %v2065 = vmul.f32 %v2015, %v2063
    %2066 = vrot.lane.b32.xlu0 %v2060, 64
    %v2067 = vpop.permute.xlu0 %2066
    %v2069 = vmul.f32 %v2030, %v2067
    %v2071 = vrot.slane %v2065, 1
    %v2072 = vperm.slane %v2065, 0
    %v2073 = vperm.slane %v2071, 0
    %2074 = vrot.lane.b32.xlu0 %v2072, 32
    %v2075 = vpop.permute.xlu0 %2074
    %2076 = vrot.lane.b32.xlu0 %v2073, 32
    %v2077 = vpop.permute.xlu0 %2076
    %2080 = vst.msk [vmem:[#allocation4 + $0x2] sm:$0x1] %vm426, %v2075
    %2081 = vst.msk [vmem:[#allocation4 + $0xa] sm:$0x1] %vm426, %v2077
    %v2083 = vrot.slane %v2069, 1
    %v2084 = vperm.slane %v2069, 0
    %v2085 = vperm.slane %v2083, 0
    %2086 = vrot.lane.b32.xlu0 %v2084, 64
    %v2087 = vpop.permute.xlu0 %2086
    %2088 = vrot.lane.b32.xlu0 %v2085, 64
    %v2089 = vpop.permute.xlu0 %2088
    %2092 = vst.msk [vmem:[#allocation4 + $0x5] sm:$0x1] %vm439, %v2087
    %2093 = vst.msk [vmem:[#allocation4 + $0xd] sm:$0x1] %vm439, %v2089
    %v2094 = vld [vmem:[#allocation3 + $0x3] ss:$0 sm:$0xff]
    %v2095 = vld [vmem:[#allocation3 + $0x13] ss:$0 sm:$0xff]
    %v2096 = vld [vmem:[#allocation3 + $0xc] ss:$0 sm:$0xff]
    %v2097 = vld [vmem:[#allocation3 + $0x1c] ss:$0 sm:$0xff]
    %v2100 = vsel %vm259, %v2095, %v2094
    %v2104 = vsel %vm259, %v2097, %v2096
    %2106 = vrot.lane.b32.xlu0 %v2065, 32
    %v2107 = vpop.permute.xlu0 %2106
    %2109 = vrot.lane.b32.xlu0 %v2069, 64
    %v2110 = vpop.permute.xlu0 %2109
    %v2112 = vsel %vm125, %v2107, %v2110
    %v2113 = vpack.c.bf16 %v2112, %v2112
    %v2115 = vsel %vm307, %v2113, 0
    %2117 = vmatpush.bf16.msra.mxu0 0
    %2118 = vmatpush.bf16.msra.mxu0 0
    %2119 = vmatpush.bf16.msra.mxu0 0
    %2120 = vmatpush.bf16.msra.mxu0 0
    %2121 = vmatpush.bf16.msra.mxu0 %v1651
    %2122 = vmatpush.bf16.msra.mxu0 %v1649
    %2123 = vmatpush.bf16.msra.mxu0 %v1647
    %2124 = vmatpush.bf16.msra.mxu0 %v1645
    %2125 = vmatmul.bf16.gmra.mxu0 %v2115
    %v2126 = vpop.f32.mrf.mxu0
    %v2127 = vadd.f32 0.0, %v2126
    %v2128 = vpop.f32.mrf.mxu0
    %2129 = vdwg.mxu0
    %2130 = vmatpush.bf16.msra.mxu0 0
    %2131 = vmatpush.bf16.msra.mxu0 0
    %2132 = vmatpush.bf16.msra.mxu0 0
    %2133 = vmatpush.bf16.msra.mxu0 0
    %2134 = vmatpush.bf16.msra.mxu0 %v1652
    %2135 = vmatpush.bf16.msra.mxu0 %v1650
    %2136 = vmatpush.bf16.msra.mxu0 %v1648
    %2137 = vmatpush.bf16.msra.mxu0 %v1646
    %2138 = vmatmul.bf16.gmra.mxu0 %v2115
    %v2139 = vpop.f32.mrf.mxu0
    %v2140 = vadd.f32 0.0, %v2139
    %v2141 = vpop.f32.mrf.mxu0
    %2142 = vdwg.mxu0
    %v2143 = vadd.f32 %v2100, %v2127
    %v2144 = vadd.f32 %v2104, %v2140
    %v2145 = vxor.u32 %v2143, 2147483648
    %v2146 = vxor.u32 %v2144, 2147483648
    %v2147 = vmul.f32 %v2145, 1.442695
    %v2148 = vpow.pop %v2147
    %v2149 = vmul.f32 %v2146, 1.442695
    %v2150 = vpow.pop %v2149
    %v2151 = vadd.f32 %v2148, 1.0
    %v2152 = vadd.f32 %v2150, 1.0
    %v2153 = vrcp.pop %v2151
    %v2154 = vmul.f32 %v2151, %v2153
    %v2155 = vsub.f32 1.0, %v2154
    %v2156 = vmul.f32 %v2153, %v2155
    %v2157 = vadd.f32 %v2153, %v2156
    %vm2158 = vweird.f32 %v2151
    %vm2159 = vweird.f32 %v2153
    %vm2160 = vmor %vm2158, %vm2159
    %v2161 = vsel %vm2160, %v2153, %v2157
    %v2162 = vand.u32 2147483647, %v2151
    %vm2163 = vcmp.eq.f32.partialorder %v2162, 8.507059e+37
    %v2164 = vand.u32 %v2151, 2147483648
    %v2165 = vor.u32 1.1754944e-38, %v2164
    %v2166 = vsel %vm2163, %v2165, %v2161
    %v2167 = vmul.f32 1.0, %v2166
    %v2168 = vrcp.pop %v2152
    %v2169 = vmul.f32 %v2152, %v2168
    %v2170 = vsub.f32 1.0, %v2169
    %v2171 = vmul.f32 %v2168, %v2170
    %v2172 = vadd.f32 %v2168, %v2171
    %vm2173 = vweird.f32 %v2152
    %vm2174 = vweird.f32 %v2168
    %vm2175 = vmor %vm2173, %vm2174
    %v2176 = vsel %vm2175, %v2168, %v2172
    %v2177 = vand.u32 2147483647, %v2152
    %vm2178 = vcmp.eq.f32.partialorder %v2177, 8.507059e+37
    %v2179 = vand.u32 %v2152, 2147483648
    %v2180 = vor.u32 1.1754944e-38, %v2179
    %v2181 = vsel %vm2178, %v2180, %v2176
    %v2182 = vmul.f32 1.0, %v2181
    %v2183 = vtanh.pop %v2143
    %v2184 = vtanh.pop %v2144
    %v2185 = vmul.f32 %v2167, %v2043
    %2187 = vrot.lane.b32.xlu0 %v2183, 64
    %v2188 = vpop.permute.xlu0 %2187
    %v2190 = vmul.f32 %v2167, %v2188
    %2192 = vrot.lane.b32.xlu0 %v2190, 32
    %v2193 = vpop.permute.xlu0 %2192
    %v2195 = vadd.f32 %v2185, %v2193
    %v2196 = vmul.f32 %v2182, %v2054
    %2198 = vrot.lane.b32.xlu0 %v2184, 64
    %v2199 = vpop.permute.xlu0 %2198
    %v2201 = vmul.f32 %v2182, %v2199
    %2203 = vrot.lane.b32.xlu0 %v2201, 32
    %v2204 = vpop.permute.xlu0 %2203
    %v2206 = vadd.f32 %v2196, %v2204
    %2208 = vrot.lane.b32.xlu0 %v2195, 96
    %v2209 = vpop.permute.xlu0 %2208
    %v2211 = vsel %vm125, %v2209, %v2206
    %v2212 = vtanh.pop %v2211
    %2214 = vrot.lane.b32.xlu0 %v2212, 96
    %v2215 = vpop.permute.xlu0 %2214
    %v2217 = vmul.f32 %v2167, %v2215
    %2218 = vrot.lane.b32.xlu0 %v2212, 64
    %v2219 = vpop.permute.xlu0 %2218
    %v2221 = vmul.f32 %v2182, %v2219
    %v2223 = vrot.slane %v2217, 1
    %v2224 = vperm.slane %v2217, 0
    %v2225 = vperm.slane %v2223, 0
    %2226 = vrot.lane.b32.xlu0 %v2224, 32
    %v2227 = vpop.permute.xlu0 %2226
    %2228 = vrot.lane.b32.xlu0 %v2225, 32
    %v2229 = vpop.permute.xlu0 %2228
    %2232 = vst.msk [vmem:[#allocation4 + $0x3] sm:$0x1] %vm426, %v2227
    %2233 = vst.msk [vmem:[#allocation4 + $0xb] sm:$0x1] %vm426, %v2229
    %v2235 = vrot.slane %v2221, 1
    %v2236 = vperm.slane %v2221, 0
    %v2237 = vperm.slane %v2235, 0
    %2238 = vrot.lane.b32.xlu0 %v2236, 64
    %v2239 = vpop.permute.xlu0 %2238
    %2240 = vrot.lane.b32.xlu0 %v2237, 64
    %v2241 = vpop.permute.xlu0 %2240
    %2244 = vst.msk [vmem:[#allocation4 + $0x4] sm:$0x1] %vm439, %v2239
    %2245 = vst.msk [vmem:[#allocation4 + $0xc] sm:$0x1] %vm439, %v2241
    %v2246 = vld [vmem:[#allocation3 + $0x4] ss:$0 sm:$0xff]
    %v2247 = vld [vmem:[#allocation3 + $0x14] ss:$0 sm:$0xff]
    %v2248 = vld [vmem:[#allocation3 + $0xb] ss:$0 sm:$0xff]
    %v2249 = vld [vmem:[#allocation3 + $0x1b] ss:$0 sm:$0xff]
    %v2252 = vsel %vm259, %v2247, %v2246
    %v2256 = vsel %vm259, %v2249, %v2248
    %2258 = vrot.lane.b32.xlu0 %v2217, 32
    %v2259 = vpop.permute.xlu0 %2258
    %2261 = vrot.lane.b32.xlu0 %v2221, 64
    %v2262 = vpop.permute.xlu0 %2261
    %v2264 = vsel %vm125, %v2259, %v2262
    %v2265 = vpack.c.bf16 %v2264, %v2264
    %v2267 = vsel %vm307, %v2265, 0
    %2269 = vmatpush.bf16.msra.mxu0 0
    %2270 = vmatpush.bf16.msra.mxu0 0
    %2271 = vmatpush.bf16.msra.mxu0 0
    %2272 = vmatpush.bf16.msra.mxu0 0
    %2273 = vmatpush.bf16.msra.mxu0 %v1651
    %2274 = vmatpush.bf16.msra.mxu0 %v1649
    %2275 = vmatpush.bf16.msra.mxu0 %v1647
    %2276 = vmatpush.bf16.msra.mxu0 %v1645
    %2277 = vmatmul.bf16.gmra.mxu0 %v2267
    %v2278 = vpop.f32.mrf.mxu0
    %v2279 = vadd.f32 0.0, %v2278
    %v2280 = vpop.f32.mrf.mxu0
    %2281 = vdwg.mxu0
    %2282 = vmatpush.bf16.msra.mxu0 0
    %2283 = vmatpush.bf16.msra.mxu0 0
    %2284 = vmatpush.bf16.msra.mxu0 0
    %2285 = vmatpush.bf16.msra.mxu0 0
    %2286 = vmatpush.bf16.msra.mxu0 %v1652
    %2287 = vmatpush.bf16.msra.mxu0 %v1650
    %2288 = vmatpush.bf16.msra.mxu0 %v1648
    %2289 = vmatpush.bf16.msra.mxu0 %v1646
    %2290 = vmatmul.bf16.gmra.mxu0 %v2267
    %v2291 = vpop.f32.mrf.mxu0
    %v2292 = vadd.f32 0.0, %v2291
    %v2293 = vpop.f32.mrf.mxu0
    %2294 = vdwg.mxu0
    %v2295 = vadd.f32 %v2252, %v2279
    %v2296 = vadd.f32 %v2256, %v2292
    %v2297 = vxor.u32 %v2295, 2147483648
    %v2298 = vxor.u32 %v2296, 2147483648
    %v2299 = vmul.f32 %v2297, 1.442695
    %v2300 = vpow.pop %v2299
    %v2301 = vmul.f32 %v2298, 1.442695
    %v2302 = vpow.pop %v2301
    %v2303 = vadd.f32 %v2300, 1.0
    %v2304 = vadd.f32 %v2302, 1.0
    %v2305 = vrcp.pop %v2303
    %v2306 = vmul.f32 %v2303, %v2305
    %v2307 = vsub.f32 1.0, %v2306
    %v2308 = vmul.f32 %v2305, %v2307
    %v2309 = vadd.f32 %v2305, %v2308
    %vm2310 = vweird.f32 %v2303
    %vm2311 = vweird.f32 %v2305
    %vm2312 = vmor %vm2310, %vm2311
    %v2313 = vsel %vm2312, %v2305, %v2309
    %v2314 = vand.u32 2147483647, %v2303
    %vm2315 = vcmp.eq.f32.partialorder %v2314, 8.507059e+37
    %v2316 = vand.u32 %v2303, 2147483648
    %v2317 = vor.u32 1.1754944e-38, %v2316
    %v2318 = vsel %vm2315, %v2317, %v2313
    %v2319 = vmul.f32 1.0, %v2318
    %v2320 = vrcp.pop %v2304
    %v2321 = vmul.f32 %v2304, %v2320
    %v2322 = vsub.f32 1.0, %v2321
    %v2323 = vmul.f32 %v2320, %v2322
    %v2324 = vadd.f32 %v2320, %v2323
    %vm2325 = vweird.f32 %v2304
    %vm2326 = vweird.f32 %v2320
    %vm2327 = vmor %vm2325, %vm2326
    %v2328 = vsel %vm2327, %v2320, %v2324
    %v2329 = vand.u32 2147483647, %v2304
    %vm2330 = vcmp.eq.f32.partialorder %v2329, 8.507059e+37
    %v2331 = vand.u32 %v2304, 2147483648
    %v2332 = vor.u32 1.1754944e-38, %v2331
    %v2333 = vsel %vm2330, %v2332, %v2328
    %v2334 = vmul.f32 1.0, %v2333
    %v2335 = vtanh.pop %v2295
    %v2336 = vtanh.pop %v2296
    %v2337 = vmul.f32 %v2319, %v2195
    %2339 = vrot.lane.b32.xlu0 %v2335, 64
    %v2340 = vpop.permute.xlu0 %2339
    %v2342 = vmul.f32 %v2319, %v2340
    %2344 = vrot.lane.b32.xlu0 %v2342, 32
    %v2345 = vpop.permute.xlu0 %2344
    %v2347 = vadd.f32 %v2337, %v2345
    %v2348 = vmul.f32 %v2334, %v2206
    %2350 = vrot.lane.b32.xlu0 %v2336, 64
    %v2351 = vpop.permute.xlu0 %2350
    %v2353 = vmul.f32 %v2334, %v2351
    %2355 = vrot.lane.b32.xlu0 %v2353, 32
    %v2356 = vpop.permute.xlu0 %2355
    %v2358 = vadd.f32 %v2348, %v2356
    %2360 = vrot.lane.b32.xlu0 %v2347, 96
    %v2361 = vpop.permute.xlu0 %2360
    %v2363 = vsel %vm125, %v2361, %v2358
    %v2364 = vtanh.pop %v2363
    %2366 = vrot.lane.b32.xlu0 %v2364, 96
    %v2367 = vpop.permute.xlu0 %2366
    %v2369 = vmul.f32 %v2319, %v2367
    %2370 = vrot.lane.b32.xlu0 %v2364, 64
    %v2371 = vpop.permute.xlu0 %2370
    %v2373 = vmul.f32 %v2334, %v2371
    %v2375 = vrot.slane %v2369, 1
    %v2376 = vperm.slane %v2369, 0
    %v2377 = vperm.slane %v2375, 0
    %2378 = vrot.lane.b32.xlu0 %v2376, 32
    %v2379 = vpop.permute.xlu0 %2378
    %2380 = vrot.lane.b32.xlu0 %v2377, 32
    %v2381 = vpop.permute.xlu0 %2380
    %2384 = vst.msk [vmem:[#allocation4 + $0x4] sm:$0x1] %vm426, %v2379
    %2385 = vst.msk [vmem:[#allocation4 + $0xc] sm:$0x1] %vm426, %v2381
    %v2387 = vrot.slane %v2373, 1
    %v2388 = vperm.slane %v2373, 0
    %v2389 = vperm.slane %v2387, 0
    %2390 = vrot.lane.b32.xlu0 %v2388, 64
    %v2391 = vpop.permute.xlu0 %2390
    %2392 = vrot.lane.b32.xlu0 %v2389, 64
    %v2393 = vpop.permute.xlu0 %2392
    %2396 = vst.msk [vmem:[#allocation4 + $0x3] sm:$0x1] %vm439, %v2391
    %2397 = vst.msk [vmem:[#allocation4 + $0xb] sm:$0x1] %vm439, %v2393
    %v2398 = vld [vmem:[#allocation3 + $0x5] ss:$0 sm:$0xff]
    %v2399 = vld [vmem:[#allocation3 + $0x15] ss:$0 sm:$0xff]
    %v2400 = vld [vmem:[#allocation3 + $0xa] ss:$0 sm:$0xff]
    %v2401 = vld [vmem:[#allocation3 + $0x1a] ss:$0 sm:$0xff]
    %v2404 = vsel %vm259, %v2399, %v2398
    %v2408 = vsel %vm259, %v2401, %v2400
    %2410 = vrot.lane.b32.xlu0 %v2369, 32
    %v2411 = vpop.permute.xlu0 %2410
    %2413 = vrot.lane.b32.xlu0 %v2373, 64
    %v2414 = vpop.permute.xlu0 %2413
    %v2416 = vsel %vm125, %v2411, %v2414
    %v2417 = vpack.c.bf16 %v2416, %v2416
    %v2419 = vsel %vm307, %v2417, 0
    %2421 = vmatpush.bf16.msra.mxu0 0
    %2422 = vmatpush.bf16.msra.mxu0 0
    %2423 = vmatpush.bf16.msra.mxu0 0
    %2424 = vmatpush.bf16.msra.mxu0 0
    %2425 = vmatpush.bf16.msra.mxu0 %v1651
    %2426 = vmatpush.bf16.msra.mxu0 %v1649
    %2427 = vmatpush.bf16.msra.mxu0 %v1647
    %2428 = vmatpush.bf16.msra.mxu0 %v1645
    %2429 = vmatmul.bf16.gmra.mxu0 %v2419
    %v2430 = vpop.f32.mrf.mxu0
    %v2431 = vadd.f32 0.0, %v2430
    %v2432 = vpop.f32.mrf.mxu0
    %2433 = vdwg.mxu0
    %2434 = vmatpush.bf16.msra.mxu0 0
    %2435 = vmatpush.bf16.msra.mxu0 0
    %2436 = vmatpush.bf16.msra.mxu0 0
    %2437 = vmatpush.bf16.msra.mxu0 0
    %2438 = vmatpush.bf16.msra.mxu0 %v1652
    %2439 = vmatpush.bf16.msra.mxu0 %v1650
    %2440 = vmatpush.bf16.msra.mxu0 %v1648
    %2441 = vmatpush.bf16.msra.mxu0 %v1646
    %2442 = vmatmul.bf16.gmra.mxu0 %v2419
    %v2443 = vpop.f32.mrf.mxu0
    %v2444 = vadd.f32 0.0, %v2443
    %v2445 = vpop.f32.mrf.mxu0
    %2446 = vdwg.mxu0
    %v2447 = vadd.f32 %v2404, %v2431
    %v2448 = vadd.f32 %v2408, %v2444
    %v2449 = vxor.u32 %v2447, 2147483648
    %v2450 = vxor.u32 %v2448, 2147483648
    %v2451 = vmul.f32 %v2449, 1.442695
    %v2452 = vpow.pop %v2451
    %v2453 = vmul.f32 %v2450, 1.442695
    %v2454 = vpow.pop %v2453
    %v2455 = vadd.f32 %v2452, 1.0
    %v2456 = vadd.f32 %v2454, 1.0
    %v2457 = vrcp.pop %v2455
    %v2458 = vmul.f32 %v2455, %v2457
    %v2459 = vsub.f32 1.0, %v2458
    %v2460 = vmul.f32 %v2457, %v2459
    %v2461 = vadd.f32 %v2457, %v2460
    %vm2462 = vweird.f32 %v2455
    %vm2463 = vweird.f32 %v2457
    %vm2464 = vmor %vm2462, %vm2463
    %v2465 = vsel %vm2464, %v2457, %v2461
    %v2466 = vand.u32 2147483647, %v2455
    %vm2467 = vcmp.eq.f32.partialorder %v2466, 8.507059e+37
    %v2468 = vand.u32 %v2455, 2147483648
    %v2469 = vor.u32 1.1754944e-38, %v2468
    %v2470 = vsel %vm2467, %v2469, %v2465
    %v2471 = vmul.f32 1.0, %v2470
    %v2472 = vrcp.pop %v2456
    %v2473 = vmul.f32 %v2456, %v2472
    %v2474 = vsub.f32 1.0, %v2473
    %v2475 = vmul.f32 %v2472, %v2474
    %v2476 = vadd.f32 %v2472, %v2475
    %vm2477 = vweird.f32 %v2456
    %vm2478 = vweird.f32 %v2472
    %vm2479 = vmor %vm2477, %vm2478
    %v2480 = vsel %vm2479, %v2472, %v2476
    %v2481 = vand.u32 2147483647, %v2456
    %vm2482 = vcmp.eq.f32.partialorder %v2481, 8.507059e+37
    %v2483 = vand.u32 %v2456, 2147483648
    %v2484 = vor.u32 1.1754944e-38, %v2483
    %v2485 = vsel %vm2482, %v2484, %v2480
    %v2486 = vmul.f32 1.0, %v2485
    %v2487 = vtanh.pop %v2447
    %v2488 = vtanh.pop %v2448
    %v2489 = vmul.f32 %v2471, %v2347
    %2491 = vrot.lane.b32.xlu0 %v2487, 64
    %v2492 = vpop.permute.xlu0 %2491
    %v2494 = vmul.f32 %v2471, %v2492
    %2496 = vrot.lane.b32.xlu0 %v2494, 32
    %v2497 = vpop.permute.xlu0 %2496
    %v2499 = vadd.f32 %v2489, %v2497
    %v2500 = vmul.f32 %v2486, %v2358
    %2502 = vrot.lane.b32.xlu0 %v2488, 64
    %v2503 = vpop.permute.xlu0 %2502
    %v2505 = vmul.f32 %v2486, %v2503
    %2507 = vrot.lane.b32.xlu0 %v2505, 32
    %v2508 = vpop.permute.xlu0 %2507
    %v2510 = vadd.f32 %v2500, %v2508
    %2512 = vrot.lane.b32.xlu0 %v2499, 96
    %v2513 = vpop.permute.xlu0 %2512
    %v2515 = vsel %vm125, %v2513, %v2510
    %v2516 = vtanh.pop %v2515
    %2518 = vrot.lane.b32.xlu0 %v2516, 96
    %v2519 = vpop.permute.xlu0 %2518
    %v2521 = vmul.f32 %v2471, %v2519
    %2522 = vrot.lane.b32.xlu0 %v2516, 64
    %v2523 = vpop.permute.xlu0 %2522
    %v2525 = vmul.f32 %v2486, %v2523
    %v2527 = vrot.slane %v2521, 1
    %v2528 = vperm.slane %v2521, 0
    %v2529 = vperm.slane %v2527, 0
    %2530 = vrot.lane.b32.xlu0 %v2528, 32
    %v2531 = vpop.permute.xlu0 %2530
    %2532 = vrot.lane.b32.xlu0 %v2529, 32
    %v2533 = vpop.permute.xlu0 %2532
    %2536 = vst.msk [vmem:[#allocation4 + $0x5] sm:$0x1] %vm426, %v2531
    %2537 = vst.msk [vmem:[#allocation4 + $0xd] sm:$0x1] %vm426, %v2533
    %v2539 = vrot.slane %v2525, 1
    %v2540 = vperm.slane %v2525, 0
    %v2541 = vperm.slane %v2539, 0
    %2542 = vrot.lane.b32.xlu0 %v2540, 64
    %v2543 = vpop.permute.xlu0 %2542
    %2544 = vrot.lane.b32.xlu0 %v2541, 64
    %v2545 = vpop.permute.xlu0 %2544
    %2548 = vst.msk [vmem:[#allocation4 + $0x2] sm:$0x1] %vm439, %v2543
    %2549 = vst.msk [vmem:[#allocation4 + $0xa] sm:$0x1] %vm439, %v2545
    %v2550 = vld [vmem:[#allocation3 + $0x6] ss:$0 sm:$0xff]
    %v2551 = vld [vmem:[#allocation3 + $0x16] ss:$0 sm:$0xff]
    %v2552 = vld [vmem:[#allocation3 + $0x9] ss:$0 sm:$0xff]
    %v2553 = vld [vmem:[#allocation3 + $0x19] ss:$0 sm:$0xff]
    %v2556 = vsel %vm259, %v2551, %v2550
    %v2560 = vsel %vm259, %v2553, %v2552
    %2562 = vrot.lane.b32.xlu0 %v2521, 32
    %v2563 = vpop.permute.xlu0 %2562
    %2565 = vrot.lane.b32.xlu0 %v2525, 64
    %v2566 = vpop.permute.xlu0 %2565
    %v2568 = vsel %vm125, %v2563, %v2566
    %v2569 = vpack.c.bf16 %v2568, %v2568
    %v2571 = vsel %vm307, %v2569, 0
    %2573 = vmatpush.bf16.msra.mxu0 0
    %2574 = vmatpush.bf16.msra.mxu0 0
    %2575 = vmatpush.bf16.msra.mxu0 0
    %2576 = vmatpush.bf16.msra.mxu0 0
    %2577 = vmatpush.bf16.msra.mxu0 %v1651
    %2578 = vmatpush.bf16.msra.mxu0 %v1649
    %2579 = vmatpush.bf16.msra.mxu0 %v1647
    %2580 = vmatpush.bf16.msra.mxu0 %v1645
    %2581 = vmatmul.bf16.gmra.mxu0 %v2571
    %v2582 = vpop.f32.mrf.mxu0
    %v2583 = vadd.f32 0.0, %v2582
    %v2584 = vpop.f32.mrf.mxu0
    %2585 = vdwg.mxu0
    %2586 = vmatpush.bf16.msra.mxu0 0
    %2587 = vmatpush.bf16.msra.mxu0 0
    %2588 = vmatpush.bf16.msra.mxu0 0
    %2589 = vmatpush.bf16.msra.mxu0 0
    %2590 = vmatpush.bf16.msra.mxu0 %v1652
    %2591 = vmatpush.bf16.msra.mxu0 %v1650
    %2592 = vmatpush.bf16.msra.mxu0 %v1648
    %2593 = vmatpush.bf16.msra.mxu0 %v1646
    %2594 = vmatmul.bf16.gmra.mxu0 %v2571
    %v2595 = vpop.f32.mrf.mxu0
    %v2596 = vadd.f32 0.0, %v2595
    %v2597 = vpop.f32.mrf.mxu0
    %2598 = vdwg.mxu0
    %v2599 = vadd.f32 %v2556, %v2583
    %v2600 = vadd.f32 %v2560, %v2596
    %v2601 = vxor.u32 %v2599, 2147483648
    %v2602 = vxor.u32 %v2600, 2147483648
    %v2603 = vmul.f32 %v2601, 1.442695
    %v2604 = vpow.pop %v2603
    %v2605 = vmul.f32 %v2602, 1.442695
    %v2606 = vpow.pop %v2605
    %v2607 = vadd.f32 %v2604, 1.0
    %v2608 = vadd.f32 %v2606, 1.0
    %v2609 = vrcp.pop %v2607
    %v2610 = vmul.f32 %v2607, %v2609
    %v2611 = vsub.f32 1.0, %v2610
    %v2612 = vmul.f32 %v2609, %v2611
    %v2613 = vadd.f32 %v2609, %v2612
    %vm2614 = vweird.f32 %v2607
    %vm2615 = vweird.f32 %v2609
    %vm2616 = vmor %vm2614, %vm2615
    %v2617 = vsel %vm2616, %v2609, %v2613
    %v2618 = vand.u32 2147483647, %v2607
    %vm2619 = vcmp.eq.f32.partialorder %v2618, 8.507059e+37
    %v2620 = vand.u32 %v2607, 2147483648
    %v2621 = vor.u32 1.1754944e-38, %v2620
    %v2622 = vsel %vm2619, %v2621, %v2617
    %v2623 = vmul.f32 1.0, %v2622
    %v2624 = vrcp.pop %v2608
    %v2625 = vmul.f32 %v2608, %v2624
    %v2626 = vsub.f32 1.0, %v2625
    %v2627 = vmul.f32 %v2624, %v2626
    %v2628 = vadd.f32 %v2624, %v2627
    %vm2629 = vweird.f32 %v2608
    %vm2630 = vweird.f32 %v2624
    %vm2631 = vmor %vm2629, %vm2630
    %v2632 = vsel %vm2631, %v2624, %v2628
    %v2633 = vand.u32 2147483647, %v2608
    %vm2634 = vcmp.eq.f32.partialorder %v2633, 8.507059e+37
    %v2635 = vand.u32 %v2608, 2147483648
    %v2636 = vor.u32 1.1754944e-38, %v2635
    %v2637 = vsel %vm2634, %v2636, %v2632
    %v2638 = vmul.f32 1.0, %v2637
    %v2639 = vtanh.pop %v2599
    %v2640 = vtanh.pop %v2600
    %v2641 = vmul.f32 %v2623, %v2499
    %2643 = vrot.lane.b32.xlu0 %v2639, 64
    %v2644 = vpop.permute.xlu0 %2643
    %v2646 = vmul.f32 %v2623, %v2644
    %2648 = vrot.lane.b32.xlu0 %v2646, 32
    %v2649 = vpop.permute.xlu0 %2648
    %v2651 = vadd.f32 %v2641, %v2649
    %v2652 = vmul.f32 %v2638, %v2510
    %2654 = vrot.lane.b32.xlu0 %v2640, 64
    %v2655 = vpop.permute.xlu0 %2654
    %v2657 = vmul.f32 %v2638, %v2655
    %2659 = vrot.lane.b32.xlu0 %v2657, 32
    %v2660 = vpop.permute.xlu0 %2659
    %v2662 = vadd.f32 %v2652, %v2660
    %2664 = vrot.lane.b32.xlu0 %v2651, 96
    %v2665 = vpop.permute.xlu0 %2664
    %v2667 = vsel %vm125, %v2665, %v2662
    %v2668 = vtanh.pop %v2667
    %2670 = vrot.lane.b32.xlu0 %v2668, 96
    %v2671 = vpop.permute.xlu0 %2670
    %v2673 = vmul.f32 %v2623, %v2671
    %2674 = vrot.lane.b32.xlu0 %v2668, 64
    %v2675 = vpop.permute.xlu0 %2674
    %v2677 = vmul.f32 %v2638, %v2675
    %v2679 = vrot.slane %v2673, 1
    %v2680 = vperm.slane %v2673, 0
    %v2681 = vperm.slane %v2679, 0
    %2682 = vrot.lane.b32.xlu0 %v2680, 32
    %v2683 = vpop.permute.xlu0 %2682
    %2684 = vrot.lane.b32.xlu0 %v2681, 32
    %v2685 = vpop.permute.xlu0 %2684
    %2688 = vst.msk [vmem:[#allocation4 + $0x6] sm:$0x1] %vm426, %v2683
    %2689 = vst.msk [vmem:[#allocation4 + $0xe] sm:$0x1] %vm426, %v2685
    %v2691 = vrot.slane %v2677, 1
    %v2692 = vperm.slane %v2677, 0
    %v2693 = vperm.slane %v2691, 0
    %2694 = vrot.lane.b32.xlu0 %v2692, 64
    %v2695 = vpop.permute.xlu0 %2694
    %2696 = vrot.lane.b32.xlu0 %v2693, 64
    %v2697 = vpop.permute.xlu0 %2696
    %2700 = vst.msk [vmem:[#allocation4 + $0x1] sm:$0x1] %vm439, %v2695
    %2701 = vst.msk [vmem:[#allocation4 + $0x9] sm:$0x1] %vm439, %v2697
    %v2702 = vld [vmem:[#allocation3 + $0x7] ss:$0 sm:$0xff]
    %v2703 = vld [vmem:[#allocation3 + $0x17] ss:$0 sm:$0xff]
    %v2704 = vld [vmem:[#allocation3 + $0x8] ss:$0 sm:$0xff]
    %v2705 = vld [vmem:[#allocation3 + $0x18] ss:$0 sm:$0xff]
    %v2708 = vsel %vm259, %v2703, %v2702
    %v2712 = vsel %vm259, %v2705, %v2704
    %2714 = vrot.lane.b32.xlu0 %v2673, 32
    %v2715 = vpop.permute.xlu0 %2714
    %2717 = vrot.lane.b32.xlu0 %v2677, 64
    %v2718 = vpop.permute.xlu0 %2717
    %v2720 = vsel %vm125, %v2715, %v2718
    %v2721 = vpack.c.bf16 %v2720, %v2720
    %v2723 = vsel %vm307, %v2721, 0
    %2725 = vmatpush.bf16.msra.mxu0 0
    %2726 = vmatpush.bf16.msra.mxu0 0
    %2727 = vmatpush.bf16.msra.mxu0 0
    %2728 = vmatpush.bf16.msra.mxu0 0
    %2729 = vmatpush.bf16.msra.mxu0 %v1651
    %2730 = vmatpush.bf16.msra.mxu0 %v1649
    %2731 = vmatpush.bf16.msra.mxu0 %v1647
    %2732 = vmatpush.bf16.msra.mxu0 %v1645
    %2733 = vmatmul.bf16.gmra.mxu0 %v2723
    %v2734 = vpop.f32.mrf.mxu0
    %v2735 = vadd.f32 0.0, %v2734
    %v2736 = vpop.f32.mrf.mxu0
    %2737 = vdwg.mxu0
    %2738 = vmatpush.bf16.msra.mxu0 0
    %2739 = vmatpush.bf16.msra.mxu0 0
    %2740 = vmatpush.bf16.msra.mxu0 0
    %2741 = vmatpush.bf16.msra.mxu0 0
    %2742 = vmatpush.bf16.msra.mxu0 %v1652
    %2743 = vmatpush.bf16.msra.mxu0 %v1650
    %2744 = vmatpush.bf16.msra.mxu0 %v1648
    %2745 = vmatpush.bf16.msra.mxu0 %v1646
    %2746 = vmatmul.bf16.gmra.mxu0 %v2723
    %v2747 = vpop.f32.mrf.mxu0
    %v2748 = vadd.f32 0.0, %v2747
    %v2749 = vpop.f32.mrf.mxu0
    %2750 = vdwg.mxu0
    %v2751 = vadd.f32 %v2708, %v2735
    %v2752 = vadd.f32 %v2712, %v2748
    %v2753 = vxor.u32 %v2751, 2147483648
    %v2754 = vxor.u32 %v2752, 2147483648
    %v2755 = vmul.f32 %v2753, 1.442695
    %v2756 = vpow.pop %v2755
    %v2757 = vmul.f32 %v2754, 1.442695
    %v2758 = vpow.pop %v2757
    %v2759 = vadd.f32 %v2756, 1.0
    %v2760 = vadd.f32 %v2758, 1.0
    %v2761 = vrcp.pop %v2759
    %v2762 = vmul.f32 %v2759, %v2761
    %v2763 = vsub.f32 1.0, %v2762
    %v2764 = vmul.f32 %v2761, %v2763
    %v2765 = vadd.f32 %v2761, %v2764
    %vm2766 = vweird.f32 %v2759
    %vm2767 = vweird.f32 %v2761
    %vm2768 = vmor %vm2766, %vm2767
    %v2769 = vsel %vm2768, %v2761, %v2765
    %v2770 = vand.u32 2147483647, %v2759
    %vm2771 = vcmp.eq.f32.partialorder %v2770, 8.507059e+37
    %v2772 = vand.u32 %v2759, 2147483648
    %v2773 = vor.u32 1.1754944e-38, %v2772
    %v2774 = vsel %vm2771, %v2773, %v2769
    %v2775 = vmul.f32 1.0, %v2774
    %v2776 = vrcp.pop %v2760
    %v2777 = vmul.f32 %v2760, %v2776
    %v2778 = vsub.f32 1.0, %v2777
    %v2779 = vmul.f32 %v2776, %v2778
    %v2780 = vadd.f32 %v2776, %v2779
    %vm2781 = vweird.f32 %v2760
    %vm2782 = vweird.f32 %v2776
    %vm2783 = vmor %vm2781, %vm2782
    %v2784 = vsel %vm2783, %v2776, %v2780
    %v2785 = vand.u32 2147483647, %v2760
    %vm2786 = vcmp.eq.f32.partialorder %v2785, 8.507059e+37
    %v2787 = vand.u32 %v2760, 2147483648
    %v2788 = vor.u32 1.1754944e-38, %v2787
    %v2789 = vsel %vm2786, %v2788, %v2784
    %v2790 = vmul.f32 1.0, %v2789
    %v2791 = vtanh.pop %v2751
    %v2792 = vtanh.pop %v2752
    %v2793 = vmul.f32 %v2775, %v2651
    %2795 = vrot.lane.b32.xlu0 %v2791, 64
    %v2796 = vpop.permute.xlu0 %2795
    %v2798 = vmul.f32 %v2775, %v2796
    %2800 = vrot.lane.b32.xlu0 %v2798, 32
    %v2801 = vpop.permute.xlu0 %2800
    %v2803 = vadd.f32 %v2793, %v2801
    %v2804 = vmul.f32 %v2790, %v2662
    %2806 = vrot.lane.b32.xlu0 %v2792, 64
    %v2807 = vpop.permute.xlu0 %2806
    %v2809 = vmul.f32 %v2790, %v2807
    %2811 = vrot.lane.b32.xlu0 %v2809, 32
    %v2812 = vpop.permute.xlu0 %2811
    %v2814 = vadd.f32 %v2804, %v2812
    %2816 = vrot.lane.b32.xlu0 %v2803, 96
    %v2817 = vpop.permute.xlu0 %2816
    %v2819 = vsel %vm125, %v2817, %v2814
    %v2820 = vtanh.pop %v2819
    %2822 = vrot.lane.b32.xlu0 %v2820, 96
    %v2823 = vpop.permute.xlu0 %2822
    %v2825 = vmul.f32 %v2775, %v2823
    %2826 = vrot.lane.b32.xlu0 %v2820, 64
    %v2827 = vpop.permute.xlu0 %2826
    %v2829 = vmul.f32 %v2790, %v2827
    %v2831 = vrot.slane %v2825, 1
    %v2832 = vperm.slane %v2825, 0
    %v2833 = vperm.slane %v2831, 0
    %2834 = vrot.lane.b32.xlu0 %v2832, 32
    %v2835 = vpop.permute.xlu0 %2834
    %2836 = vrot.lane.b32.xlu0 %v2833, 32
    %v2837 = vpop.permute.xlu0 %2836
    %2840 = vst.msk [vmem:[#allocation4 + $0x7] sm:$0x1] %vm426, %v2835
    %2841 = vst.msk [vmem:[#allocation4 + $0xf] sm:$0x1] %vm426, %v2837
    %v2843 = vrot.slane %v2829, 1
    %v2844 = vperm.slane %v2829, 0
    %v2845 = vperm.slane %v2843, 0
    %2846 = vrot.lane.b32.xlu0 %v2844, 64
    %v2847 = vpop.permute.xlu0 %2846
    %2848 = vrot.lane.b32.xlu0 %v2845, 64
    %v2849 = vpop.permute.xlu0 %2848
    %2852 = vst.msk [vmem:[#allocation4] sm:$0x1] %vm439, %v2847
    %2853 = vst.msk [vmem:[#allocation4 + $0x8] sm:$0x1] %vm439, %v2849
    %v2854 = vld [vmem:[#allocation4] sm:$0xff]
    %v2855 = vld [vmem:[#allocation4 + $0x8] sm:$0xff]
    %v2856 = vpack.c.bf16 %v2855, %v2854
    %v2857 = vld [vmem:[%s5] sm:$0xf]
    %v2858 = vld [vmem:[%s5 + $0x4] sm:$0xf]
    %v2859 = vld [vmem:[%s5 + $0x8] sm:$0xf]
    %v2860 = vld [vmem:[%s5 + $0xc] sm:$0xf]
    %v2861 = vld [vmem:[%s5 + $0x10] sm:$0xf]
    %v2862 = vld [vmem:[%s5 + $0x14] sm:$0xf]
    %v2863 = vld [vmem:[%s5 + $0x18] sm:$0xf]
    %v2864 = vld [vmem:[%s5 + $0x1c] sm:$0xf]
    %v2865 = vld [vmem:[%s6] sm:$0x1]
    %v2867 = vperm.slane %v2865, 0
    %v2877 = vunpack.c.l.b16 %v2857
    %v2878 = vunpack.c.l.b16 %v2858
    %v2879 = vunpack.c.l.b16 %v2859
    %v2880 = vunpack.c.l.b16 %v2860
    %v2881 = vunpack.c.l.b16 %v2861
    %v2882 = vunpack.c.l.b16 %v2862
    %v2883 = vunpack.c.l.b16 %v2863
    %v2884 = vunpack.c.l.b16 %v2864
    %v2885 = vpack.c.b16 %v2878, %v2877
    %v2886 = vpack.c.b16 %v2880, %v2879
    %v2887 = vpack.c.b16 %v2882, %v2881
    %v2888 = vpack.c.b16 %v2884, %v2883
    %v2894 = vsel %vm307, %v2856, 0
    %2896 = vmatpush.bf16.msra.mxu0 0
    %2897 = vmatpush.bf16.msra.mxu0 0
    %2898 = vmatpush.bf16.msra.mxu0 0
    %2899 = vmatpush.bf16.msra.mxu0 0
    %2900 = vmatpush.bf16.msra.mxu0 %v2888
    %2901 = vmatpush.bf16.msra.mxu0 %v2887
    %2902 = vmatpush.bf16.msra.mxu0 %v2886
    %2903 = vmatpush.bf16.msra.mxu0 %v2885
    %2904 = vmatmul.bf16.gmra.mxu0 %v2894
    %v2905 = vpop.f32.mrf.mxu0
    %v2906 = vadd.f32 %v2867, %v2905
    %v2907 = vpop.f32.mrf.mxu0
    %v2908 = vadd.f32 %v2867, %v2907
    %2909 = vdwg.mxu0
    %vm2910 = vcmask 39936
    %v2911 = vsel %vm2910, %v2906, -inf
    %2912 = vmax.xlane.f32.xlu0 %v2911
    %v2913 = vpop.xlane.xlu0 %2912
    %v2914 = vsel %vm2910, %v2908, -inf
    %2915 = vmax.xlane.f32.xlu0 %v2914
    %v2916 = vpop.xlane.xlu0 %2915
    %v2917 = vlaneseq
    %v2918 = vand.u32 %v2917, 127
    %vm2919 = vcmp.eq.f32.partialorder %v2906, %v2913
    %vm2920 = vcmp.eq.f32.partialorder %v2908, %v2916
    %v2921 = vsel %vm2919, %v2918, 5
    %v2922 = vsel %vm2920, %v2918, 5
    %v2923 = vsel %vm2910, %v2921, 2147483647
    %v2924 = vand.u32 %v2923, 65535
    %v2925 = vshra.s32 %v2923, 16
    %v2926 = vcvt.s32.f32 %v2924
    %v2927 = vcvt.s32.f32 %v2925
    %2928 = vmin.xlane.f32.xlu0 %v2927
    %v2929 = vpop.xlane.xlu0 %2928
    %vm2930 = vcmp.eq.f32.partialorder %v2927, %v2929
    %v2931 = vsel %vm2930, %v2926, inf
    %2932 = vmin.xlane.f32.xlu0 %v2931
    %v2933 = vpop.xlane.xlu0 %2932
    %v2934 = vcvt.f32.s32 %v2933
    %v2935 = vcvt.f32.s32 %v2929
    %v2936 = vshll.u32 %v2935, 16
    %v2937 = vadd.s32 %v2936, %v2934
    %v2938 = vsel %vm2910, %v2922, 2147483647
    %v2939 = vand.u32 %v2938, 65535
    %v2940 = vshra.s32 %v2938, 16
    %v2941 = vcvt.s32.f32 %v2939
    %v2942 = vcvt.s32.f32 %v2940
    %2943 = vmin.xlane.f32.xlu0 %v2942
    %v2944 = vpop.xlane.xlu0 %2943
    %vm2945 = vcmp.eq.f32.partialorder %v2942, %v2944
    %v2946 = vsel %vm2945, %v2941, inf
    %2947 = vmin.xlane.f32.xlu0 %v2946
    %v2948 = vpop.xlane.xlu0 %2947
    %v2949 = vcvt.f32.s32 %v2948
    %v2950 = vcvt.f32.s32 %v2944
    %v2951 = vshll.u32 %v2950, 16
    %v2952 = vadd.s32 %v2951, %v2949
    %v2953 = vperm.slane %v2937, %v2918
    %v2954 = vperm.slane %v2952, %v2918
    %v2955 = vsel %vm259, %v2954, %v2953
    %vm2956 = vcmask 58368
    %2957 = vst.msk [vmem:[#allocation12] sm:$0x3] %vm2956, %v2955
    // Predicated region
    $region34: #{mutil_model_forward.1} parent=1 // pred_check
      _
    $region35: #{mutil_model_forward.1} parent=1 // pred_check_branch
      %2959 = sbr.rel (0) target = $region37
    $region36: #{mutil_model_forward.1} parent=1 // pred_region
      %2961 = vsyncadd [#allocation9], 0
      %s2963 = sshll.u32 [#allocation12], 4
      %s2964 = int_to_ptr.vmem [resolvable:$true] %s2963
      %s2965 = sshll.u32 %s7, 4
      %s2966 = int_to_ptr.hbm [resolvable:$true] %s2965
      %2968 = dma.vmem_to_hbm [thread:$0]  %s2964, 32, %s2966, [#allocation9]
    $region37: #{mutil_model_forward.1} parent=1 // pred_fallthru
      _
    // Predicated region
    $region38: #{mutil_model_forward.1} parent=1 // pred_check
      _
    $region39: #{mutil_model_forward.1} parent=1 // pred_check_branch
      %2970 = sbr.rel (0) target = $region41
    $region40: #{mutil_model_forward.1} parent=1 // pred_region
      %2972 = dma.done [#allocation9], 32
    $region41: #{mutil_model_forward.1} parent=1 // pred_fallthru
      _
    %2973 = vsyncpa [#allocation8], 1
    %2974 = vsyncpa [#allocation11], 1
    %2975 = vsyncpa [#allocation9], 1

</llo_original>
